<compile_context>
chip_gen: v5e
topology: v5e:2x2
jax: 0.10.0
libtpu: 0.0.40
codegen_flags: <defaults>
</compile_context>

<pallas_src>
import functools

import jax
import jax.numpy as jnp
import numpy as np
from jax.experimental import pallas as pl
from jax.experimental.pallas import tpu as pltpu

BN_EPS = 1e-5
LANE = 128


def _round_up(x, m):
    return (x + m - 1) // m * m


def _choose_block_h(H, W, cin, cout_p, budget=6 * 1024 * 1024):
    """Largest divisor of H whose per-grid-step working set fits the budget."""
    for hb in range(H, 0, -1):
        if H % hb:
            continue
        in_b = 2 * 4 * (hb + 2) * W * cin          # input rows, double-buffered
        out_b = 2 * 4 * hb * W * cout_p            # conv output tile, double-buffered
        acc_b = 4 * hb * W * cout_p                # f32 accumulator
        scr_b = 4 * (hb + 2) * (W + 2) * cin       # padded-window scratch
        w_b = 2 * 2 * 9 * cin * cout_p             # bf16 weights, double-buffered
        if in_b + out_b + acc_b + scr_b + w_b <= budget:
            return hb
    return 1


# --------------------------- kernel 1: conv (+ optional fused input BN/ReLU)
#                                       + per-tile channel stats ---------------
def _conv_stats_kernel(scale_ref, shift_ref, x_ref, xt_ref, xb_ref, w_ref,
                       y_ref, st_ref, xw_ref, *, fuse_input_bn_relu):
    _, hblk, W, cin = x_ref.shape
    cout_p = w_ref.shape[-1]
    i = pl.program_id(1)
    nb = pl.num_programs(1)

    if fuse_input_bn_relu:                         # hoisted per-channel affine
        in_s = scale_ref[...].reshape(1, 1, cin)
        in_b = shift_ref[...].reshape(1, 1, cin)

    def prep(v):                                   # (rows, W, cin) f32
        if fuse_input_bn_relu:                     # BN+ReLU of previous layer
            v = jnp.maximum(v * in_s + in_b, 0.0)
        return v.astype(xw_ref.dtype)

    top = prep(xt_ref[0])                          # (1, W, cin)
    bot = prep(xb_ref[0])                          # (1, W, cin)
    # zero-pad at the global top / bottom image border
    top = jnp.where(i > 0, top, jnp.zeros_like(top))
    bot = jnp.where(i < nb - 1, bot, jnp.zeros_like(bot))

    # assemble the zero-padded (hblk+2, W+2, cin) window in VMEM scratch
    zcol = jnp.zeros((hblk + 2, 1, cin), xw_ref.dtype)
    xw_ref[:, 0:1, :] = zcol
    xw_ref[:, W + 1:W + 2, :] = zcol
    xw_ref[0:1, 1:W + 1, :] = top
    xw_ref[hblk + 1:hblk + 2, 1:W + 1, :] = bot
    xw_ref[1:hblk + 1, 1:W + 1, :] = prep(x_ref[0])

    # 3x3 conv = 9 accumulated MXU matmuls, bf16 operands, f32 accumulation.
    acc = jnp.zeros((hblk * W, cout_p), jnp.float32)
    for dy in range(3):
        for dx in range(3):
            win = xw_ref[dy:dy + hblk, dx:dx + W, :]
            win = win.reshape(hblk * W, cin).astype(jnp.bfloat16)
            acc = acc + jnp.dot(win, w_ref[dy, dx],
                                preferred_element_type=jnp.float32)

    y_ref[...] = acc.reshape(1, hblk, W, cout_p)   # lane-dense (cout_p=128k) store

    # per-tile channel stats as ones-row matmuls (MXU, not XLU reduce)
    ones = jnp.ones((1, hblk * W), jnp.float32)
    s1 = jnp.dot(ones, acc, preferred_element_type=jnp.float32)        # sum
    s2 = jnp.dot(ones, acc * acc, preferred_element_type=jnp.float32)  # sum of squares
    st_ref[...] = jnp.concatenate([s1, s2], axis=0).reshape(1, 1, 2, cout_p)


def _conv_layer(x, w, in_scale, in_shift, *, block_h, fuse_input_bn_relu):
    N, H, W, cin = x.shape
    cout_p = w.shape[-1]
    if H % block_h:
        raise ValueError(f"block_h={block_h} must divide H={H}")
    nb = H // block_h

    kernel = functools.partial(_conv_stats_kernel,
                               fuse_input_bn_relu=fuse_input_bn_relu)

    flops = 2 * N * H * W * 9 * cin * cout_p
    bytes_accessed = (4 * x.size + 2 * w.size + 4 * N * H * W * cout_p
                      + 4 * N * nb * 2 * cout_p)

    y, stats = pl.pallas_call(
        kernel,
        grid=(N, nb),
        in_specs=[
            pl.BlockSpec((1, cin), lambda n, i: (0, 0)),                 # in_scale
            pl.BlockSpec((1, cin), lambda n, i: (0, 0)),                 # in_shift
            pl.BlockSpec((1, block_h, W, cin),                           # main rows
                         lambda n, i: (n, i, 0, 0)),
            pl.BlockSpec((1, 1, W, cin),                                 # halo row above
                         lambda n, i: (n, jnp.maximum(i * block_h - 1, 0), 0, 0)),
            pl.BlockSpec((1, 1, W, cin),                                 # halo row below
                         lambda n, i: (n, jnp.minimum((i + 1) * block_h, H - 1), 0, 0)),
            pl.BlockSpec((3, 3, cin, cout_p), lambda n, i: (0, 0, 0, 0)),  # weights
        ],
        out_specs=(
            pl.BlockSpec((1, block_h, W, cout_p), lambda n, i: (n, i, 0, 0)),
            pl.BlockSpec((1, 1, 2, cout_p), lambda n, i: (n, i, 0, 0)),
        ),
        out_shape=(
            jax.ShapeDtypeStruct((N, H, W, cout_p), jnp.float32),
            jax.ShapeDtypeStruct((N, nb, 2, cout_p), jnp.float32),
        ),
        scratch_shapes=[pltpu.VMEM((block_h + 2, W + 2, cin), jnp.float32)],
        compiler_params=pltpu.CompilerParams(
            dimension_semantics=("parallel", "parallel"),
            vmem_limit_bytes=32 * 1024 * 1024),
        cost_estimate=pl.CostEstimate(flops=flops, transcendentals=0,
                                      bytes_accessed=bytes_accessed),
    )(in_scale, in_shift, x, x, x, w)
    return y, stats


# --------------------------- kernel 2: final BN (affine) + ReLU ---------------
def _bn_relu_kernel(scale_ref, shift_ref, y_ref, o_ref):
    cp = scale_ref.shape[-1]
    s = scale_ref[...].reshape(1, 1, 1, cp)
    b = shift_ref[...].reshape(1, 1, 1, cp)
    o_ref[...] = jnp.maximum(y_ref[...] * s + b, 0.0)


def _bn_relu(y, scale, shift, *, block_h):
    N, H, W, cp = y.shape
    nb = H // block_h
    return pl.pallas_call(
        _bn_relu_kernel,
        grid=(N, nb),
        in_specs=[
            pl.BlockSpec((1, cp), lambda n, i: (0, 0)),
            pl.BlockSpec((1, cp), lambda n, i: (0, 0)),
            pl.BlockSpec((1, block_h, W, cp), lambda n, i: (n, i, 0, 0)),
        ],
        out_specs=pl.BlockSpec((1, block_h, W, cp), lambda n, i: (n, i, 0, 0)),
        out_shape=jax.ShapeDtypeStruct((N, H, W, cp), jnp.float32),
        compiler_params=pltpu.CompilerParams(
            dimension_semantics=("parallel", "parallel"),
            vmem_limit_bytes=32 * 1024 * 1024),
        cost_estimate=pl.CostEstimate(flops=2 * y.size, transcendentals=0,
                                      bytes_accessed=8 * y.size),
    )(scale, shift, y)


# --------------------------- tiny JAX glue ------------------------------------
def _bn_scale_shift(stats, gamma_p, beta_p, count):
    """(sum, sumsq) partials -> per-channel scale/shift for y*scale+shift."""
    s = jnp.sum(stats, axis=(0, 1))                       # (2, cout_p)
    mean = s[0] / count
    var = jnp.maximum(s[1] / count - mean * mean, 0.0)    # biased var (PyTorch BN)
    scale = gamma_p * jax.lax.rsqrt(var + BN_EPS)
    shift = beta_p - mean * scale
    return scale[None, :], shift[None, :]                 # (1, cout_p)


def _prep_weight(w_oihw, cin_p, cout_p):
    """(Cout, Cin, 3, 3) -> (3, 3, cin_p, cout_p) bf16, zero-padded channels."""
    cout, cin, _, _ = w_oihw.shape
    w = jnp.transpose(w_oihw, (2, 3, 1, 0))               # (kh, kw, cin, cout)
    w = jnp.pad(w, ((0, 0), (0, 0), (0, cin_p - cin), (0, cout_p - cout)))
    return w.astype(jnp.bfloat16)


def _pad_channels(v, cp):
    return jnp.pad(v.astype(jnp.float32), (0, cp - v.shape[0]))


def double_conv(x_nchw, params, *, block_h=None):
    """Forward pass of DoubleConv.  Input/output layout: NCHW, float32."""
    w1, g1, b1, w2, g2, b2 = params
    N, cin, H, W = x_nchw.shape
    cout = w1.shape[0]
    cout_p = _round_up(cout, LANE)

    x = jnp.transpose(x_nchw, (0, 2, 3, 1)).astype(jnp.float32)   # NHWC

    w1p = _prep_weight(w1, cin, cout_p)
    w2p = _prep_weight(w2, cout_p, cout_p)
    g1p, b1p = _pad_channels(g1, cout_p), _pad_channels(b1, cout_p)
    g2p, b2p = _pad_channels(g2, cout_p), _pad_channels(b2, cout_p)

    bh1 = block_h if block_h is not None else _choose_block_h(H, W, cin, cout_p)
    bh2 = block_h if block_h is not None else _choose_block_h(H, W, cout_p, cout_p)

    # layer 1: conv1 + per-tile channel stats
    one = jnp.ones((1, cin), jnp.float32)
    zero = jnp.zeros((1, cin), jnp.float32)
    y1, st1 = _conv_layer(x, w1p, one, zero, block_h=bh1,
                          fuse_input_bn_relu=False)
    sc1, sh1 = _bn_scale_shift(st1, g1p, b1p, N * H * W)

    # layer 2: BN1+ReLU fused into the conv2 input path, + stats
    y2, st2 = _conv_layer(y1, w2p, sc1, sh1, block_h=bh2,
                          fuse_input_bn_relu=True)
    sc2, sh2 = _bn_scale_shift(st2, g2p, b2p, N * H * W)

    # final BN2 + ReLU (tiled elementwise pass)
    out = _bn_relu(y2, sc2, sh2, block_h=bh2)

    out = out[..., :cout]                       # drop channel padding
    return jnp.transpose(out, (0, 3, 1, 2))     # NHWC -> NCHW


# --------------------------- reference (for checking) --------------------------
def _ref_conv_bn_relu(x_nchw, w_oihw, gamma, beta):
    # Same numerics as the kernel: bf16 conv operands, f32 accumulation,
    # f32 training-mode BatchNorm (biased variance, eps=1e-5), ReLU.
    y = jax.lax.conv_general_dilated(
        x_nchw.astype(jnp.bfloat16), w_oihw.astype(jnp.bfloat16),
        window_strides=(1, 1), padding=((1, 1), (1, 1)),
        dimension_numbers=("NCHW", "OIHW", "NCHW"),
        preferred_element_type=jnp.float32)
    mean = jnp.mean(y, axis=(0, 2, 3), keepdims=True)
    var = jnp.mean(jnp.square(y - mean), axis=(0, 2, 3), keepdims=True)
    y = (y - mean) * jax.lax.rsqrt(var + BN_EPS)
    y = y * gamma[None, :, None, None] + beta[None, :, None, None]
    return jnp.maximum(y, 0.0)


def _ref_double_conv(x_nchw, params):
    w1, g1, b1, w2, g2, b2 = params
    h = _ref_conv_bn_relu(x_nchw, w1, g1, b1)
    return _ref_conv_bn_relu(h, w2, g2, b2)


if __name__ == "__main__":
    N, Cin, Cout, HW = 2, 4, 8, 16

    key = jax.random.PRNGKey(0)
    kx, kw1, kw2 = jax.random.split(key, 3)

    x = jax.random.normal(kx, (N, Cin, HW, HW), dtype=jnp.float32)
    w1 = 0.1 * jax.random.normal(kw1, (Cout, Cin, 3, 3), dtype=jnp.float32)
    w2 = 0.1 * jax.random.normal(kw2, (Cout, Cout, 3, 3), dtype=jnp.float32)
    g1 = jnp.ones((Cout,), jnp.float32)
    b1 = jnp.zeros((Cout,), jnp.float32)
    g2 = jnp.ones((Cout,), jnp.float32)
    b2 = jnp.zeros((Cout,), jnp.float32)
    params = (w1, g1, b1, w2, g2, b2)

    # block_h=8 -> 2 row-blocks per image, so the interior-halo path (neighbor
    # rows, not just the zero borders) is exercised by the test.
    fwd = jax.jit(functools.partial(double_conv, block_h=8))
    out = jax.block_until_ready(fwd(x, params))
    ref = jax.block_until_ready(_ref_double_conv(x, params))

    assert out.shape == (N, Cout, HW, HW), out.shape
    np.testing.assert_allclose(np.asarray(out), np.asarray(ref),
                               rtol=1e-4, atol=1e-4)
    print("KERNEL_OK")
</pallas_src>

<mosaic_0001>
module attributes {stable_mosaic.version = 11 : i64} {
  func.func @_conv_stats_kernel(%arg0: i32, %arg1: i32, %arg2: memref<1x4xf32, #tpu.memory_space<vmem>>, %arg3: memref<1x4xf32, #tpu.memory_space<vmem>>, %arg4: memref<1x8x16x4xf32, #tpu.memory_space<vmem>>, %arg5: memref<1x1x16x4xf32, #tpu.memory_space<vmem>>, %arg6: memref<1x1x16x4xf32, #tpu.memory_space<vmem>>, %arg7: memref<3x3x4x128xbf16, #tpu.memory_space<vmem>>, %arg8: memref<1x8x16x128xf32, #tpu.memory_space<vmem>>, %arg9: memref<1x1x2x128xf32, #tpu.memory_space<vmem>>, %arg10: memref<10x18x4xf32, #tpu.memory_space<vmem>>) attributes {dimension_semantics = [#tpu.dimension_semantics<parallel>, #tpu.dimension_semantics<parallel>], iteration_bounds = array<i64: 2, 2>, scalar_prefetch = 0 : i64, scratch_operands = 1 : i64, tpu.core_type = #tpu.core_type<tc>, window_params = [{pipeline_mode = #tpu.pipeline_mode<synchronous>, transform_indices = @transform_0, window_bounds = array<i64: 1, 4>}, {pipeline_mode = #tpu.pipeline_mode<synchronous>, transform_indices = @transform_1, window_bounds = array<i64: 1, 4>}, {transform_indices = @transform_2, window_bounds = array<i64: 1, 8, 16, 4>}, {transform_indices = @transform_3, window_bounds = array<i64: 1, 1, 16, 4>}, {transform_indices = @transform_4, window_bounds = array<i64: 1, 1, 16, 4>}, {pipeline_mode = #tpu.pipeline_mode<synchronous>, transform_indices = @transform_5, window_bounds = array<i64: 3, 3, 4, 128>}, {transform_indices = @transform_6, window_bounds = array<i64: 1, 8, 16, 128>}, {transform_indices = @transform_7, window_bounds = array<i64: 1, 1, 2, 128>}]} {
    %c0 = arith.constant 0 : index
    %c0_0 = arith.constant 0 : index
    %c0_1 = arith.constant 0 : index
    %c0_2 = arith.constant 0 : index
    %0 = vector.load %arg5[%c0, %c0_0, %c0_1, %c0_2] : memref<1x1x16x4xf32, #tpu.memory_space<vmem>>, vector<1x1x16x4xf32>
    %1 = vector.shape_cast %0 : vector<1x1x16x4xf32> to vector<1x16x4xf32>
    %c0_3 = arith.constant 0 : index
    %c0_4 = arith.constant 0 : index
    %c0_5 = arith.constant 0 : index
    %c0_6 = arith.constant 0 : index
    %2 = vector.load %arg6[%c0_3, %c0_4, %c0_5, %c0_6] : memref<1x1x16x4xf32, #tpu.memory_space<vmem>>, vector<1x1x16x4xf32>
    %3 = vector.shape_cast %2 : vector<1x1x16x4xf32> to vector<1x16x4xf32>
    %c0_i32 = arith.constant 0 : i32
    %4 = arith.cmpi sgt, %arg1, %c0_i32 : i32
    %cst = arith.constant 0.000000e+00 : f32
    %5 = vector.broadcast %cst : f32 to vector<1x16x4xf32>
    %6 = arith.select %4, %1, %5 : vector<1x16x4xf32>
    %c1_i32 = arith.constant 1 : i32
    %7 = arith.cmpi slt, %arg1, %c1_i32 : i32
    %cst_7 = arith.constant 0.000000e+00 : f32
    %8 = vector.broadcast %cst_7 : f32 to vector<1x16x4xf32>
    %9 = arith.select %7, %3, %8 : vector<1x16x4xf32>
    %cst_8 = arith.constant 0.000000e+00 : f32
    %10 = vector.broadcast %cst_8 : f32 to vector<10x1x4xf32>
    %c0_9 = arith.constant 0 : index
    %c0_10 = arith.constant 0 : index
    %c0_11 = arith.constant 0 : index
    %11 = vector.load %arg10[%c0_9, %c0_10, %c0_11] : memref<10x18x4xf32, #tpu.memory_space<vmem>>, vector<10x1x4xf32>
    tpu.vector_store %arg10[%c0_9, %c0_10, %c0_11], %10 {strides = array<i32>} : memref<10x18x4xf32, #tpu.memory_space<vmem>>, vector<10x1x4xf32>,
    %c0_12 = arith.constant 0 : index
    %c17 = arith.constant 17 : index
    %c0_13 = arith.constant 0 : index
    %12 = vector.load %arg10[%c0_12, %c17, %c0_13] : memref<10x18x4xf32, #tpu.memory_space<vmem>>, vector<10x1x4xf32>
    tpu.vector_store %arg10[%c0_12, %c17, %c0_13], %10 {strides = array<i32>} : memref<10x18x4xf32, #tpu.memory_space<vmem>>, vector<10x1x4xf32>,
    %c0_14 = arith.constant 0 : index
    %c1 = arith.constant 1 : index
    %c0_15 = arith.constant 0 : index
    %13 = vector.load %arg10[%c0_14, %c1, %c0_15] : memref<10x18x4xf32, #tpu.memory_space<vmem>>, vector<1x16x4xf32>
    tpu.vector_store %arg10[%c0_14, %c1, %c0_15], %6 {strides = array<i32>} : memref<10x18x4xf32, #tpu.memory_space<vmem>>, vector<1x16x4xf32>,
    %c9 = arith.constant 9 : index
    %c1_16 = arith.constant 1 : index
    %c0_17 = arith.constant 0 : index
    %14 = vector.load %arg10[%c9, %c1_16, %c0_17] : memref<10x18x4xf32, #tpu.memory_space<vmem>>, vector<1x16x4xf32>
    tpu.vector_store %arg10[%c9, %c1_16, %c0_17], %9 {strides = array<i32>} : memref<10x18x4xf32, #tpu.memory_space<vmem>>, vector<1x16x4xf32>,
    %c0_18 = arith.constant 0 : index
    %c0_19 = arith.constant 0 : index
    %c0_20 = arith.constant 0 : index
    %c0_21 = arith.constant 0 : index
    %15 = vector.load %arg4[%c0_18, %c0_19, %c0_20, %c0_21] : memref<1x8x16x4xf32, #tpu.memory_space<vmem>>, vector<1x8x16x4xf32>
    %16 = vector.shape_cast %15 : vector<1x8x16x4xf32> to vector<8x16x4xf32>
    %c1_22 = arith.constant 1 : index
    %c1_23 = arith.constant 1 : index
    %c0_24 = arith.constant 0 : index
    %17 = vector.load %arg10[%c1_22, %c1_23, %c0_24] : memref<10x18x4xf32, #tpu.memory_space<vmem>>, vector<8x16x4xf32>
    tpu.vector_store %arg10[%c1_22, %c1_23, %c0_24], %16 {strides = array<i32>} : memref<10x18x4xf32, #tpu.memory_space<vmem>>, vector<8x16x4xf32>,
    %cst_25 = arith.constant 0.000000e+00 : f32
    %18 = vector.broadcast %cst_25 : f32 to vector<128x128xf32>
    %c0_26 = arith.constant 0 : index
    %c0_27 = arith.constant 0 : index
    %c0_28 = arith.constant 0 : index
    %19 = vector.load %arg10[%c0_26, %c0_27, %c0_28] : memref<10x18x4xf32, #tpu.memory_space<vmem>>, vector<8x16x4xf32>
    %20 = vector.shape_cast %19 : vector<8x16x4xf32> to vector<128x4xf32>
    %21 = arith.truncf %20 : vector<128x4xf32> to vector<128x4xbf16>
    %c0_29 = arith.constant 0 : index
    %c0_30 = arith.constant 0 : index
    %c0_31 = arith.constant 0 : index
    %c0_32 = arith.constant 0 : index
    %22 = vector.load %arg7[%c0_29, %c0_30, %c0_31, %c0_32] : memref<3x3x4x128xbf16, #tpu.memory_space<vmem>>, vector<1x1x4x128xbf16>
    %23 = vector.shape_cast %22 : vector<1x1x4x128xbf16> to vector<4x128xbf16>
    %cst_33 = arith.constant dense<0.000000e+00> : vector<128x128xf32>
    %24 = tpu.matmul %21, %23, %cst_33 {dimension_numbers = #tpu.dot_dimension_numbers<[1], [0], [0], [1], [0, 0, 1, 1], [], []>} : vector<128x4xbf16>, vector<4x128xbf16>, vector<128x128xf32> -> vector<128x128xf32>
    %25 = arith.addf %18, %24 : vector<128x128xf32>
    %c0_34 = arith.constant 0 : index
    %c1_35 = arith.constant 1 : index
    %c0_36 = arith.constant 0 : index
    %26 = vector.load %arg10[%c0_34, %c1_35, %c0_36] : memref<10x18x4xf32, #tpu.memory_space<vmem>>, vector<8x16x4xf32>
    %27 = vector.shape_cast %26 : vector<8x16x4xf32> to vector<128x4xf32>
    %28 = arith.truncf %27 : vector<128x4xf32> to vector<128x4xbf16>
    %c0_37 = arith.constant 0 : index
    %c1_38 = arith.constant 1 : index
    %c0_39 = arith.constant 0 : index
    %c0_40 = arith.constant 0 : index
    %29 = vector.load %arg7[%c0_37, %c1_38, %c0_39, %c0_40] : memref<3x3x4x128xbf16, #tpu.memory_space<vmem>>, vector<1x1x4x128xbf16>
    %30 = vector.shape_cast %29 : vector<1x1x4x128xbf16> to vector<4x128xbf16>
    %cst_41 = arith.constant dense<0.000000e+00> : vector<128x128xf32>
    %31 = tpu.matmul %28, %30, %cst_41 {dimension_numbers = #tpu.dot_dimension_numbers<[1], [0], [0], [1], [0, 0, 1, 1], [], []>} : vector<128x4xbf16>, vector<4x128xbf16>, vector<128x128xf32> -> vector<128x128xf32>
    %32 = arith.addf %25, %31 : vector<128x128xf32>
    %c0_42 = arith.constant 0 : index
    %c2 = arith.constant 2 : index
    %c0_43 = arith.constant 0 : index
    %33 = vector.load %arg10[%c0_42, %c2, %c0_43] : memref<10x18x4xf32, #tpu.memory_space<vmem>>, vector<8x16x4xf32>
    %34 = vector.shape_cast %33 : vector<8x16x4xf32> to vector<128x4xf32>
    %35 = arith.truncf %34 : vector<128x4xf32> to vector<128x4xbf16>
    %c0_44 = arith.constant 0 : index
    %c2_45 = arith.constant 2 : index
    %c0_46 = arith.constant 0 : index
    %c0_47 = arith.constant 0 : index
    %36 = vector.load %arg7[%c0_44, %c2_45, %c0_46, %c0_47] : memref<3x3x4x128xbf16, #tpu.memory_space<vmem>>, vector<1x1x4x128xbf16>
    %37 = vector.shape_cast %36 : vector<1x1x4x128xbf16> to vector<4x128xbf16>
    %cst_48 = arith.constant dense<0.000000e+00> : vector<128x128xf32>
    %38 = tpu.matmul %35, %37, %cst_48 {dimension_numbers = #tpu.dot_dimension_numbers<[1], [0], [0], [1], [0, 0, 1, 1], [], []>} : vector<128x4xbf16>, vector<4x128xbf16>, vector<128x128xf32> -> vector<128x128xf32>
    %39 = arith.addf %32, %38 : vector<128x128xf32>
    %c1_49 = arith.constant 1 : index
    %c0_50 = arith.constant 0 : index
    %c0_51 = arith.constant 0 : index
    %40 = vector.load %arg10[%c1_49, %c0_50, %c0_51] : memref<10x18x4xf32, #tpu.memory_space<vmem>>, vector<8x16x4xf32>
    %41 = vector.shape_cast %40 : vector<8x16x4xf32> to vector<128x4xf32>
    %42 = arith.truncf %41 : vector<128x4xf32> to vector<128x4xbf16>
    %c1_52 = arith.constant 1 : index
    %c0_53 = arith.constant 0 : index
    %c0_54 = arith.constant 0 : index
    %c0_55 = arith.constant 0 : index
    %43 = vector.load %arg7[%c1_52, %c0_53, %c0_54, %c0_55] : memref<3x3x4x128xbf16, #tpu.memory_space<vmem>>, vector<1x1x4x128xbf16>
    %44 = vector.shape_cast %43 : vector<1x1x4x128xbf16> to vector<4x128xbf16>
    %cst_56 = arith.constant dense<0.000000e+00> : vector<128x128xf32>
    %45 = tpu.matmul %42, %44, %cst_56 {dimension_numbers = #tpu.dot_dimension_numbers<[1], [0], [0], [1], [0, 0, 1, 1], [], []>} : vector<128x4xbf16>, vector<4x128xbf16>, vector<128x128xf32> -> vector<128x128xf32>
    %46 = arith.addf %39, %45 : vector<128x128xf32>
    %c1_57 = arith.constant 1 : index
    %c1_58 = arith.constant 1 : index
    %c0_59 = arith.constant 0 : index
    %47 = vector.load %arg10[%c1_57, %c1_58, %c0_59] : memref<10x18x4xf32, #tpu.memory_space<vmem>>, vector<8x16x4xf32>
    %48 = vector.shape_cast %47 : vector<8x16x4xf32> to vector<128x4xf32>
    %49 = arith.truncf %48 : vector<128x4xf32> to vector<128x4xbf16>
    %c1_60 = arith.constant 1 : index
    %c1_61 = arith.constant 1 : index
    %c0_62 = arith.constant 0 : index
    %c0_63 = arith.constant 0 : index
    %50 = vector.load %arg7[%c1_60, %c1_61, %c0_62, %c0_63] : memref<3x3x4x128xbf16, #tpu.memory_space<vmem>>, vector<1x1x4x128xbf16>
    %51 = vector.shape_cast %50 : vector<1x1x4x128xbf16> to vector<4x128xbf16>
    %cst_64 = arith.constant dense<0.000000e+00> : vector<128x128xf32>
    %52 = tpu.matmul %49, %51, %cst_64 {dimension_numbers = #tpu.dot_dimension_numbers<[1], [0], [0], [1], [0, 0, 1, 1], [], []>} : vector<128x4xbf16>, vector<4x128xbf16>, vector<128x128xf32> -> vector<128x128xf32>
    %53 = arith.addf %46, %52 : vector<128x128xf32>
    %c1_65 = arith.constant 1 : index
    %c2_66 = arith.constant 2 : index
    %c0_67 = arith.constant 0 : index
    %54 = vector.load %arg10[%c1_65, %c2_66, %c0_67] : memref<10x18x4xf32, #tpu.memory_space<vmem>>, vector<8x16x4xf32>
    %55 = vector.shape_cast %54 : vector<8x16x4xf32> to vector<128x4xf32>
    %56 = arith.truncf %55 : vector<128x4xf32> to vector<128x4xbf16>
    %c1_68 = arith.constant 1 : index
    %c2_69 = arith.constant 2 : index
    %c0_70 = arith.constant 0 : index
    %c0_71 = arith.constant 0 : index
    %57 = vector.load %arg7[%c1_68, %c2_69, %c0_70, %c0_71] : memref<3x3x4x128xbf16, #tpu.memory_space<vmem>>, vector<1x1x4x128xbf16>
    %58 = vector.shape_cast %57 : vector<1x1x4x128xbf16> to vector<4x128xbf16>
    %cst_72 = arith.constant dense<0.000000e+00> : vector<128x128xf32>
    %59 = tpu.matmul %56, %58, %cst_72 {dimension_numbers = #tpu.dot_dimension_numbers<[1], [0], [0], [1], [0, 0, 1, 1], [], []>} : vector<128x4xbf16>, vector<4x128xbf16>, vector<128x128xf32> -> vector<128x128xf32>
    %60 = arith.addf %53, %59 : vector<128x128xf32>
    %c2_73 = arith.constant 2 : index
    %c0_74 = arith.constant 0 : index
    %c0_75 = arith.constant 0 : index
    %61 = vector.load %arg10[%c2_73, %c0_74, %c0_75] : memref<10x18x4xf32, #tpu.memory_space<vmem>>, vector<8x16x4xf32>
    %62 = vector.shape_cast %61 : vector<8x16x4xf32> to vector<128x4xf32>
    %63 = arith.truncf %62 : vector<128x4xf32> to vector<128x4xbf16>
    %c2_76 = arith.constant 2 : index
    %c0_77 = arith.constant 0 : index
    %c0_78 = arith.constant 0 : index
    %c0_79 = arith.constant 0 : index
    %64 = vector.load %arg7[%c2_76, %c0_77, %c0_78, %c0_79] : memref<3x3x4x128xbf16, #tpu.memory_space<vmem>>, vector<1x1x4x128xbf16>
    %65 = vector.shape_cast %64 : vector<1x1x4x128xbf16> to vector<4x128xbf16>
    %cst_80 = arith.constant dense<0.000000e+00> : vector<128x128xf32>
    %66 = tpu.matmul %63, %65, %cst_80 {dimension_numbers = #tpu.dot_dimension_numbers<[1], [0], [0], [1], [0, 0, 1, 1], [], []>} : vector<128x4xbf16>, vector<4x128xbf16>, vector<128x128xf32> -> vector<128x128xf32>
    %67 = arith.addf %60, %66 : vector<128x128xf32>
    %c2_81 = arith.constant 2 : index
    %c1_82 = arith.constant 1 : index
    %c0_83 = arith.constant 0 : index
    %68 = vector.load %arg10[%c2_81, %c1_82, %c0_83] : memref<10x18x4xf32, #tpu.memory_space<vmem>>, vector<8x16x4xf32>
    %69 = vector.shape_cast %68 : vector<8x16x4xf32> to vector<128x4xf32>
    %70 = arith.truncf %69 : vector<128x4xf32> to vector<128x4xbf16>
    %c2_84 = arith.constant 2 : index
    %c1_85 = arith.constant 1 : index
    %c0_86 = arith.constant 0 : index
    %c0_87 = arith.constant 0 : index
    %71 = vector.load %arg7[%c2_84, %c1_85, %c0_86, %c0_87] : memref<3x3x4x128xbf16, #tpu.memory_space<vmem>>, vector<1x1x4x128xbf16>
    %72 = vector.shape_cast %71 : vector<1x1x4x128xbf16> to vector<4x128xbf16>
    %cst_88 = arith.constant dense<0.000000e+00> : vector<128x128xf32>
    %73 = tpu.matmul %70, %72, %cst_88 {dimension_numbers = #tpu.dot_dimension_numbers<[1], [0], [0], [1], [0, 0, 1, 1], [], []>} : vector<128x4xbf16>, vector<4x128xbf16>, vector<128x128xf32> -> vector<128x128xf32>
    %74 = arith.addf %67, %73 : vector<128x128xf32>
    %c2_89 = arith.constant 2 : index
    %c2_90 = arith.constant 2 : index
    %c0_91 = arith.constant 0 : index
    %75 = vector.load %arg10[%c2_89, %c2_90, %c0_91] : memref<10x18x4xf32, #tpu.memory_space<vmem>>, vector<8x16x4xf32>
    %76 = vector.shape_cast %75 : vector<8x16x4xf32> to vector<128x4xf32>
    %77 = arith.truncf %76 : vector<128x4xf32> to vector<128x4xbf16>
    %c2_92 = arith.constant 2 : index
    %c2_93 = arith.constant 2 : index
    %c0_94 = arith.constant 0 : index
    %c0_95 = arith.constant 0 : index
    %78 = vector.load %arg7[%c2_92, %c2_93, %c0_94, %c0_95] : memref<3x3x4x128xbf16, #tpu.memory_space<vmem>>, vector<1x1x4x128xbf16>
    %79 = vector.shape_cast %78 : vector<1x1x4x128xbf16> to vector<4x128xbf16>
    %cst_96 = arith.constant dense<0.000000e+00> : vector<128x128xf32>
    %80 = tpu.matmul %77, %79, %cst_96 {dimension_numbers = #tpu.dot_dimension_numbers<[1], [0], [0], [1], [0, 0, 1, 1], [], []>} : vector<128x4xbf16>, vector<4x128xbf16>, vector<128x128xf32> -> vector<128x128xf32>
    %81 = arith.addf %74, %80 : vector<128x128xf32>
    %82 = vector.shape_cast %81 : vector<128x128xf32> to vector<1x8x16x128xf32>
    %c0_97 = arith.constant 0 : index
    %c0_98 = arith.constant 0 : index
    %c0_99 = arith.constant 0 : index
    %c0_100 = arith.constant 0 : index
    %83 = vector.load %arg8[%c0_97, %c0_98, %c0_99, %c0_100] : memref<1x8x16x128xf32, #tpu.memory_space<vmem>>, vector<1x8x16x128xf32>
    tpu.vector_store %arg8[%c0_97, %c0_98, %c0_99, %c0_100], %82 {strides = array<i32>} : memref<1x8x16x128xf32, #tpu.memory_space<vmem>>, vector<1x8x16x128xf32>,
    %cst_101 = arith.constant 1.000000e+00 : f32
    %84 = vector.broadcast %cst_101 : f32 to vector<1x128xf32>
    %cst_102 = arith.constant dense<0.000000e+00> : vector<1x128xf32>
    %85 = tpu.matmul %84, %81, %cst_102 {dimension_numbers = #tpu.dot_dimension_numbers<[1], [0], [0], [1], [0, 0, 1, 1], [], []>} : vector<1x128xf32>, vector<128x128xf32>, vector<1x128xf32> -> vector<1x128xf32>
    %86 = arith.mulf %81, %81 : vector<128x128xf32>
    %cst_103 = arith.constant dense<0.000000e+00> : vector<1x128xf32>
    %87 = tpu.matmul %84, %86, %cst_103 {dimension_numbers = #tpu.dot_dimension_numbers<[1], [0], [0], [1], [0, 0, 1, 1], [], []>} : vector<1x128xf32>, vector<128x128xf32>, vector<1x128xf32> -> vector<1x128xf32>
    %88 = tpu.concatenate %85, %87 in 0 : vector<1x128xf32>, vector<1x128xf32> -> vector<2x128xf32>
    %89 = vector.shape_cast %88 : vector<2x128xf32> to vector<1x1x2x128xf32>
    %c0_104 = arith.constant 0 : index
    %c0_105 = arith.constant 0 : index
    %c0_106 = arith.constant 0 : index
    %c0_107 = arith.constant 0 : index
    %90 = vector.load %arg9[%c0_104, %c0_105, %c0_106, %c0_107] : memref<1x1x2x128xf32, #tpu.memory_space<vmem>>, vector<1x1x2x128xf32>
    tpu.vector_store %arg9[%c0_104, %c0_105, %c0_106, %c0_107], %89 {strides = array<i32>} : memref<1x1x2x128xf32, #tpu.memory_space<vmem>>, vector<1x1x2x128xf32>,
    return
  }
  func.func @transform_0(%arg0: i32, %arg1: i32) -> (i32, i32) {
    %c0_i32 = arith.constant 0 : i32
    %c0_i32_0 = arith.constant 0 : i32
    %c0_i32_1 = arith.constant 0 : i32
    return %c0_i32, %c0_i32_0 : i32, i32
  }
  func.func @transform_1(%arg0: i32, %arg1: i32) -> (i32, i32) {
    %c0_i32 = arith.constant 0 : i32
    %c0_i32_0 = arith.constant 0 : i32
    %c0_i32_1 = arith.constant 0 : i32
    return %c0_i32, %c0_i32_0 : i32, i32
  }
  func.func @transform_2(%arg0: i32, %arg1: i32) -> (i32, i32, i32, i32) {
    %c0_i32 = arith.constant 0 : i32
    %c0_i32_0 = arith.constant 0 : i32
    %c0_i32_1 = arith.constant 0 : i32
    return %arg0, %arg1, %c0_i32, %c0_i32_0 : i32, i32, i32, i32
  }
  func.func @transform_3(%arg0: i32, %arg1: i32) -> (i32, i32, i32, i32) {
    %c8_i32 = arith.constant 8 : i32
    %0 = arith.muli %arg1, %c8_i32 : i32
    %c1_i32 = arith.constant 1 : i32
    %1 = arith.subi %0, %c1_i32 : i32
    %c0_i32 = arith.constant 0 : i32
    %2 = arith.maxsi %1, %c0_i32 : i32
    %c0_i32_0 = arith.constant 0 : i32
    %c0_i32_1 = arith.constant 0 : i32
    %c0_i32_2 = arith.constant 0 : i32
    return %arg0, %2, %c0_i32_0, %c0_i32_1 : i32, i32, i32, i32
  }
  func.func @transform_4(%arg0: i32, %arg1: i32) -> (i32, i32, i32, i32) {
    %c1_i32 = arith.constant 1 : i32
    %0 = arith.addi %arg1, %c1_i32 : i32
    %c8_i32 = arith.constant 8 : i32
    %1 = arith.muli %0, %c8_i32 : i32
    %c15_i32 = arith.constant 15 : i32
    %2 = arith.minsi %1, %c15_i32 : i32
    %c0_i32 = arith.constant 0 : i32
    %c0_i32_0 = arith.constant 0 : i32
    %c0_i32_1 = arith.constant 0 : i32
    return %arg0, %2, %c0_i32, %c0_i32_0 : i32, i32, i32, i32
  }
  func.func @transform_5(%arg0: i32, %arg1: i32) -> (i32, i32, i32, i32) {
    %c0_i32 = arith.constant 0 : i32
    %c0_i32_0 = arith.constant 0 : i32
    %c0_i32_1 = arith.constant 0 : i32
    %c0_i32_2 = arith.constant 0 : i32
    %c0_i32_3 = arith.constant 0 : i32
    return %c0_i32, %c0_i32_0, %c0_i32_1, %c0_i32_2 : i32, i32, i32, i32
  }
  func.func @transform_6(%arg0: i32, %arg1: i32) -> (i32, i32, i32, i32) {
    %c0_i32 = arith.constant 0 : i32
    %c0_i32_0 = arith.constant 0 : i32
    %c0_i32_1 = arith.constant 0 : i32
    return %arg0, %arg1, %c0_i32, %c0_i32_0 : i32, i32, i32, i32
  }
  func.func @transform_7(%arg0: i32, %arg1: i32) -> (i32, i32, i32, i32) {
    %c0_i32 = arith.constant 0 : i32
    %c0_i32_0 = arith.constant 0 : i32
    %c0_i32_1 = arith.constant 0 : i32
    return %arg0, %arg1, %c0_i32, %c0_i32_0 : i32, i32, i32, i32
  }
}

module attributes {stable_mosaic.version = 11 : i64} {
  func.func @_conv_stats_kernel(%arg0: i32, %arg1: i32, %arg2: memref<1x128xf32, #tpu.memory_space<vmem>>, %arg3: memref<1x128xf32, #tpu.memory_space<vmem>>, %arg4: memref<1x8x16x128xf32, #tpu.memory_space<vmem>>, %arg5: memref<1x1x16x128xf32, #tpu.memory_space<vmem>>, %arg6: memref<1x1x16x128xf32, #tpu.memory_space<vmem>>, %arg7: memref<3x3x128x128xbf16, #tpu.memory_space<vmem>>, %arg8: memref<1x8x16x128xf32, #tpu.memory_space<vmem>>, %arg9: memref<1x1x2x128xf32, #tpu.memory_space<vmem>>, %arg10: memref<10x18x128xf32, #tpu.memory_space<vmem>>) attributes {dimension_semantics = [#tpu.dimension_semantics<parallel>, #tpu.dimension_semantics<parallel>], iteration_bounds = array<i64: 2, 2>, scalar_prefetch = 0 : i64, scratch_operands = 1 : i64, tpu.core_type = #tpu.core_type<tc>, window_params = [{pipeline_mode = #tpu.pipeline_mode<synchronous>, transform_indices = @transform_0, window_bounds = array<i64: 1, 128>}, {pipeline_mode = #tpu.pipeline_mode<synchronous>, transform_indices = @transform_1, window_bounds = array<i64: 1, 128>}, {transform_indices = @transform_2, window_bounds = array<i64: 1, 8, 16, 128>}, {transform_indices = @transform_3, window_bounds = array<i64: 1, 1, 16, 128>}, {transform_indices = @transform_4, window_bounds = array<i64: 1, 1, 16, 128>}, {pipeline_mode = #tpu.pipeline_mode<synchronous>, transform_indices = @transform_5, window_bounds = array<i64: 3, 3, 128, 128>}, {transform_indices = @transform_6, window_bounds = array<i64: 1, 8, 16, 128>}, {transform_indices = @transform_7, window_bounds = array<i64: 1, 1, 2, 128>}]} {
    %c0 = arith.constant 0 : index
    %c0_0 = arith.constant 0 : index
    %0 = vector.load %arg2[%c0, %c0_0] : memref<1x128xf32, #tpu.memory_space<vmem>>, vector<1x128xf32>
    %1 = vector.shape_cast %0 : vector<1x128xf32> to vector<1x1x128xf32>
    %c0_1 = arith.constant 0 : index
    %c0_2 = arith.constant 0 : index
    %2 = vector.load %arg3[%c0_1, %c0_2] : memref<1x128xf32, #tpu.memory_space<vmem>>, vector<1x128xf32>
    %3 = vector.shape_cast %2 : vector<1x128xf32> to vector<1x1x128xf32>
    %c0_3 = arith.constant 0 : index
    %c0_4 = arith.constant 0 : index
    %c0_5 = arith.constant 0 : index
    %c0_6 = arith.constant 0 : index
    %4 = vector.load %arg5[%c0_3, %c0_4, %c0_5, %c0_6] : memref<1x1x16x128xf32, #tpu.memory_space<vmem>>, vector<1x1x16x128xf32>
    %5 = vector.shape_cast %4 : vector<1x1x16x128xf32> to vector<1x16x128xf32>
    %6 = vector.broadcast %1 : vector<1x1x128xf32> to vector<1x16x128xf32>
    %7 = arith.mulf %5, %6 : vector<1x16x128xf32>
    %8 = vector.broadcast %3 : vector<1x1x128xf32> to vector<1x16x128xf32>
    %9 = arith.addf %7, %8 : vector<1x16x128xf32>
    %cst = arith.constant 0.000000e+00 : f32
    %10 = vector.broadcast %cst : f32 to vector<1x16x128xf32>
    %11 = arith.maximumf %9, %10 : vector<1x16x128xf32>
    %c0_7 = arith.constant 0 : index
    %c0_8 = arith.constant 0 : index
    %c0_9 = arith.constant 0 : index
    %c0_10 = arith.constant 0 : index
    %12 = vector.load %arg6[%c0_7, %c0_8, %c0_9, %c0_10] : memref<1x1x16x128xf32, #tpu.memory_space<vmem>>, vector<1x1x16x128xf32>
    %13 = vector.shape_cast %12 : vector<1x1x16x128xf32> to vector<1x16x128xf32>
    %14 = vector.broadcast %1 : vector<1x1x128xf32> to vector<1x16x128xf32>
    %15 = arith.mulf %13, %14 : vector<1x16x128xf32>
    %16 = vector.broadcast %3 : vector<1x1x128xf32> to vector<1x16x128xf32>
    %17 = arith.addf %15, %16 : vector<1x16x128xf32>
    %cst_11 = arith.constant 0.000000e+00 : f32
    %18 = vector.broadcast %cst_11 : f32 to vector<1x16x128xf32>
    %19 = arith.maximumf %17, %18 : vector<1x16x128xf32>
    %c0_i32 = arith.constant 0 : i32
    %20 = arith.cmpi sgt, %arg1, %c0_i32 : i32
    %cst_12 = arith.constant 0.000000e+00 : f32
    %21 = vector.broadcast %cst_12 : f32 to vector<1x16x128xf32>
    %22 = arith.select %20, %11, %21 : vector<1x16x128xf32>
    %c1_i32 = arith.constant 1 : i32
    %23 = arith.cmpi slt, %arg1, %c1_i32 : i32
    %cst_13 = arith.constant 0.000000e+00 : f32
    %24 = vector.broadcast %cst_13 : f32 to vector<1x16x128xf32>
    %25 = arith.select %23, %19, %24 : vector<1x16x128xf32>
    %cst_14 = arith.constant 0.000000e+00 : f32
    %26 = vector.broadcast %cst_14 : f32 to vector<10x1x128xf32>
    %c0_15 = arith.constant 0 : index
    %c0_16 = arith.constant 0 : index
    %c0_17 = arith.constant 0 : index
    %27 = vector.load %arg10[%c0_15, %c0_16, %c0_17] : memref<10x18x128xf32, #tpu.memory_space<vmem>>, vector<10x1x128xf32>
    tpu.vector_store %arg10[%c0_15, %c0_16, %c0_17], %26 {strides = array<i32>} : memref<10x18x128xf32, #tpu.memory_space<vmem>>, vector<10x1x128xf32>,
    %c0_18 = arith.constant 0 : index
    %c17 = arith.constant 17 : index
    %c0_19 = arith.constant 0 : index
    %28 = vector.load %arg10[%c0_18, %c17, %c0_19] : memref<10x18x128xf32, #tpu.memory_space<vmem>>, vector<10x1x128xf32>
    tpu.vector_store %arg10[%c0_18, %c17, %c0_19], %26 {strides = array<i32>} : memref<10x18x128xf32, #tpu.memory_space<vmem>>, vector<10x1x128xf32>,
    %c0_20 = arith.constant 0 : index
    %c1 = arith.constant 1 : index
    %c0_21 = arith.constant 0 : index
    %29 = vector.load %arg10[%c0_20, %c1, %c0_21] : memref<10x18x128xf32, #tpu.memory_space<vmem>>, vector<1x16x128xf32>
    tpu.vector_store %arg10[%c0_20, %c1, %c0_21], %22 {strides = array<i32>} : memref<10x18x128xf32, #tpu.memory_space<vmem>>, vector<1x16x128xf32>,
    %c9 = arith.constant 9 : index
    %c1_22 = arith.constant 1 : index
    %c0_23 = arith.constant 0 : index
    %30 = vector.load %arg10[%c9, %c1_22, %c0_23] : memref<10x18x128xf32, #tpu.memory_space<vmem>>, vector<1x16x128xf32>
    tpu.vector_store %arg10[%c9, %c1_22, %c0_23], %25 {strides = array<i32>} : memref<10x18x128xf32, #tpu.memory_space<vmem>>, vector<1x16x128xf32>,
    %c0_24 = arith.constant 0 : index
    %c0_25 = arith.constant 0 : index
    %c0_26 = arith.constant 0 : index
    %c0_27 = arith.constant 0 : index
    %31 = vector.load %arg4[%c0_24, %c0_25, %c0_26, %c0_27] : memref<1x8x16x128xf32, #tpu.memory_space<vmem>>, vector<1x8x16x128xf32>
    %32 = vector.shape_cast %31 : vector<1x8x16x128xf32> to vector<8x16x128xf32>
    %33 = vector.broadcast %1 : vector<1x1x128xf32> to vector<8x16x128xf32>
    %34 = arith.mulf %32, %33 : vector<8x16x128xf32>
    %35 = vector.broadcast %3 : vector<1x1x128xf32> to vector<8x16x128xf32>
    %36 = arith.addf %34, %35 : vector<8x16x128xf32>
    %cst_28 = arith.constant 0.000000e+00 : f32
    %37 = vector.broadcast %cst_28 : f32 to vector<8x16x128xf32>
    %38 = arith.maximumf %36, %37 : vector<8x16x128xf32>
    %c1_29 = arith.constant 1 : index
    %c1_30 = arith.constant 1 : index
    %c0_31 = arith.constant 0 : index
    %39 = vector.load %arg10[%c1_29, %c1_30, %c0_31] : memref<10x18x128xf32, #tpu.memory_space<vmem>>, vector<8x16x128xf32>
    tpu.vector_store %arg10[%c1_29, %c1_30, %c0_31], %38 {strides = array<i32>} : memref<10x18x128xf32, #tpu.memory_space<vmem>>, vector<8x16x128xf32>,
    %cst_32 = arith.constant 0.000000e+00 : f32
    %40 = vector.broadcast %cst_32 : f32 to vector<128x128xf32>
    %c0_33 = arith.constant 0 : index
    %c0_34 = arith.constant 0 : index
    %c0_35 = arith.constant 0 : index
    %41 = vector.load %arg10[%c0_33, %c0_34, %c0_35] : memref<10x18x128xf32, #tpu.memory_space<vmem>>, vector<8x16x128xf32>
    %42 = vector.shape_cast %41 : vector<8x16x128xf32> to vector<128x128xf32>
    %43 = arith.truncf %42 : vector<128x128xf32> to vector<128x128xbf16>
    %c0_36 = arith.constant 0 : index
    %c0_37 = arith.constant 0 : index
    %c0_38 = arith.constant 0 : index
    %c0_39 = arith.constant 0 : index
    %44 = vector.load %arg7[%c0_36, %c0_37, %c0_38, %c0_39] : memref<3x3x128x128xbf16, #tpu.memory_space<vmem>>, vector<1x1x128x128xbf16>
    %45 = vector.shape_cast %44 : vector<1x1x128x128xbf16> to vector<128x128xbf16>
    %cst_40 = arith.constant dense<0.000000e+00> : vector<128x128xf32>
    %46 = tpu.matmul %43, %45, %cst_40 {dimension_numbers = #tpu.dot_dimension_numbers<[1], [0], [0], [1], [0, 0, 1, 1], [], []>} : vector<128x128xbf16>, vector<128x128xbf16>, vector<128x128xf32> -> vector<128x128xf32>
    %47 = arith.addf %40, %46 : vector<128x128xf32>
    %c0_41 = arith.constant 0 : index
    %c1_42 = arith.constant 1 : index
    %c0_43 = arith.constant 0 : index
    %48 = vector.load %arg10[%c0_41, %c1_42, %c0_43] : memref<10x18x128xf32, #tpu.memory_space<vmem>>, vector<8x16x128xf32>
    %49 = vector.shape_cast %48 : vector<8x16x128xf32> to vector<128x128xf32>
    %50 = arith.truncf %49 : vector<128x128xf32> to vector<128x128xbf16>
    %c0_44 = arith.constant 0 : index
    %c1_45 = arith.constant 1 : index
    %c0_46 = arith.constant 0 : index
    %c0_47 = arith.constant 0 : index
    %51 = vector.load %arg7[%c0_44, %c1_45, %c0_46, %c0_47] : memref<3x3x128x128xbf16, #tpu.memory_space<vmem>>, vector<1x1x128x128xbf16>
    %52 = vector.shape_cast %51 : vector<1x1x128x128xbf16> to vector<128x128xbf16>
    %cst_48 = arith.constant dense<0.000000e+00> : vector<128x128xf32>
    %53 = tpu.matmul %50, %52, %cst_48 {dimension_numbers = #tpu.dot_dimension_numbers<[1], [0], [0], [1], [0, 0, 1, 1], [], []>} : vector<128x128xbf16>, vector<128x128xbf16>, vector<128x128xf32> -> vector<128x128xf32>
    %54 = arith.addf %47, %53 : vector<128x128xf32>
    %c0_49 = arith.constant 0 : index
    %c2 = arith.constant 2 : index
    %c0_50 = arith.constant 0 : index
    %55 = vector.load %arg10[%c0_49, %c2, %c0_50] : memref<10x18x128xf32, #tpu.memory_space<vmem>>, vector<8x16x128xf32>
    %56 = vector.shape_cast %55 : vector<8x16x128xf32> to vector<128x128xf32>
    %57 = arith.truncf %56 : vector<128x128xf32> to vector<128x128xbf16>
    %c0_51 = arith.constant 0 : index
    %c2_52 = arith.constant 2 : index
    %c0_53 = arith.constant 0 : index
    %c0_54 = arith.constant 0 : index
    %58 = vector.load %arg7[%c0_51, %c2_52, %c0_53, %c0_54] : memref<3x3x128x128xbf16, #tpu.memory_space<vmem>>, vector<1x1x128x128xbf16>
    %59 = vector.shape_cast %58 : vector<1x1x128x128xbf16> to vector<128x128xbf16>
    %cst_55 = arith.constant dense<0.000000e+00> : vector<128x128xf32>
    %60 = tpu.matmul %57, %59, %cst_55 {dimension_numbers = #tpu.dot_dimension_numbers<[1], [0], [0], [1], [0, 0, 1, 1], [], []>} : vector<128x128xbf16>, vector<128x128xbf16>, vector<128x128xf32> -> vector<128x128xf32>
    %61 = arith.addf %54, %60 : vector<128x128xf32>
    %c1_56 = arith.constant 1 : index
    %c0_57 = arith.constant 0 : index
    %c0_58 = arith.constant 0 : index
    %62 = vector.load %arg10[%c1_56, %c0_57, %c0_58] : memref<10x18x128xf32, #tpu.memory_space<vmem>>, vector<8x16x128xf32>
    %63 = vector.shape_cast %62 : vector<8x16x128xf32> to vector<128x128xf32>
    %64 = arith.truncf %63 : vector<128x128xf32> to vector<128x128xbf16>
    %c1_59 = arith.constant 1 : index
    %c0_60 = arith.constant 0 : index
    %c0_61 = arith.constant 0 : index
    %c0_62 = arith.constant 0 : index
    %65 = vector.load %arg7[%c1_59, %c0_60, %c0_61, %c0_62] : memref<3x3x128x128xbf16, #tpu.memory_space<vmem>>, vector<1x1x128x128xbf16>
    %66 = vector.shape_cast %65 : vector<1x1x128x128xbf16> to vector<128x128xbf16>
    %cst_63 = arith.constant dense<0.000000e+00> : vector<128x128xf32>
    %67 = tpu.matmul %64, %66, %cst_63 {dimension_numbers = #tpu.dot_dimension_numbers<[1], [0], [0], [1], [0, 0, 1, 1], [], []>} : vector<128x128xbf16>, vector<128x128xbf16>, vector<128x128xf32> -> vector<128x128xf32>
    %68 = arith.addf %61, %67 : vector<128x128xf32>
    %c1_64 = arith.constant 1 : index
    %c1_65 = arith.constant 1 : index
    %c0_66 = arith.constant 0 : index
    %69 = vector.load %arg10[%c1_64, %c1_65, %c0_66] : memref<10x18x128xf32, #tpu.memory_space<vmem>>, vector<8x16x128xf32>
    %70 = vector.shape_cast %69 : vector<8x16x128xf32> to vector<128x128xf32>
    %71 = arith.truncf %70 : vector<128x128xf32> to vector<128x128xbf16>
    %c1_67 = arith.constant 1 : index
    %c1_68 = arith.constant 1 : index
    %c0_69 = arith.constant 0 : index
    %c0_70 = arith.constant 0 : index
    %72 = vector.load %arg7[%c1_67, %c1_68, %c0_69, %c0_70] : memref<3x3x128x128xbf16, #tpu.memory_space<vmem>>, vector<1x1x128x128xbf16>
    %73 = vector.shape_cast %72 : vector<1x1x128x128xbf16> to vector<128x128xbf16>
    %cst_71 = arith.constant dense<0.000000e+00> : vector<128x128xf32>
    %74 = tpu.matmul %71, %73, %cst_71 {dimension_numbers = #tpu.dot_dimension_numbers<[1], [0], [0], [1], [0, 0, 1, 1], [], []>} : vector<128x128xbf16>, vector<128x128xbf16>, vector<128x128xf32> -> vector<128x128xf32>
    %75 = arith.addf %68, %74 : vector<128x128xf32>
    %c1_72 = arith.constant 1 : index
    %c2_73 = arith.constant 2 : index
    %c0_74 = arith.constant 0 : index
    %76 = vector.load %arg10[%c1_72, %c2_73, %c0_74] : memref<10x18x128xf32, #tpu.memory_space<vmem>>, vector<8x16x128xf32>
    %77 = vector.shape_cast %76 : vector<8x16x128xf32> to vector<128x128xf32>
    %78 = arith.truncf %77 : vector<128x128xf32> to vector<128x128xbf16>
    %c1_75 = arith.constant 1 : index
    %c2_76 = arith.constant 2 : index
    %c0_77 = arith.constant 0 : index
    %c0_78 = arith.constant 0 : index
    %79 = vector.load %arg7[%c1_75, %c2_76, %c0_77, %c0_78] : memref<3x3x128x128xbf16, #tpu.memory_space<vmem>>, vector<1x1x128x128xbf16>
    %80 = vector.shape_cast %79 : vector<1x1x128x128xbf16> to vector<128x128xbf16>
    %cst_79 = arith.constant dense<0.000000e+00> : vector<128x128xf32>
    %81 = tpu.matmul %78, %80, %cst_79 {dimension_numbers = #tpu.dot_dimension_numbers<[1], [0], [0], [1], [0, 0, 1, 1], [], []>} : vector<128x128xbf16>, vector<128x128xbf16>, vector<128x128xf32> -> vector<128x128xf32>
    %82 = arith.addf %75, %81 : vector<128x128xf32>
    %c2_80 = arith.constant 2 : index
    %c0_81 = arith.constant 0 : index
    %c0_82 = arith.constant 0 : index
    %83 = vector.load %arg10[%c2_80, %c0_81, %c0_82] : memref<10x18x128xf32, #tpu.memory_space<vmem>>, vector<8x16x128xf32>
    %84 = vector.shape_cast %83 : vector<8x16x128xf32> to vector<128x128xf32>
    %85 = arith.truncf %84 : vector<128x128xf32> to vector<128x128xbf16>
    %c2_83 = arith.constant 2 : index
    %c0_84 = arith.constant 0 : index
    %c0_85 = arith.constant 0 : index
    %c0_86 = arith.constant 0 : index
    %86 = vector.load %arg7[%c2_83, %c0_84, %c0_85, %c0_86] : memref<3x3x128x128xbf16, #tpu.memory_space<vmem>>, vector<1x1x128x128xbf16>
    %87 = vector.shape_cast %86 : vector<1x1x128x128xbf16> to vector<128x128xbf16>
    %cst_87 = arith.constant dense<0.000000e+00> : vector<128x128xf32>
    %88 = tpu.matmul %85, %87, %cst_87 {dimension_numbers = #tpu.dot_dimension_numbers<[1], [0], [0], [1], [0, 0, 1, 1], [], []>} : vector<128x128xbf16>, vector<128x128xbf16>, vector<128x128xf32> -> vector<128x128xf32>
    %89 = arith.addf %82, %88 : vector<128x128xf32>
    %c2_88 = arith.constant 2 : index
    %c1_89 = arith.constant 1 : index
    %c0_90 = arith.constant 0 : index
    %90 = vector.load %arg10[%c2_88, %c1_89, %c0_90] : memref<10x18x128xf32, #tpu.memory_space<vmem>>, vector<8x16x128xf32>
    %91 = vector.shape_cast %90 : vector<8x16x128xf32> to vector<128x128xf32>
    %92 = arith.truncf %91 : vector<128x128xf32> to vector<128x128xbf16>
    %c2_91 = arith.constant 2 : index
    %c1_92 = arith.constant 1 : index
    %c0_93 = arith.constant 0 : index
    %c0_94 = arith.constant 0 : index
    %93 = vector.load %arg7[%c2_91, %c1_92, %c0_93, %c0_94] : memref<3x3x128x128xbf16, #tpu.memory_space<vmem>>, vector<1x1x128x128xbf16>
    %94 = vector.shape_cast %93 : vector<1x1x128x128xbf16> to vector<128x128xbf16>
    %cst_95 = arith.constant dense<0.000000e+00> : vector<128x128xf32>
    %95 = tpu.matmul %92, %94, %cst_95 {dimension_numbers = #tpu.dot_dimension_numbers<[1], [0], [0], [1], [0, 0, 1, 1], [], []>} : vector<128x128xbf16>, vector<128x128xbf16>, vector<128x128xf32> -> vector<128x128xf32>
    %96 = arith.addf %89, %95 : vector<128x128xf32>
    %c2_96 = arith.constant 2 : index
    %c2_97 = arith.constant 2 : index
    %c0_98 = arith.constant 0 : index
    %97 = vector.load %arg10[%c2_96, %c2_97, %c0_98] : memref<10x18x128xf32, #tpu.memory_space<vmem>>, vector<8x16x128xf32>
    %98 = vector.shape_cast %97 : vector<8x16x128xf32> to vector<128x128xf32>
    %99 = arith.truncf %98 : vector<128x128xf32> to vector<128x128xbf16>
    %c2_99 = arith.constant 2 : index
    %c2_100 = arith.constant 2 : index
    %c0_101 = arith.constant 0 : index
    %c0_102 = arith.constant 0 : index
    %100 = vector.load %arg7[%c2_99, %c2_100, %c0_101, %c0_102] : memref<3x3x128x128xbf16, #tpu.memory_space<vmem>>, vector<1x1x128x128xbf16>
    %101 = vector.shape_cast %100 : vector<1x1x128x128xbf16> to vector<128x128xbf16>
    %cst_103 = arith.constant dense<0.000000e+00> : vector<128x128xf32>
    %102 = tpu.matmul %99, %101, %cst_103 {dimension_numbers = #tpu.dot_dimension_numbers<[1], [0], [0], [1], [0, 0, 1, 1], [], []>} : vector<128x128xbf16>, vector<128x128xbf16>, vector<128x128xf32> -> vector<128x128xf32>
    %103 = arith.addf %96, %102 : vector<128x128xf32>
    %104 = vector.shape_cast %103 : vector<128x128xf32> to vector<1x8x16x128xf32>
    %c0_104 = arith.constant 0 : index
    %c0_105 = arith.constant 0 : index
    %c0_106 = arith.constant 0 : index
    %c0_107 = arith.constant 0 : index
    %105 = vector.load %arg8[%c0_104, %c0_105, %c0_106, %c0_107] : memref<1x8x16x128xf32, #tpu.memory_space<vmem>>, vector<1x8x16x128xf32>
    tpu.vector_store %arg8[%c0_104, %c0_105, %c0_106, %c0_107], %104 {strides = array<i32>} : memref<1x8x16x128xf32, #tpu.memory_space<vmem>>, vector<1x8x16x128xf32>,
    %cst_108 = arith.constant 1.000000e+00 : f32
    %106 = vector.broadcast %cst_108 : f32 to vector<1x128xf32>
    %cst_109 = arith.constant dense<0.000000e+00> : vector<1x128xf32>
    %107 = tpu.matmul %106, %103, %cst_109 {dimension_numbers = #tpu.dot_dimension_numbers<[1], [0], [0], [1], [0, 0, 1, 1], [], []>} : vector<1x128xf32>, vector<128x128xf32>, vector<1x128xf32> -> vector<1x128xf32>
    %108 = arith.mulf %103, %103 : vector<128x128xf32>
    %cst_110 = arith.constant dense<0.000000e+00> : vector<1x128xf32>
    %109 = tpu.matmul %106, %108, %cst_110 {dimension_numbers = #tpu.dot_dimension_numbers<[1], [0], [0], [1], [0, 0, 1, 1], [], []>} : vector<1x128xf32>, vector<128x128xf32>, vector<1x128xf32> -> vector<1x128xf32>
    %110 = tpu.concatenate %107, %109 in 0 : vector<1x128xf32>, vector<1x128xf32> -> vector<2x128xf32>
    %111 = vector.shape_cast %110 : vector<2x128xf32> to vector<1x1x2x128xf32>
    %c0_111 = arith.constant 0 : index
    %c0_112 = arith.constant 0 : index
    %c0_113 = arith.constant 0 : index
    %c0_114 = arith.constant 0 : index
    %112 = vector.load %arg9[%c0_111, %c0_112, %c0_113, %c0_114] : memref<1x1x2x128xf32, #tpu.memory_space<vmem>>, vector<1x1x2x128xf32>
    tpu.vector_store %arg9[%c0_111, %c0_112, %c0_113, %c0_114], %111 {strides = array<i32>} : memref<1x1x2x128xf32, #tpu.memory_space<vmem>>, vector<1x1x2x128xf32>,
    return
  }
  func.func @transform_0(%arg0: i32, %arg1: i32) -> (i32, i32) {
    %c0_i32 = arith.constant 0 : i32
    %c0_i32_0 = arith.constant 0 : i32
    %c0_i32_1 = arith.constant 0 : i32
    return %c0_i32, %c0_i32_0 : i32, i32
  }
  func.func @transform_1(%arg0: i32, %arg1: i32) -> (i32, i32) {
    %c0_i32 = arith.constant 0 : i32
    %c0_i32_0 = arith.constant 0 : i32
    %c0_i32_1 = arith.constant 0 : i32
    return %c0_i32, %c0_i32_0 : i32, i32
  }
  func.func @transform_2(%arg0: i32, %arg1: i32) -> (i32, i32, i32, i32) {
    %c0_i32 = arith.constant 0 : i32
    %c0_i32_0 = arith.constant 0 : i32
    %c0_i32_1 = arith.constant 0 : i32
    return %arg0, %arg1, %c0_i32, %c0_i32_0 : i32, i32, i32, i32
  }
  func.func @transform_3(%arg0: i32, %arg1: i32) -> (i32, i32, i32, i32) {
    %c8_i32 = arith.constant 8 : i32
    %0 = arith.muli %arg1, %c8_i32 : i32
    %c1_i32 = arith.constant 1 : i32
    %1 = arith.subi %0, %c1_i32 : i32
    %c0_i32 = arith.constant 0 : i32
    %2 = arith.maxsi %1, %c0_i32 : i32
    %c0_i32_0 = arith.constant 0 : i32
    %c0_i32_1 = arith.constant 0 : i32
    %c0_i32_2 = arith.constant 0 : i32
    return %arg0, %2, %c0_i32_0, %c0_i32_1 : i32, i32, i32, i32
  }
  func.func @transform_4(%arg0: i32, %arg1: i32) -> (i32, i32, i32, i32) {
    %c1_i32 = arith.constant 1 : i32
    %0 = arith.addi %arg1, %c1_i32 : i32
    %c8_i32 = arith.constant 8 : i32
    %1 = arith.muli %0, %c8_i32 : i32
    %c15_i32 = arith.constant 15 : i32
    %2 = arith.minsi %1, %c15_i32 : i32
    %c0_i32 = arith.constant 0 : i32
    %c0_i32_0 = arith.constant 0 : i32
    %c0_i32_1 = arith.constant 0 : i32
    return %arg0, %2, %c0_i32, %c0_i32_0 : i32, i32, i32, i32
  }
  func.func @transform_5(%arg0: i32, %arg1: i32) -> (i32, i32, i32, i32) {
    %c0_i32 = arith.constant 0 : i32
    %c0_i32_0 = arith.constant 0 : i32
    %c0_i32_1 = arith.constant 0 : i32
    %c0_i32_2 = arith.constant 0 : i32
    %c0_i32_3 = arith.constant 0 : i32
    return %c0_i32, %c0_i32_0, %c0_i32_1, %c0_i32_2 : i32, i32, i32, i32
  }
  func.func @transform_6(%arg0: i32, %arg1: i32) -> (i32, i32, i32, i32) {
    %c0_i32 = arith.constant 0 : i32
    %c0_i32_0 = arith.constant 0 : i32
    %c0_i32_1 = arith.constant 0 : i32
    return %arg0, %arg1, %c0_i32, %c0_i32_0 : i32, i32, i32, i32
  }
  func.func @transform_7(%arg0: i32, %arg1: i32) -> (i32, i32, i32, i32) {
    %c0_i32 = arith.constant 0 : i32
    %c0_i32_0 = arith.constant 0 : i32
    %c0_i32_1 = arith.constant 0 : i32
    return %arg0, %arg1, %c0_i32, %c0_i32_0 : i32, i32, i32, i32
  }
}

module attributes {stable_mosaic.version = 11 : i64} {
  func.func @_bn_relu_kernel(%arg0: i32, %arg1: i32, %arg2: memref<1x128xf32, #tpu.memory_space<vmem>>, %arg3: memref<1x128xf32, #tpu.memory_space<vmem>>, %arg4: memref<1x8x16x128xf32, #tpu.memory_space<vmem>>, %arg5: memref<1x8x16x128xf32, #tpu.memory_space<vmem>>) attributes {dimension_semantics = [#tpu.dimension_semantics<parallel>, #tpu.dimension_semantics<parallel>], iteration_bounds = array<i64: 2, 2>, scalar_prefetch = 0 : i64, scratch_operands = 0 : i64, tpu.core_type = #tpu.core_type<tc>, window_params = [{pipeline_mode = #tpu.pipeline_mode<synchronous>, transform_indices = @transform_0, window_bounds = array<i64: 1, 128>}, {pipeline_mode = #tpu.pipeline_mode<synchronous>, transform_indices = @transform_1, window_bounds = array<i64: 1, 128>}, {transform_indices = @transform_2, window_bounds = array<i64: 1, 8, 16, 128>}, {transform_indices = @transform_3, window_bounds = array<i64: 1, 8, 16, 128>}]} {
    %c0 = arith.constant 0 : index
    %c0_0 = arith.constant 0 : index
    %0 = vector.load %arg2[%c0, %c0_0] : memref<1x128xf32, #tpu.memory_space<vmem>>, vector<1x128xf32>
    %1 = vector.shape_cast %0 : vector<1x128xf32> to vector<1x1x1x128xf32>
    %c0_1 = arith.constant 0 : index
    %c0_2 = arith.constant 0 : index
    %2 = vector.load %arg3[%c0_1, %c0_2] : memref<1x128xf32, #tpu.memory_space<vmem>>, vector<1x128xf32>
    %3 = vector.shape_cast %2 : vector<1x128xf32> to vector<1x1x1x128xf32>
    %c0_3 = arith.constant 0 : index
    %c0_4 = arith.constant 0 : index
    %c0_5 = arith.constant 0 : index
    %c0_6 = arith.constant 0 : index
    %4 = vector.load %arg4[%c0_3, %c0_4, %c0_5, %c0_6] : memref<1x8x16x128xf32, #tpu.memory_space<vmem>>, vector<1x8x16x128xf32>
    %5 = vector.broadcast %1 : vector<1x1x1x128xf32> to vector<1x8x16x128xf32>
    %6 = arith.mulf %4, %5 : vector<1x8x16x128xf32>
    %7 = vector.broadcast %3 : vector<1x1x1x128xf32> to vector<1x8x16x128xf32>
    %8 = arith.addf %6, %7 : vector<1x8x16x128xf32>
    %cst = arith.constant 0.000000e+00 : f32
    %9 = vector.broadcast %cst : f32 to vector<1x8x16x128xf32>
    %10 = arith.maximumf %8, %9 : vector<1x8x16x128xf32>
    %c0_7 = arith.constant 0 : index
    %c0_8 = arith.constant 0 : index
    %c0_9 = arith.constant 0 : index
    %c0_10 = arith.constant 0 : index
    %11 = vector.load %arg5[%c0_7, %c0_8, %c0_9, %c0_10] : memref<1x8x16x128xf32, #tpu.memory_space<vmem>>, vector<1x8x16x128xf32>
    tpu.vector_store %arg5[%c0_7, %c0_8, %c0_9, %c0_10], %10 {strides = array<i32>} : memref<1x8x16x128xf32, #tpu.memory_space<vmem>>, vector<1x8x16x128xf32>,
    return
  }
  func.func @transform_0(%arg0: i32, %arg1: i32) -> (i32, i32) {
    %c0_i32 = arith.constant 0 : i32
    %c0_i32_0 = arith.constant 0 : i32
    %c0_i32_1 = arith.constant 0 : i32
    return %c0_i32, %c0_i32_0 : i32, i32
  }
  func.func @transform_1(%arg0: i32, %arg1: i32) -> (i32, i32) {
    %c0_i32 = arith.constant 0 : i32
    %c0_i32_0 = arith.constant 0 : i32
    %c0_i32_1 = arith.constant 0 : i32
    return %c0_i32, %c0_i32_0 : i32, i32
  }
  func.func @transform_2(%arg0: i32, %arg1: i32) -> (i32, i32, i32, i32) {
    %c0_i32 = arith.constant 0 : i32
    %c0_i32_0 = arith.constant 0 : i32
    %c0_i32_1 = arith.constant 0 : i32
    return %arg0, %arg1, %c0_i32, %c0_i32_0 : i32, i32, i32, i32
  }
  func.func @transform_3(%arg0: i32, %arg1: i32) -> (i32, i32, i32, i32) {
    %c0_i32 = arith.constant 0 : i32
    %c0_i32_0 = arith.constant 0 : i32
    %c0_i32_1 = arith.constant 0 : i32
    return %arg0, %arg1, %c0_i32, %c0_i32_0 : i32, i32, i32, i32
  }
}

</mosaic_0001>

<llo_original>
// kernel: double_conv.5
$region0: #{double_conv.5}
  #allocation0 [shape = 'u32[]', space=smem, size = 0x4, offset = 0x4, fixed_abs, tag = 'smem constant byte address 0x4 - core index']
  #allocation1 [shape = 'u32[72,128]{1,0:T(1,128)}', space=vmem, size = 0x9000, scoped, tag = 'internal scratch']
  %s0 = inlined_call_operand.vmem [shape: f32[1,128], index: 0, kind: input, shape index: {}]
  %s1 = inlined_call_operand.vmem [shape: f32[1,128], index: 1, kind: input, shape index: {}]
  %s2 = inlined_call_operand.vmem [shape: f32[2,16,16,128], index: 2, kind: input, shape index: {}]
  %s3 = inlined_call_operand.vmem [shape: f32[2,16,16,128], index: 3, kind: output, shape index: {}]
  %s4 = sld [smem:[#allocation0]]
  $region45: #{double_conv.5} parent=0
    _
  %s6 = ssub.s32 1, %s4
  %s7 = scalar_select 0, %s6, %s4
  loop: start=0, step=1, limit=6
  $region2: #{double_conv.5} parent=0 // loop_pre_header
    _
  $region3: #{double_conv.5} parent=0 // loop_header
    %s9 = sphi 0, %s13
    %p10 = scmp.ge.s32.totalorder %s9, 6
    %s16 = sphi 0, %s28
    %s17 = sphi 0, %s24
    %s18 = sphi 0, %s16
    %s19 = sphi 0, %s17
    %s20 = sphi 0, %s18
    %s21 = sphi 0, %s19
    %s29 = sphi 0, %s29
    %s31 = sphi 0, %s29
    %s32 = sphi 0, %s31
    %s46 = sphi 0, %s32
    %s50 = sphi 0, %s50
    %s52 = sphi 0, %s50
    %s53 = sphi 0, %s52
    %s67 = sphi 0, %s53
    %s75 = sphi 0, %s77
    %s78 = sphi 0, %s75
    %s79 = sphi 0, %s78
    %s95 = sphi 0, %s79
    %s103 = sphi 0, %s105
    %s106 = sphi 0, %s103
    %s107 = sphi 0, %s106
    %s123 = sphi 0, %s107
  $region4: #{double_conv.5} parent=0 // loop_header_branch
    %12 = sbr.rel (%p10) target = $region8
  $region5: #{double_conv.5} parent=0 // loop_body
    %s14 = ssub.s32 %s9, 1
    %s15 = ssub.s32 %s9, 2
    %s22 = sadd.s32 1, %s17
    %p23 = scmp.ge.s32.totalorder %s22, 2
    %s24 = scalar_select %p23, 0, %s22
    %s25 = sadd.s32 1, %s16
    %s26 = scalar_select %p23, %s25, %s16
    %p27 = scmp.ge.s32.totalorder %s26, 2
    %s28 = scalar_select %p27, 0, %s26
    %s30 = sadd.s32 %s29, 1
    %p33 = scmp.eq.s32.totalorder %s9, 3
    %p34 = scmp.ne.s32.totalorder %s29, %s31
    %p35 = scmp.eq.s32.totalorder %s9, 0
    %p36 = por %p34, %p35
    %p37 = scmp.ne.s32.totalorder %s29, %s31
    %p38 = scmp.eq.s32.totalorder %s14, 3
    %p39 = por %p37, %p38
    %p40 = scmp.ne.s32.totalorder %s31, %s32
    %p41 = scmp.eq.s32.totalorder %s14, 0
    %p42 = por %p40, %p41
    %p43 = scmp.ne.s32.totalorder %s31, %s32
    %p44 = scmp.eq.s32.totalorder %s15, 3
    %p45 = por %p43, %p44
    %p47 = scmp.ne.s32.totalorder %s32, %s46
    %p48 = scmp.eq.s32.totalorder %s15, 0
    %p49 = por %p47, %p48
    %s51 = sadd.s32 %s50, 1
    %p54 = scmp.eq.s32.totalorder %s9, 3
    %p55 = scmp.ne.s32.totalorder %s50, %s52
    %p56 = scmp.eq.s32.totalorder %s9, 0
    %p57 = por %p55, %p56
    %p58 = scmp.ne.s32.totalorder %s50, %s52
    %p59 = scmp.eq.s32.totalorder %s14, 3
    %p60 = por %p58, %p59
    %p61 = scmp.ne.s32.totalorder %s52, %s53
    %p62 = scmp.eq.s32.totalorder %s14, 0
    %p63 = por %p61, %p62
    %p64 = scmp.ne.s32.totalorder %s52, %s53
    %p65 = scmp.eq.s32.totalorder %s15, 3
    %p66 = por %p64, %p65
    %p68 = scmp.ne.s32.totalorder %s53, %s67
    %p69 = scmp.eq.s32.totalorder %s15, 0
    %p70 = por %p68, %p69
    %s71 = ssub.s32 %s16, %s28
    %s72 = ssub.s32 %s17, %s24
    %s73 = sor.u32 %s71, %s72
    %p74 = scmp.eq.s32.totalorder %s73, 0
    %s76 = sadd.s32 %s75, 1
    %s77 = scalar_select %p74, %s75, %s76
    %p80 = pneg %p74
    %p81 = scmp.eq.s32.totalorder %s9, 3
    %p82 = por %p80, %p81
    %p83 = scmp.ne.s32.totalorder %s75, %s78
    %p84 = scmp.eq.s32.totalorder %s9, 0
    %p85 = por %p83, %p84
    %p86 = scmp.ne.s32.totalorder %s75, %s78
    %p87 = scmp.eq.s32.totalorder %s14, 3
    %p88 = por %p86, %p87
    %p89 = scmp.ne.s32.totalorder %s78, %s79
    %p90 = scmp.eq.s32.totalorder %s14, 0
    %p91 = por %p89, %p90
    %p92 = scmp.ne.s32.totalorder %s78, %s79
    %p93 = scmp.eq.s32.totalorder %s15, 3
    %p94 = por %p92, %p93
    %p96 = scmp.ne.s32.totalorder %s79, %s95
    %p97 = scmp.eq.s32.totalorder %s15, 0
    %p98 = por %p96, %p97
    %s99 = ssub.s32 %s16, %s28
    %s100 = ssub.s32 %s17, %s24
    %s101 = sor.u32 %s99, %s100
    %p102 = scmp.eq.s32.totalorder %s101, 0
    %s104 = sadd.s32 %s103, 1
    %s105 = scalar_select %p102, %s103, %s104
    %p108 = pneg %p102
    %p109 = scmp.eq.s32.totalorder %s9, 3
    %p110 = por %p108, %p109
    %p111 = scmp.ne.s32.totalorder %s103, %s106
    %p112 = scmp.eq.s32.totalorder %s9, 0
    %p113 = por %p111, %p112
    %p114 = scmp.ne.s32.totalorder %s103, %s106
    %p115 = scmp.eq.s32.totalorder %s14, 3
    %p116 = por %p114, %p115
    %p117 = scmp.ne.s32.totalorder %s106, %s107
    %p118 = scmp.eq.s32.totalorder %s14, 0
    %p119 = por %p117, %p118
    %p120 = scmp.ne.s32.totalorder %s106, %s107
    %p121 = scmp.eq.s32.totalorder %s15, 3
    %p122 = por %p120, %p121
    %p124 = scmp.ne.s32.totalorder %s107, %s123
    %p125 = scmp.eq.s32.totalorder %s15, 0
    %p126 = por %p124, %p125
    %p127 = scmp.le.s32.totalorder 1, %s9
    %p128 = scmp.lt.s32.totalorder %s9, 5
    %p129 = pnand %p127, %p128
    %p130 = pneg %p129
    // Predicated region
    $region9: #{double_conv.5} parent=5 // pred_check
      _
    $region10: #{double_conv.5} parent=5 // pred_check_branch
      %132 = sbr.rel (%p129) target = $region12
    $region11: #{double_conv.5} parent=5 // pred_region
      %s133 = ssub.s32 %s9, 1
      // Predicated region
      $region13: #{double_conv.5} parent=11 // pred_check
        %p134 = pneg %p42
      $region14: #{double_conv.5} parent=11 // pred_check_branch
        %136 = sbr.rel (%p134) target = $region16
      $region15: #{double_conv.5} parent=11 // pred_region
        _
      $region16: #{double_conv.5} parent=11 // pred_fallthru
        _
      // Predicated region
      $region17: #{double_conv.5} parent=11 // pred_check
        %p137 = pneg %p63
      $region18: #{double_conv.5} parent=11 // pred_check_branch
        %139 = sbr.rel (%p137) target = $region20
      $region19: #{double_conv.5} parent=11 // pred_region
        _
      $region20: #{double_conv.5} parent=11 // pred_fallthru
        _
    $region12: #{double_conv.5} parent=5 // pred_fallthru
      _
    %p140 = scmp.lt.s32.totalorder %s9, 4
    // Predicated region
    $region21: #{double_conv.5} parent=5 // pred_check
      %p141 = pneg %p140
    $region22: #{double_conv.5} parent=5 // pred_check_branch
      %143 = sbr.rel (%p141) target = $region24
    $region23: #{double_conv.5} parent=5 // pred_region
      // Predicated region
      $region25: #{double_conv.5} parent=23 // pred_check
        %p144 = pneg %p85
      $region26: #{double_conv.5} parent=23 // pred_check_branch
        %146 = sbr.rel (%p144) target = $region28
      $region27: #{double_conv.5} parent=23 // pred_region
        %s147 = smul.u32 8, %s17
        %p148 = scmp.lt.s32.totalorder %s16, 1
        %s149 = scalar_select %p148, %s16, 1
        %p150 = scmp.lt.s32.totalorder %s147, 15
        %s151 = scalar_select %p150, %s147, 15
        %s152 = smul.addr %s151, 2
        %s153 = smul.addr %s149, 32
        %s154 = sadd.s32 %s152, %s153
        %s155 = smul.addr %s154, 8
        %s156 = scalar_lea.vmem %s2, %s155
        %s157 = smul.u32 8, %s17
      $region28: #{double_conv.5} parent=23 // pred_fallthru
        _
    $region24: #{double_conv.5} parent=5 // pred_fallthru
      _
    %p158 = scmp.le.s32.totalorder 1, %s9
    %p159 = scmp.lt.s32.totalorder %s9, 5
    %p160 = pnand %p158, %p159
    %p161 = pneg %p160
    // Predicated region
    $region29: #{double_conv.5} parent=5 // pred_check
      _
    $region30: #{double_conv.5} parent=5 // pred_check_branch
      %163 = sbr.rel (%p160) target = $region32
    $region31: #{double_conv.5} parent=5 // pred_region
      %s164 = ssub.s32 %s9, 1
      %p165 = pneg %p42
      %p166 = pneg %p39
      %p167 = pneg %p63
      %p168 = pneg %p60
      %s169 = smul.u32 8, %s19
      %p170 = scmp.lt.s32.totalorder %s18, 1
      %s171 = scalar_select %p170, %s18, 1
      %p172 = scmp.lt.s32.totalorder %s169, 15
      %s173 = scalar_select %p172, %s169, 15
      %s174 = smul.addr %s173, 2
      %s175 = smul.addr %s171, 32
      %s176 = sadd.s32 %s174, %s175
      %s177 = smul.addr %s176, 8
      %s178 = scalar_lea.vmem %s2, %s177
      %p179 = pneg %p91
      %p180 = pneg %p88
      %p181 = pneg %p119
      %p182 = pneg %p116
      %s183 = smul.u32 8, %s19
      %p184 = scmp.lt.s32.totalorder %s18, 1
      %s185 = scalar_select %p184, %s18, 1
      %p186 = scmp.lt.s32.totalorder %s183, 15
      %s187 = scalar_select %p186, %s183, 15
      %s188 = smul.addr %s187, 2
      %s189 = smul.addr %s185, 32
      %s190 = sadd.s32 %s188, %s189
      %s191 = smul.addr %s190, 8
      %s192 = scalar_lea.vmem %s3, %s191
      %s193 = smul.u32 8, %s19
      %p194 = scmp.lt.s32.totalorder %s18, 1
      %s195 = scalar_select %p194, %s18, 1
      %p196 = scmp.lt.s32.totalorder %s193, 15
      %s197 = scalar_select %p196, %s193, 15
      %s198 = smul.addr %s197, 2
      %s199 = smul.addr %s195, 32
      %s200 = sadd.s32 %s198, %s199
      %s201 = smul.addr %s200, 8
      %s202 = scalar_lea.vmem %s2, %s201
      %s203 = smul.u32 8, %s19
      %s204 = smul.u32 8, %s19
      %p205 = scmp.lt.s32.totalorder %s18, 1
      %s206 = scalar_select %p205, %s18, 1
      %p207 = scmp.lt.s32.totalorder %s204, 15
      %s208 = scalar_select %p207, %s204, 15
      %s209 = smul.addr %s208, 2
      %s210 = smul.addr %s206, 32
      %s211 = sadd.s32 %s209, %s210
      %s212 = smul.addr %s211, 8
      %s213 = scalar_lea.vmem %s3, %s212
      %s214 = smul.u32 8, %s19
      %v215 = vld [vmem:[%s0] sm:$0x1]
      %v216 = vld [vmem:[%s1] sm:$0x1]
      %v217 = vld [vmem:[%s202] sm:$0xff]
      %v218 = vld [vmem:[%s202 + $0x8] sm:$0xff]
      %v219 = vld [vmem:[%s202 + $0x10] sm:$0xff]
      %v220 = vld [vmem:[%s202 + $0x18] sm:$0xff]
      %v221 = vld [vmem:[%s202 + $0x20] sm:$0xff]
      %v222 = vld [vmem:[%s202 + $0x28] sm:$0xff]
      %v223 = vld [vmem:[%s202 + $0x30] sm:$0xff]
      %v224 = vld [vmem:[%s202 + $0x38] sm:$0xff]
      %v225 = vld [vmem:[%s202 + $0x40] sm:$0xff]
      %v226 = vld [vmem:[%s202 + $0x48] sm:$0xff]
      %v227 = vld [vmem:[%s202 + $0x50] sm:$0xff]
      %v228 = vld [vmem:[%s202 + $0x58] sm:$0xff]
      %v229 = vld [vmem:[%s202 + $0x60] sm:$0xff]
      %v230 = vld [vmem:[%s202 + $0x68] sm:$0xff]
      %v231 = vld [vmem:[%s202 + $0x70] sm:$0xff]
      %v232 = vld [vmem:[%s202 + $0x78] sm:$0xff]
      %v234 = vperm.slane %v215, 0
      %v236 = vmul.f32 %v217, %v234
      %v237 = vmul.f32 %v218, %v234
      %v238 = vmul.f32 %v219, %v234
      %v239 = vmul.f32 %v220, %v234
      %v240 = vmul.f32 %v221, %v234
      %v241 = vmul.f32 %v222, %v234
      %v242 = vmul.f32 %v223, %v234
      %v243 = vmul.f32 %v224, %v234
      %v244 = vmul.f32 %v225, %v234
      %v245 = vmul.f32 %v226, %v234
      %v246 = vmul.f32 %v227, %v234
      %v247 = vmul.f32 %v228, %v234
      %v248 = vmul.f32 %v229, %v234
      %v249 = vmul.f32 %v230, %v234
      %v250 = vmul.f32 %v231, %v234
      %v251 = vmul.f32 %v232, %v234
      %v253 = vperm.slane %v216, 0
      %v255 = vadd.f32 %v236, %v253
      %v256 = vadd.f32 %v237, %v253
      %v257 = vadd.f32 %v238, %v253
      %v258 = vadd.f32 %v239, %v253
      %v259 = vadd.f32 %v240, %v253
      %v260 = vadd.f32 %v241, %v253
      %v261 = vadd.f32 %v242, %v253
      %v262 = vadd.f32 %v243, %v253
      %v263 = vadd.f32 %v244, %v253
      %v264 = vadd.f32 %v245, %v253
      %v265 = vadd.f32 %v246, %v253
      %v266 = vadd.f32 %v247, %v253
      %v267 = vadd.f32 %v248, %v253
      %v268 = vadd.f32 %v249, %v253
      %v269 = vadd.f32 %v250, %v253
      %v270 = vadd.f32 %v251, %v253
      %v271 = vmax.f32 %v255, 0.0
      %v272 = vmax.f32 %v256, 0.0
      %v273 = vmax.f32 %v257, 0.0
      %v274 = vmax.f32 %v258, 0.0
      %v275 = vmax.f32 %v259, 0.0
      %v276 = vmax.f32 %v260, 0.0
      %v277 = vmax.f32 %v261, 0.0
      %v278 = vmax.f32 %v262, 0.0
      %v279 = vmax.f32 %v263, 0.0
      %v280 = vmax.f32 %v264, 0.0
      %v281 = vmax.f32 %v265, 0.0
      %v282 = vmax.f32 %v266, 0.0
      %v283 = vmax.f32 %v267, 0.0
      %v284 = vmax.f32 %v268, 0.0
      %v285 = vmax.f32 %v269, 0.0
      %v286 = vmax.f32 %v270, 0.0
      %287 = vst [vmem:[%s213] sm:$0xff] %v271
      %288 = vst [vmem:[%s213 + $0x8] sm:$0xff] %v272
      %289 = vst [vmem:[%s213 + $0x10] sm:$0xff] %v273
      %290 = vst [vmem:[%s213 + $0x18] sm:$0xff] %v274
      %291 = vst [vmem:[%s213 + $0x20] sm:$0xff] %v275
      %292 = vst [vmem:[%s213 + $0x28] sm:$0xff] %v276
      %293 = vst [vmem:[%s213 + $0x30] sm:$0xff] %v277
      %294 = vst [vmem:[%s213 + $0x38] sm:$0xff] %v278
      %295 = vst [vmem:[%s213 + $0x40] sm:$0xff] %v279
      %296 = vst [vmem:[%s213 + $0x48] sm:$0xff] %v280
      %297 = vst [vmem:[%s213 + $0x50] sm:$0xff] %v281
      %298 = vst [vmem:[%s213 + $0x58] sm:$0xff] %v282
      %299 = vst [vmem:[%s213 + $0x60] sm:$0xff] %v283
      %300 = vst [vmem:[%s213 + $0x68] sm:$0xff] %v284
      %301 = vst [vmem:[%s213 + $0x70] sm:$0xff] %v285
      %302 = vst [vmem:[%s213 + $0x78] sm:$0xff] %v286
      %s303 = smul.u32 8, %s19
      %p304 = scmp.lt.s32.totalorder %s18, 1
      %s305 = scalar_select %p304, %s18, 1
      %p306 = scmp.lt.s32.totalorder %s303, 15
      %s307 = scalar_select %p306, %s303, 15
      %s308 = smul.addr %s307, 2
      %s309 = smul.addr %s305, 32
      %s310 = sadd.s32 %s308, %s309
      %s311 = smul.addr %s310, 8
      %s312 = scalar_lea.vmem %s3, %s311
      // Predicated region
      $region33: #{double_conv.5} parent=31 // pred_check
        %p313 = pneg %p116
      $region34: #{double_conv.5} parent=31 // pred_check_branch
        %315 = sbr.rel (%p313) target = $region36
      $region35: #{double_conv.5} parent=31 // pred_region
        %s316 = smul.u32 8, %s19
      $region36: #{double_conv.5} parent=31 // pred_fallthru
        _
    $region32: #{double_conv.5} parent=5 // pred_fallthru
      _
    %p317 = scmp.le.s32.totalorder 2, %s9
    // Predicated region
    $region37: #{double_conv.5} parent=5 // pred_check
      %p318 = pneg %p317
    $region38: #{double_conv.5} parent=5 // pred_check_branch
      %320 = sbr.rel (%p318) target = $region40
    $region39: #{double_conv.5} parent=5 // pred_region
      %s321 = ssub.s32 %s9, 2
      // Predicated region
      $region41: #{double_conv.5} parent=39 // pred_check
        %p322 = pneg %p122
      $region42: #{double_conv.5} parent=39 // pred_check_branch
        %324 = sbr.rel (%p322) target = $region44
      $region43: #{double_conv.5} parent=39 // pred_region
        %s325 = smul.u32 8, %s21
        %p326 = scmp.lt.s32.totalorder %s20, 1
        %s327 = scalar_select %p326, %s20, 1
        %p328 = scmp.lt.s32.totalorder %s325, 15
        %s329 = scalar_select %p328, %s325, 15
        %s330 = smul.addr %s329, 2
        %s331 = smul.addr %s327, 32
        %s332 = sadd.s32 %s330, %s331
        %s333 = smul.addr %s332, 8
        %s334 = scalar_lea.vmem %s3, %s333
      $region44: #{double_conv.5} parent=39 // pred_fallthru
        _
    $region40: #{double_conv.5} parent=5 // pred_fallthru
      _
  $region6: #{double_conv.5} parent=0 // loop_footer
    %s13 = sadd.s32 1, %s9
  $region7: #{double_conv.5} parent=0 // loop_footer_branch
    %8 = sbr.rel target = $region3
  $region8: #{double_conv.5} parent=0 // loop_exit
    _

// kernel: double_conv.3
$region0: #{double_conv.3}
  #allocation0 [shape = 'u32[]', space=smem, size = 0x4, offset = 0x4, fixed_abs, tag = 'smem constant byte address 0x4 - core index']
  #allocation1 [shape = 'u32[72,128]{1,0:T(1,128)}', space=vmem, size = 0x9000, scoped, tag = 'internal scratch']
  #allocation2 [shape = 'f32[10,18,4]{2,1,0:T(8,128)}', space=vmem, size = 0x1e000, scoped, tag = 'scratch operand']
  %s0 = inlined_call_operand.vmem [shape: f32[1,4], index: 0, kind: input, shape index: {}]
  %s1 = inlined_call_operand.vmem [shape: f32[1,4], index: 1, kind: input, shape index: {}]
  %s2 = inlined_call_operand.vmem [shape: f32[2,16,16,4], index: 2, kind: input, shape index: {}, may-alias: {2,3,4}]
  %s3 = inlined_call_operand.vmem [shape: f32[2,16,16,4], index: 3, kind: input, shape index: {}, may-alias: {2,3,4}]
  %s4 = inlined_call_operand.vmem [shape: f32[2,16,16,4], index: 4, kind: input, shape index: {}, may-alias: {2,3,4}]
  %s5 = inlined_call_operand.vmem [shape: bf16[3,3,4,128], index: 5, kind: input, shape index: {}]
  %s6 = inlined_call_operand.vmem [shape: f32[2,16,16,128], index: 6, kind: output, shape index: {0}]
  %s7 = inlined_call_operand.vmem [shape: f32[2,2,2,128], index: 7, kind: output, shape index: {1}]
  %8 = xla_tuple %s6, %s7
  %s9 = sld [smem:[#allocation0]]
  $region65: #{double_conv.3} parent=0
    _
  %s11 = ssub.s32 1, %s9
  %s12 = scalar_select 0, %s11, %s9
  loop: start=0, step=1, limit=6
  $region2: #{double_conv.3} parent=0 // loop_pre_header
    _
  $region3: #{double_conv.3} parent=0 // loop_header
    %s14 = sphi 0, %s18
    %p15 = scmp.ge.s32.totalorder %s14, 6
    %s21 = sphi 0, %s33
    %s22 = sphi 0, %s29
    %s23 = sphi 0, %s21
    %s24 = sphi 0, %s22
    %s25 = sphi 0, %s23
    %s26 = sphi 0, %s24
    %s34 = sphi 0, %s34
    %s36 = sphi 0, %s34
    %s37 = sphi 0, %s36
    %s51 = sphi 0, %s37
    %s55 = sphi 0, %s55
    %s57 = sphi 0, %s55
    %s58 = sphi 0, %s57
    %s72 = sphi 0, %s58
    %s80 = sphi 0, %s82
    %s83 = sphi 0, %s80
    %s84 = sphi 0, %s83
    %s100 = sphi 0, %s84
    %s116 = sphi 0, %s118
    %s119 = sphi 0, %s116
    %s120 = sphi 0, %s119
    %s136 = sphi 0, %s120
    %s152 = sphi 0, %s154
    %s155 = sphi 0, %s152
    %s156 = sphi 0, %s155
    %s172 = sphi 0, %s156
    %s176 = sphi 0, %s176
    %s178 = sphi 0, %s176
    %s179 = sphi 0, %s178
    %s193 = sphi 0, %s179
    %s201 = sphi 0, %s203
    %s204 = sphi 0, %s201
    %s205 = sphi 0, %s204
    %s221 = sphi 0, %s205
    %s229 = sphi 0, %s231
    %s232 = sphi 0, %s229
    %s233 = sphi 0, %s232
    %s249 = sphi 0, %s233
  $region4: #{double_conv.3} parent=0 // loop_header_branch
    %17 = sbr.rel (%p15) target = $region8
  $region5: #{double_conv.3} parent=0 // loop_body
    %s19 = ssub.s32 %s14, 1
    %s20 = ssub.s32 %s14, 2
    %s27 = sadd.s32 1, %s22
    %p28 = scmp.ge.s32.totalorder %s27, 2
    %s29 = scalar_select %p28, 0, %s27
    %s30 = sadd.s32 1, %s21
    %s31 = scalar_select %p28, %s30, %s21
    %p32 = scmp.ge.s32.totalorder %s31, 2
    %s33 = scalar_select %p32, 0, %s31
    %s35 = sadd.s32 %s34, 1
    %p38 = scmp.eq.s32.totalorder %s14, 3
    %p39 = scmp.ne.s32.totalorder %s34, %s36
    %p40 = scmp.eq.s32.totalorder %s14, 0
    %p41 = por %p39, %p40
    %p42 = scmp.ne.s32.totalorder %s34, %s36
    %p43 = scmp.eq.s32.totalorder %s19, 3
    %p44 = por %p42, %p43
    %p45 = scmp.ne.s32.totalorder %s36, %s37
    %p46 = scmp.eq.s32.totalorder %s19, 0
    %p47 = por %p45, %p46
    %p48 = scmp.ne.s32.totalorder %s36, %s37
    %p49 = scmp.eq.s32.totalorder %s20, 3
    %p50 = por %p48, %p49
    %p52 = scmp.ne.s32.totalorder %s37, %s51
    %p53 = scmp.eq.s32.totalorder %s20, 0
    %p54 = por %p52, %p53
    %s56 = sadd.s32 %s55, 1
    %p59 = scmp.eq.s32.totalorder %s14, 3
    %p60 = scmp.ne.s32.totalorder %s55, %s57
    %p61 = scmp.eq.s32.totalorder %s14, 0
    %p62 = por %p60, %p61
    %p63 = scmp.ne.s32.totalorder %s55, %s57
    %p64 = scmp.eq.s32.totalorder %s19, 3
    %p65 = por %p63, %p64
    %p66 = scmp.ne.s32.totalorder %s57, %s58
    %p67 = scmp.eq.s32.totalorder %s19, 0
    %p68 = por %p66, %p67
    %p69 = scmp.ne.s32.totalorder %s57, %s58
    %p70 = scmp.eq.s32.totalorder %s20, 3
    %p71 = por %p69, %p70
    %p73 = scmp.ne.s32.totalorder %s58, %s72
    %p74 = scmp.eq.s32.totalorder %s20, 0
    %p75 = por %p73, %p74
    %s76 = ssub.s32 %s21, %s33
    %s77 = ssub.s32 %s22, %s29
    %s78 = sor.u32 %s76, %s77
    %p79 = scmp.eq.s32.totalorder %s78, 0
    %s81 = sadd.s32 %s80, 1
    %s82 = scalar_select %p79, %s80, %s81
    %p85 = pneg %p79
    %p86 = scmp.eq.s32.totalorder %s14, 3
    %p87 = por %p85, %p86
    %p88 = scmp.ne.s32.totalorder %s80, %s83
    %p89 = scmp.eq.s32.totalorder %s14, 0
    %p90 = por %p88, %p89
    %p91 = scmp.ne.s32.totalorder %s80, %s83
    %p92 = scmp.eq.s32.totalorder %s19, 3
    %p93 = por %p91, %p92
    %p94 = scmp.ne.s32.totalorder %s83, %s84
    %p95 = scmp.eq.s32.totalorder %s19, 0
    %p96 = por %p94, %p95
    %p97 = scmp.ne.s32.totalorder %s83, %s84
    %p98 = scmp.eq.s32.totalorder %s20, 3
    %p99 = por %p97, %p98
    %p101 = scmp.ne.s32.totalorder %s84, %s100
    %p102 = scmp.eq.s32.totalorder %s20, 0
    %p103 = por %p101, %p102
    %s104 = smul.u32 %s22, 8
    %s105 = ssub.s32 %s104, 1
    %p106 = scmp.gt.s32.totalorder %s105, 0
    %s107 = scalar_select %p106, %s105, 0
    %s108 = smul.u32 %s29, 8
    %s109 = ssub.s32 %s108, 1
    %p110 = scmp.gt.s32.totalorder %s109, 0
    %s111 = scalar_select %p110, %s109, 0
    %s112 = ssub.s32 %s21, %s33
    %s113 = ssub.s32 %s107, %s111
    %s114 = sor.u32 %s112, %s113
    %p115 = scmp.eq.s32.totalorder %s114, 0
    %s117 = sadd.s32 %s116, 1
    %s118 = scalar_select %p115, %s116, %s117
    %p121 = pneg %p115
    %p122 = scmp.eq.s32.totalorder %s14, 3
    %p123 = por %p121, %p122
    %p124 = scmp.ne.s32.totalorder %s116, %s119
    %p125 = scmp.eq.s32.totalorder %s14, 0
    %p126 = por %p124, %p125
    %p127 = scmp.ne.s32.totalorder %s116, %s119
    %p128 = scmp.eq.s32.totalorder %s19, 3
    %p129 = por %p127, %p128
    %p130 = scmp.ne.s32.totalorder %s119, %s120
    %p131 = scmp.eq.s32.totalorder %s19, 0
    %p132 = por %p130, %p131
    %p133 = scmp.ne.s32.totalorder %s119, %s120
    %p134 = scmp.eq.s32.totalorder %s20, 3
    %p135 = por %p133, %p134
    %p137 = scmp.ne.s32.totalorder %s120, %s136
    %p138 = scmp.eq.s32.totalorder %s20, 0
    %p139 = por %p137, %p138
    %s140 = sadd.s32 %s22, 1
    %s141 = smul.u32 %s140, 8
    %p142 = scmp.lt.s32.totalorder %s141, 15
    %s143 = scalar_select %p142, %s141, 15
    %s144 = sadd.s32 %s29, 1
    %s145 = smul.u32 %s144, 8
    %p146 = scmp.lt.s32.totalorder %s145, 15
    %s147 = scalar_select %p146, %s145, 15
    %s148 = ssub.s32 %s21, %s33
    %s149 = ssub.s32 %s143, %s147
    %s150 = sor.u32 %s148, %s149
    %p151 = scmp.eq.s32.totalorder %s150, 0
    %s153 = sadd.s32 %s152, 1
    %s154 = scalar_select %p151, %s152, %s153
    %p157 = pneg %p151
    %p158 = scmp.eq.s32.totalorder %s14, 3
    %p159 = por %p157, %p158
    %p160 = scmp.ne.s32.totalorder %s152, %s155
    %p161 = scmp.eq.s32.totalorder %s14, 0
    %p162 = por %p160, %p161
    %p163 = scmp.ne.s32.totalorder %s152, %s155
    %p164 = scmp.eq.s32.totalorder %s19, 3
    %p165 = por %p163, %p164
    %p166 = scmp.ne.s32.totalorder %s155, %s156
    %p167 = scmp.eq.s32.totalorder %s19, 0
    %p168 = por %p166, %p167
    %p169 = scmp.ne.s32.totalorder %s155, %s156
    %p170 = scmp.eq.s32.totalorder %s20, 3
    %p171 = por %p169, %p170
    %p173 = scmp.ne.s32.totalorder %s156, %s172
    %p174 = scmp.eq.s32.totalorder %s20, 0
    %p175 = por %p173, %p174
    %s177 = sadd.s32 %s176, 1
    %p180 = scmp.eq.s32.totalorder %s14, 3
    %p181 = scmp.ne.s32.totalorder %s176, %s178
    %p182 = scmp.eq.s32.totalorder %s14, 0
    %p183 = por %p181, %p182
    %p184 = scmp.ne.s32.totalorder %s176, %s178
    %p185 = scmp.eq.s32.totalorder %s19, 3
    %p186 = por %p184, %p185
    %p187 = scmp.ne.s32.totalorder %s178, %s179
    %p188 = scmp.eq.s32.totalorder %s19, 0
    %p189 = por %p187, %p188
    %p190 = scmp.ne.s32.totalorder %s178, %s179
    %p191 = scmp.eq.s32.totalorder %s20, 3
    %p192 = por %p190, %p191
    %p194 = scmp.ne.s32.totalorder %s179, %s193
    %p195 = scmp.eq.s32.totalorder %s20, 0
    %p196 = por %p194, %p195
    %s197 = ssub.s32 %s21, %s33
    %s198 = ssub.s32 %s22, %s29
    %s199 = sor.u32 %s197, %s198
    %p200 = scmp.eq.s32.totalorder %s199, 0
    %s202 = sadd.s32 %s201, 1
    %s203 = scalar_select %p200, %s201, %s202
    %p206 = pneg %p200
    %p207 = scmp.eq.s32.totalorder %s14, 3
    %p208 = por %p206, %p207
    %p209 = scmp.ne.s32.totalorder %s201, %s204
    %p210 = scmp.eq.s32.totalorder %s14, 0
    %p211 = por %p209, %p210
    %p212 = scmp.ne.s32.totalorder %s201, %s204
    %p213 = scmp.eq.s32.totalorder %s19, 3
    %p214 = por %p212, %p213
    %p215 = scmp.ne.s32.totalorder %s204, %s205
    %p216 = scmp.eq.s32.totalorder %s19, 0
    %p217 = por %p215, %p216
    %p218 = scmp.ne.s32.totalorder %s204, %s205
    %p219 = scmp.eq.s32.totalorder %s20, 3
    %p220 = por %p218, %p219
    %p222 = scmp.ne.s32.totalorder %s205, %s221
    %p223 = scmp.eq.s32.totalorder %s20, 0
    %p224 = por %p222, %p223
    %s225 = ssub.s32 %s21, %s33
    %s226 = ssub.s32 %s22, %s29
    %s227 = sor.u32 %s225, %s226
    %p228 = scmp.eq.s32.totalorder %s227, 0
    %s230 = sadd.s32 %s229, 1
    %s231 = scalar_select %p228, %s229, %s230
    %p234 = pneg %p228
    %p235 = scmp.eq.s32.totalorder %s14, 3
    %p236 = por %p234, %p235
    %p237 = scmp.ne.s32.totalorder %s229, %s232
    %p238 = scmp.eq.s32.totalorder %s14, 0
    %p239 = por %p237, %p238
    %p240 = scmp.ne.s32.totalorder %s229, %s232
    %p241 = scmp.eq.s32.totalorder %s19, 3
    %p242 = por %p240, %p241
    %p243 = scmp.ne.s32.totalorder %s232, %s233
    %p244 = scmp.eq.s32.totalorder %s19, 0
    %p245 = por %p243, %p244
    %p246 = scmp.ne.s32.totalorder %s232, %s233
    %p247 = scmp.eq.s32.totalorder %s20, 3
    %p248 = por %p246, %p247
    %p250 = scmp.ne.s32.totalorder %s233, %s249
    %p251 = scmp.eq.s32.totalorder %s20, 0
    %p252 = por %p250, %p251
    %p253 = scmp.le.s32.totalorder 1, %s14
    %p254 = scmp.lt.s32.totalorder %s14, 5
    %p255 = pnand %p253, %p254
    %p256 = pneg %p255
    // Predicated region
    $region9: #{double_conv.3} parent=5 // pred_check
      _
    $region10: #{double_conv.3} parent=5 // pred_check_branch
      %258 = sbr.rel (%p255) target = $region12
    $region11: #{double_conv.3} parent=5 // pred_region
      %s259 = ssub.s32 %s14, 1
      // Predicated region
      $region13: #{double_conv.3} parent=11 // pred_check
        %p260 = pneg %p47
      $region14: #{double_conv.3} parent=11 // pred_check_branch
        %262 = sbr.rel (%p260) target = $region16
      $region15: #{double_conv.3} parent=11 // pred_region
        _
      $region16: #{double_conv.3} parent=11 // pred_fallthru
        _
      // Predicated region
      $region17: #{double_conv.3} parent=11 // pred_check
        %p263 = pneg %p68
      $region18: #{double_conv.3} parent=11 // pred_check_branch
        %265 = sbr.rel (%p263) target = $region20
      $region19: #{double_conv.3} parent=11 // pred_region
        _
      $region20: #{double_conv.3} parent=11 // pred_fallthru
        _
      // Predicated region
      $region21: #{double_conv.3} parent=11 // pred_check
        %p266 = pneg %p189
      $region22: #{double_conv.3} parent=11 // pred_check_branch
        %268 = sbr.rel (%p266) target = $region24
      $region23: #{double_conv.3} parent=11 // pred_region
        _
      $region24: #{double_conv.3} parent=11 // pred_fallthru
        _
    $region12: #{double_conv.3} parent=5 // pred_fallthru
      _
    %p269 = scmp.lt.s32.totalorder %s14, 4
    // Predicated region
    $region25: #{double_conv.3} parent=5 // pred_check
      %p270 = pneg %p269
    $region26: #{double_conv.3} parent=5 // pred_check_branch
      %272 = sbr.rel (%p270) target = $region28
    $region27: #{double_conv.3} parent=5 // pred_region
      // Predicated region
      $region29: #{double_conv.3} parent=27 // pred_check
        %p273 = pneg %p90
      $region30: #{double_conv.3} parent=27 // pred_check_branch
        %275 = sbr.rel (%p273) target = $region32
      $region31: #{double_conv.3} parent=27 // pred_region
        %s276 = smul.u32 8, %s22
        %p277 = scmp.lt.s32.totalorder %s21, 1
        %s278 = scalar_select %p277, %s21, 1
        %p279 = scmp.lt.s32.totalorder %s276, 15
        %s280 = scalar_select %p279, %s276, 15
        %s281 = smul.addr %s280, 2
        %s282 = smul.addr %s278, 32
        %s283 = sadd.s32 %s281, %s282
        %s284 = smul.addr %s283, 8
        %s285 = scalar_lea.vmem %s2, %s284
        %s286 = smul.u32 8, %s22
      $region32: #{double_conv.3} parent=27 // pred_fallthru
        _
      // Predicated region
      $region33: #{double_conv.3} parent=27 // pred_check
        %p287 = pneg %p126
      $region34: #{double_conv.3} parent=27 // pred_check_branch
        %289 = sbr.rel (%p287) target = $region36
      $region35: #{double_conv.3} parent=27 // pred_region
        %s290 = smul.u32 %s22, 8
        %s291 = ssub.s32 %s290, 1
        %p292 = scmp.gt.s32.totalorder %s291, 0
        %s293 = scalar_select %p292, %s291, 0
        %p294 = scmp.lt.s32.totalorder %s21, 1
        %s295 = scalar_select %p294, %s21, 1
        %p296 = scmp.lt.s32.totalorder %s293, 15
        %s297 = scalar_select %p296, %s293, 15
        %s298 = smul.addr %s297, 2
        %s299 = smul.addr %s295, 32
        %s300 = sadd.s32 %s298, %s299
        %s301 = smul.addr %s300, 8
        %s302 = scalar_lea.vmem %s3, %s301
        %s303 = smul.u32 %s22, 8
        %s304 = ssub.s32 %s303, 1
        %p305 = scmp.gt.s32.totalorder %s304, 0
        %s306 = scalar_select %p305, %s304, 0
      $region36: #{double_conv.3} parent=27 // pred_fallthru
        _
      // Predicated region
      $region37: #{double_conv.3} parent=27 // pred_check
        %p307 = pneg %p162
      $region38: #{double_conv.3} parent=27 // pred_check_branch
        %309 = sbr.rel (%p307) target = $region40
      $region39: #{double_conv.3} parent=27 // pred_region
        %s310 = sadd.s32 %s22, 1
        %s311 = smul.u32 %s310, 8
        %p312 = scmp.lt.s32.totalorder %s311, 15
        %s313 = scalar_select %p312, %s311, 15
        %p314 = scmp.lt.s32.totalorder %s21, 1
        %s315 = scalar_select %p314, %s21, 1
        %p316 = scmp.lt.s32.totalorder %s313, 15
        %s317 = scalar_select %p316, %s313, 15
        %s318 = smul.addr %s317, 2
        %s319 = smul.addr %s315, 32
        %s320 = sadd.s32 %s318, %s319
        %s321 = smul.addr %s320, 8
        %s322 = scalar_lea.vmem %s4, %s321
        %s323 = sadd.s32 %s22, 1
        %s324 = smul.u32 %s323, 8
        %p325 = scmp.lt.s32.totalorder %s324, 15
        %s326 = scalar_select %p325, %s324, 15
      $region40: #{double_conv.3} parent=27 // pred_fallthru
        _
    $region28: #{double_conv.3} parent=5 // pred_fallthru
      _
    %p327 = scmp.le.s32.totalorder 1, %s14
    %p328 = scmp.lt.s32.totalorder %s14, 5
    %p329 = pnand %p327, %p328
    %p330 = pneg %p329
    // Predicated region
    $region41: #{double_conv.3} parent=5 // pred_check
      _
    $region42: #{double_conv.3} parent=5 // pred_check_branch
      %332 = sbr.rel (%p329) target = $region44
    $region43: #{double_conv.3} parent=5 // pred_region
      %s333 = ssub.s32 %s14, 1
      %p334 = pneg %p47
      %p335 = pneg %p44
      %p336 = pneg %p68
      %p337 = pneg %p65
      %s338 = smul.u32 8, %s24
      %p339 = scmp.lt.s32.totalorder %s23, 1
      %s340 = scalar_select %p339, %s23, 1
      %p341 = scmp.lt.s32.totalorder %s338, 15
      %s342 = scalar_select %p341, %s338, 15
      %s343 = smul.addr %s342, 2
      %s344 = smul.addr %s340, 32
      %s345 = sadd.s32 %s343, %s344
      %s346 = smul.addr %s345, 8
      %s347 = scalar_lea.vmem %s2, %s346
      %p348 = pneg %p96
      %p349 = pneg %p93
      %s350 = smul.u32 %s24, 8
      %s351 = ssub.s32 %s350, 1
      %p352 = scmp.gt.s32.totalorder %s351, 0
      %s353 = scalar_select %p352, %s351, 0
      %p354 = scmp.lt.s32.totalorder %s23, 1
      %s355 = scalar_select %p354, %s23, 1
      %p356 = scmp.lt.s32.totalorder %s353, 15
      %s357 = scalar_select %p356, %s353, 15
      %s358 = smul.addr %s357, 2
      %s359 = smul.addr %s355, 32
      %s360 = sadd.s32 %s358, %s359
      %s361 = smul.addr %s360, 8
      %s362 = scalar_lea.vmem %s3, %s361
      %p363 = pneg %p132
      %p364 = pneg %p129
      %s365 = sadd.s32 %s24, 1
      %s366 = smul.u32 %s365, 8
      %p367 = scmp.lt.s32.totalorder %s366, 15
      %s368 = scalar_select %p367, %s366, 15
      %p369 = scmp.lt.s32.totalorder %s23, 1
      %s370 = scalar_select %p369, %s23, 1
      %p371 = scmp.lt.s32.totalorder %s368, 15
      %s372 = scalar_select %p371, %s368, 15
      %s373 = smul.addr %s372, 2
      %s374 = smul.addr %s370, 32
      %s375 = sadd.s32 %s373, %s374
      %s376 = smul.addr %s375, 8
      %s377 = scalar_lea.vmem %s4, %s376
      %p378 = pneg %p168
      %p379 = pneg %p165
      %p380 = pneg %p189
      %p381 = pneg %p186
      %p382 = pneg %p217
      %p383 = pneg %p214
      %s384 = smul.u32 8, %s24
      %p385 = scmp.lt.s32.totalorder %s23, 1
      %s386 = scalar_select %p385, %s23, 1
      %p387 = scmp.lt.s32.totalorder %s384, 15
      %s388 = scalar_select %p387, %s384, 15
      %s389 = smul.addr %s388, 2
      %s390 = smul.addr %s386, 32
      %s391 = sadd.s32 %s389, %s390
      %s392 = smul.addr %s391, 8
      %s393 = scalar_lea.vmem %s6, %s392
      %p394 = pneg %p245
      %p395 = pneg %p242
      %p396 = scmp.lt.s32.totalorder %s23, 1
      %s397 = scalar_select %p396, %s23, 1
      %p398 = scmp.lt.s32.totalorder %s24, 1
      %s399 = scalar_select %p398, %s24, 1
      %s400 = smul.addr %s397, 2
      %s401 = sadd.s32 %s399, %s400
      %s402 = smul.addr %s401, 2
      %s403 = scalar_lea.vmem %s7, %s402
      %s404 = smul.u32 8, %s24
      %p405 = scmp.lt.s32.totalorder %s23, 1
      %s406 = scalar_select %p405, %s23, 1
      %p407 = scmp.lt.s32.totalorder %s404, 15
      %s408 = scalar_select %p407, %s404, 15
      %s409 = smul.addr %s408, 2
      %s410 = smul.addr %s406, 32
      %s411 = sadd.s32 %s409, %s410
      %s412 = smul.addr %s411, 8
      %s413 = scalar_lea.vmem %s2, %s412
      %s414 = smul.u32 8, %s24
      %s415 = smul.u32 %s24, 8
      %s416 = ssub.s32 %s415, 1
      %p417 = scmp.gt.s32.totalorder %s416, 0
      %s418 = scalar_select %p417, %s416, 0
      %p419 = scmp.lt.s32.totalorder %s23, 1
      %s420 = scalar_select %p419, %s23, 1
      %p421 = scmp.lt.s32.totalorder %s418, 15
      %s422 = scalar_select %p421, %s418, 15
      %s423 = smul.addr %s422, 2
      %s424 = smul.addr %s420, 32
      %s425 = sadd.s32 %s423, %s424
      %s426 = smul.addr %s425, 8
      %s427 = scalar_lea.vmem %s3, %s426
      %s428 = smul.u32 %s24, 8
      %s429 = ssub.s32 %s428, 1
      %p430 = scmp.gt.s32.totalorder %s429, 0
      %s431 = scalar_select %p430, %s429, 0
      %s432 = sadd.s32 %s24, 1
      %s433 = smul.u32 %s432, 8
      %p434 = scmp.lt.s32.totalorder %s433, 15
      %s435 = scalar_select %p434, %s433, 15
      %p436 = scmp.lt.s32.totalorder %s23, 1
      %s437 = scalar_select %p436, %s23, 1
      %p438 = scmp.lt.s32.totalorder %s435, 15
      %s439 = scalar_select %p438, %s435, 15
      %s440 = smul.addr %s439, 2
      %s441 = smul.addr %s437, 32
      %s442 = sadd.s32 %s440, %s441
      %s443 = smul.addr %s442, 8
      %s444 = scalar_lea.vmem %s4, %s443
      %s445 = sadd.s32 %s24, 1
      %s446 = smul.u32 %s445, 8
      %p447 = scmp.lt.s32.totalorder %s446, 15
      %s448 = scalar_select %p447, %s446, 15
      %s449 = smul.u32 8, %s24
      %p450 = scmp.lt.s32.totalorder %s23, 1
      %s451 = scalar_select %p450, %s23, 1
      %p452 = scmp.lt.s32.totalorder %s449, 15
      %s453 = scalar_select %p452, %s449, 15
      %s454 = smul.addr %s453, 2
      %s455 = smul.addr %s451, 32
      %s456 = sadd.s32 %s454, %s455
      %s457 = smul.addr %s456, 8
      %s458 = scalar_lea.vmem %s6, %s457
      %s459 = smul.u32 8, %s24
      %p460 = scmp.lt.s32.totalorder %s23, 1
      %s461 = scalar_select %p460, %s23, 1
      %p462 = scmp.lt.s32.totalorder %s24, 1
      %s463 = scalar_select %p462, %s24, 1
      %s464 = smul.addr %s461, 2
      %s465 = sadd.s32 %s463, %s464
      %s466 = smul.addr %s465, 2
      %s467 = scalar_lea.vmem %s7, %s466
      %v469 = vld [vmem:[%s427] sm:$0xff]
      %v470 = vld [vmem:[%s427 + $0x8] sm:$0xff]
      %v471 = vld [vmem:[%s444] sm:$0xff]
      %v472 = vld [vmem:[%s444 + $0x8] sm:$0xff]
      %p473 = scmp.gt.s32.totalorder %s24, 0
      %s474 = scalar_select %p473, 1, 0
      %v475 = vstv %s474
      %vm476 = vcmp.eq.s32.totalorder %v475, 1
      %v477 = vsel %vm476, %v469, 0.0
      %v478 = vsel %vm476, %v470, 0.0
      %p479 = scmp.lt.s32.totalorder %s24, 1
      %s480 = scalar_select %p479, 1, 0
      %v481 = vstv %s480
      %vm482 = vcmp.eq.s32.totalorder %v481, 1
      %v483 = vsel %vm482, %v471, 0.0
      %v484 = vsel %vm482, %v472, 0.0
      %vm485 = vcmask 24576
      %486 = vst.msk [vmem:[#allocation2] sm:$0x1] %vm485, 0.0
      %487 = vst.msk [vmem:[#allocation2 + $0x18] sm:$0x1] %vm485, 0.0
      %488 = vst.msk [vmem:[#allocation2 + $0x30] sm:$0x1] %vm485, 0.0
      %489 = vst.msk [vmem:[#allocation2 + $0x48] sm:$0x1] %vm485, 0.0
      %490 = vst.msk [vmem:[#allocation2 + $0x60] sm:$0x1] %vm485, 0.0
      %491 = vst.msk [vmem:[#allocation2 + $0x78] sm:$0x1] %vm485, 0.0
      %492 = vst.msk [vmem:[#allocation2 + $0x90] sm:$0x1] %vm485, 0.0
      %493 = vst.msk [vmem:[#allocation2 + $0xa8] sm:$0x1] %vm485, 0.0
      %494 = vst.msk [vmem:[#allocation2 + $0xc0] sm:$0x1] %vm485, 0.0
      %495 = vst.msk [vmem:[#allocation2 + $0xd8] sm:$0x1] %vm485, 0.0
      %496 = vst.msk [vmem:[#allocation2 + $0x11] sm:$0x1] %vm485, 0.0
      %497 = vst.msk [vmem:[#allocation2 + $0x29] sm:$0x1] %vm485, 0.0
      %498 = vst.msk [vmem:[#allocation2 + $0x41] sm:$0x1] %vm485, 0.0
      %499 = vst.msk [vmem:[#allocation2 + $0x59] sm:$0x1] %vm485, 0.0
      %500 = vst.msk [vmem:[#allocation2 + $0x71] sm:$0x1] %vm485, 0.0
      %501 = vst.msk [vmem:[#allocation2 + $0x89] sm:$0x1] %vm485, 0.0
      %502 = vst.msk [vmem:[#allocation2 + $0xa1] sm:$0x1] %vm485, 0.0
      %503 = vst.msk [vmem:[#allocation2 + $0xb9] sm:$0x1] %vm485, 0.0
      %504 = vst.msk [vmem:[#allocation2 + $0xd1] sm:$0x1] %vm485, 0.0
      %505 = vst.msk [vmem:[#allocation2 + $0xe9] sm:$0x1] %vm485, 0.0
      %vm506 = vcmask 31744
      %507 = vst.msk [vmem:[#allocation2 + $0x1] sm:$0xff] %vm506, %v477
      %508 = vst.msk [vmem:[#allocation2 + $0x9] sm:$0xff] %vm506, %v478
      %s509 = scalar_lea.vmem [#allocation2], 216
      %510 = vst.msk [vmem:[%s509 + $0x1] sm:$0xff] %vm506, %v483
      %511 = vst.msk [vmem:[%s509 + $0x9] sm:$0xff] %vm506, %v484
      %v512 = vld [vmem:[%s413] sm:$0xff]
      %v513 = vld [vmem:[%s413 + $0x8] sm:$0xff]
      %v514 = vld [vmem:[%s413 + $0x10] sm:$0xff]
      %v515 = vld [vmem:[%s413 + $0x18] sm:$0xff]
      %v516 = vld [vmem:[%s413 + $0x20] sm:$0xff]
      %v517 = vld [vmem:[%s413 + $0x28] sm:$0xff]
      %v518 = vld [vmem:[%s413 + $0x30] sm:$0xff]
      %v519 = vld [vmem:[%s413 + $0x38] sm:$0xff]
      %v520 = vld [vmem:[%s413 + $0x40] sm:$0xff]
      %v521 = vld [vmem:[%s413 + $0x48] sm:$0xff]
      %v522 = vld [vmem:[%s413 + $0x50] sm:$0xff]
      %v523 = vld [vmem:[%s413 + $0x58] sm:$0xff]
      %v524 = vld [vmem:[%s413 + $0x60] sm:$0xff]
      %v525 = vld [vmem:[%s413 + $0x68] sm:$0xff]
      %v526 = vld [vmem:[%s413 + $0x70] sm:$0xff]
      %v527 = vld [vmem:[%s413 + $0x78] sm:$0xff]
      %s528 = scalar_lea.vmem [#allocation2], 24
      %529 = vst.msk [vmem:[%s528 + $0x1] sm:$0xff] %vm506, %v512
      %530 = vst.msk [vmem:[%s528 + $0x9] sm:$0xff] %vm506, %v513
      %531 = vst.msk [vmem:[%s528 + $0x19] sm:$0xff] %vm506, %v514
      %532 = vst.msk [vmem:[%s528 + $0x21] sm:$0xff] %vm506, %v515
      %533 = vst.msk [vmem:[%s528 + $0x31] sm:$0xff] %vm506, %v516
      %534 = vst.msk [vmem:[%s528 + $0x39] sm:$0xff] %vm506, %v517
      %535 = vst.msk [vmem:[%s528 + $0x49] sm:$0xff] %vm506, %v518
      %536 = vst.msk [vmem:[%s528 + $0x51] sm:$0xff] %vm506, %v519
      %537 = vst.msk [vmem:[%s528 + $0x61] sm:$0xff] %vm506, %v520
      %538 = vst.msk [vmem:[%s528 + $0x69] sm:$0xff] %vm506, %v521
      %539 = vst.msk [vmem:[%s528 + $0x79] sm:$0xff] %vm506, %v522
      %540 = vst.msk [vmem:[%s528 + $0x81] sm:$0xff] %vm506, %v523
      %541 = vst.msk [vmem:[%s528 + $0x91] sm:$0xff] %vm506, %v524
      %542 = vst.msk [vmem:[%s528 + $0x99] sm:$0xff] %vm506, %v525
      %543 = vst.msk [vmem:[%s528 + $0xa9] sm:$0xff] %vm506, %v526
      %544 = vst.msk [vmem:[%s528 + $0xb1] sm:$0xff] %vm506, %v527
      %v545 = vld [vmem:[#allocation2] sm:$0xff]
      %v546 = vld [vmem:[#allocation2 + $0x8] sm:$0xff]
      %v547 = vld [vmem:[#allocation2 + $0x18] sm:$0xff]
      %v548 = vld [vmem:[#allocation2 + $0x20] sm:$0xff]
      %v549 = vld [vmem:[#allocation2 + $0x30] sm:$0xff]
      %v550 = vld [vmem:[#allocation2 + $0x38] sm:$0xff]
      %v551 = vld [vmem:[#allocation2 + $0x48] sm:$0xff]
      %v552 = vld [vmem:[#allocation2 + $0x50] sm:$0xff]
      %v553 = vld [vmem:[#allocation2 + $0x60] sm:$0xff]
      %v554 = vld [vmem:[#allocation2 + $0x68] sm:$0xff]
      %v555 = vld [vmem:[#allocation2 + $0x78] sm:$0xff]
      %v556 = vld [vmem:[#allocation2 + $0x80] sm:$0xff]
      %v557 = vld [vmem:[#allocation2 + $0x90] sm:$0xff]
      %v558 = vld [vmem:[#allocation2 + $0x98] sm:$0xff]
      %v559 = vld [vmem:[#allocation2 + $0xa8] sm:$0xff]
      %v560 = vld [vmem:[#allocation2 + $0xb0] sm:$0xff]
      %v561 = vpack.c.bf16 %v546, %v545
      %v562 = vpack.c.bf16 %v548, %v547
      %v563 = vpack.c.bf16 %v550, %v549
      %v564 = vpack.c.bf16 %v552, %v551
      %v565 = vpack.c.bf16 %v554, %v553
      %v566 = vpack.c.bf16 %v556, %v555
      %v567 = vpack.c.bf16 %v558, %v557
      %v568 = vpack.c.bf16 %v560, %v559
      %v569 = vld [vmem:[%s5] sm:$0x3]
      %v570 = vld [vmem:[#allocation2 + $0x1] sm:$0xff]
      %v571 = vld [vmem:[#allocation2 + $0x9] sm:$0xff]
      %v572 = vld [vmem:[#allocation2 + $0x19] sm:$0xff]
      %v573 = vld [vmem:[#allocation2 + $0x21] sm:$0xff]
      %v574 = vld [vmem:[#allocation2 + $0x31] sm:$0xff]
      %v575 = vld [vmem:[#allocation2 + $0x39] sm:$0xff]
      %v576 = vld [vmem:[#allocation2 + $0x49] sm:$0xff]
      %v577 = vld [vmem:[#allocation2 + $0x51] sm:$0xff]
      %v578 = vld [vmem:[#allocation2 + $0x61] sm:$0xff]
      %v579 = vld [vmem:[#allocation2 + $0x69] sm:$0xff]
      %v580 = vld [vmem:[#allocation2 + $0x79] sm:$0xff]
      %v581 = vld [vmem:[#allocation2 + $0x81] sm:$0xff]
      %v582 = vld [vmem:[#allocation2 + $0x91] sm:$0xff]
      %v583 = vld [vmem:[#allocation2 + $0x99] sm:$0xff]
      %v584 = vld [vmem:[#allocation2 + $0xa9] sm:$0xff]
      %v585 = vld [vmem:[#allocation2 + $0xb1] sm:$0xff]
      %v586 = vpack.c.bf16 %v571, %v570
      %v587 = vpack.c.bf16 %v573, %v572
      %v588 = vpack.c.bf16 %v575, %v574
      %v589 = vpack.c.bf16 %v577, %v576
      %v590 = vpack.c.bf16 %v579, %v578
      %v591 = vpack.c.bf16 %v581, %v580
      %v592 = vpack.c.bf16 %v583, %v582
      %v593 = vpack.c.bf16 %v585, %v584
      %s594 = scalar_lea.vmem %s5, 2
      %v595 = vld [vmem:[%s594] sm:$0x3]
      %v597 = vsel %vm506, %v586, 0
      %v600 = vsel %vm506, %v587, 0
      %v603 = vsel %vm506, %v588, 0
      %v606 = vsel %vm506, %v589, 0
      %v609 = vsel %vm506, %v590, 0
      %v612 = vsel %vm506, %v591, 0
      %v615 = vsel %vm506, %v592, 0
      %v618 = vsel %vm506, %v593, 0
      %vm620 = vcmask 1041408
      %v622 = vsel %vm620, %v595, 0
      %624 = vmatpush.bf16.msra.mxu0 0
      %625 = vmatpush.bf16.msra.mxu0 0
      %626 = vmatpush.bf16.msra.mxu0 0
      %627 = vmatpush.bf16.msra.mxu0 0
      %628 = vmatpush.bf16.msra.mxu0 0
      %629 = vmatpush.bf16.msra.mxu0 0
      %630 = vmatpush.bf16.msra.mxu0 0
      %631 = vmatpush.bf16.msra.mxu0 %v622
      %632 = vmatmul.bf16.gmra.mxu0 %v597
      %v633 = vpop.f32.mrf.mxu0
      %v634 = vadd.f32 0.0, %v633
      %v635 = vpop.f32.mrf.mxu0
      %v636 = vadd.f32 0.0, %v635
      %637 = vmatmul.bf16.gmra.mxu0 %v600
      %v638 = vpop.f32.mrf.mxu0
      %v639 = vadd.f32 0.0, %v638
      %v640 = vpop.f32.mrf.mxu0
      %v641 = vadd.f32 0.0, %v640
      %642 = vmatmul.bf16.gmra.mxu0 %v603
      %v643 = vpop.f32.mrf.mxu0
      %v644 = vadd.f32 0.0, %v643
      %v645 = vpop.f32.mrf.mxu0
      %v646 = vadd.f32 0.0, %v645
      %647 = vmatmul.bf16.gmra.mxu0 %v606
      %v648 = vpop.f32.mrf.mxu0
      %v649 = vadd.f32 0.0, %v648
      %v650 = vpop.f32.mrf.mxu0
      %v651 = vadd.f32 0.0, %v650
      %652 = vmatmul.bf16.gmra.mxu0 %v609
      %v653 = vpop.f32.mrf.mxu0
      %v654 = vadd.f32 0.0, %v653
      %v655 = vpop.f32.mrf.mxu0
      %v656 = vadd.f32 0.0, %v655
      %657 = vmatmul.bf16.gmra.mxu0 %v612
      %v658 = vpop.f32.mrf.mxu0
      %v659 = vadd.f32 0.0, %v658
      %v660 = vpop.f32.mrf.mxu0
      %v661 = vadd.f32 0.0, %v660
      %662 = vmatmul.bf16.gmra.mxu0 %v615
      %v663 = vpop.f32.mrf.mxu0
      %v664 = vadd.f32 0.0, %v663
      %v665 = vpop.f32.mrf.mxu0
      %v666 = vadd.f32 0.0, %v665
      %667 = vmatmul.bf16.gmra.mxu0 %v618
      %v668 = vpop.f32.mrf.mxu0
      %v669 = vadd.f32 0.0, %v668
      %v670 = vpop.f32.mrf.mxu0
      %v671 = vadd.f32 0.0, %v670
      %672 = vdwg.mxu0
      %v674 = vsel %vm506, %v561, 0
      %v677 = vsel %vm506, %v562, 0
      %v680 = vsel %vm506, %v563, 0
      %v683 = vsel %vm506, %v564, 0
      %v686 = vsel %vm506, %v565, 0
      %v689 = vsel %vm506, %v566, 0
      %v692 = vsel %vm506, %v567, 0
      %v695 = vsel %vm506, %v568, 0
      %v698 = vsel %vm620, %v569, 0
      %700 = vmatpush.bf16.msra.mxu0 0
      %701 = vmatpush.bf16.msra.mxu0 0
      %702 = vmatpush.bf16.msra.mxu0 0
      %703 = vmatpush.bf16.msra.mxu0 0
      %704 = vmatpush.bf16.msra.mxu0 0
      %705 = vmatpush.bf16.msra.mxu0 0
      %706 = vmatpush.bf16.msra.mxu0 0
      %707 = vmatpush.bf16.msra.mxu0 %v698
      %708 = vmatmul.bf16.gmra.mxu0 %v674
      %v709 = vpop.f32.mrf.mxu0
      %v710 = vadd.f32 %v634, %v709
      %v711 = vpop.f32.mrf.mxu0
      %v712 = vadd.f32 %v636, %v711
      %713 = vmatmul.bf16.gmra.mxu0 %v677
      %v714 = vpop.f32.mrf.mxu0
      %v715 = vadd.f32 %v639, %v714
      %v716 = vpop.f32.mrf.mxu0
      %v717 = vadd.f32 %v641, %v716
      %718 = vmatmul.bf16.gmra.mxu0 %v680
      %v719 = vpop.f32.mrf.mxu0
      %v720 = vadd.f32 %v644, %v719
      %v721 = vpop.f32.mrf.mxu0
      %v722 = vadd.f32 %v646, %v721
      %723 = vmatmul.bf16.gmra.mxu0 %v683
      %v724 = vpop.f32.mrf.mxu0
      %v725 = vadd.f32 %v649, %v724
      %v726 = vpop.f32.mrf.mxu0
      %v727 = vadd.f32 %v651, %v726
      %728 = vmatmul.bf16.gmra.mxu0 %v686
      %v729 = vpop.f32.mrf.mxu0
      %v730 = vadd.f32 %v654, %v729
      %v731 = vpop.f32.mrf.mxu0
      %v732 = vadd.f32 %v656, %v731
      %733 = vmatmul.bf16.gmra.mxu0 %v689
      %v734 = vpop.f32.mrf.mxu0
      %v735 = vadd.f32 %v659, %v734
      %v736 = vpop.f32.mrf.mxu0
      %v737 = vadd.f32 %v661, %v736
      %738 = vmatmul.bf16.gmra.mxu0 %v692
      %v739 = vpop.f32.mrf.mxu0
      %v740 = vadd.f32 %v664, %v739
      %v741 = vpop.f32.mrf.mxu0
      %v742 = vadd.f32 %v666, %v741
      %743 = vmatmul.bf16.gmra.mxu0 %v695
      %v744 = vpop.f32.mrf.mxu0
      %v745 = vadd.f32 %v669, %v744
      %v746 = vpop.f32.mrf.mxu0
      %v747 = vadd.f32 %v671, %v746
      %748 = vdwg.mxu0
      %v749 = vld [vmem:[#allocation2 + $0x2] sm:$0xff]
      %v750 = vld [vmem:[#allocation2 + $0xa] sm:$0xff]
      %v751 = vld [vmem:[#allocation2 + $0x1a] sm:$0xff]
      %v752 = vld [vmem:[#allocation2 + $0x22] sm:$0xff]
      %v753 = vld [vmem:[#allocation2 + $0x32] sm:$0xff]
      %v754 = vld [vmem:[#allocation2 + $0x3a] sm:$0xff]
      %v755 = vld [vmem:[#allocation2 + $0x4a] sm:$0xff]
      %v756 = vld [vmem:[#allocation2 + $0x52] sm:$0xff]
      %v757 = vld [vmem:[#allocation2 + $0x62] sm:$0xff]
      %v758 = vld [vmem:[#allocation2 + $0x6a] sm:$0xff]
      %v759 = vld [vmem:[#allocation2 + $0x7a] sm:$0xff]
      %v760 = vld [vmem:[#allocation2 + $0x82] sm:$0xff]
      %v761 = vld [vmem:[#allocation2 + $0x92] sm:$0xff]
      %v762 = vld [vmem:[#allocation2 + $0x9a] sm:$0xff]
      %v763 = vld [vmem:[#allocation2 + $0xaa] sm:$0xff]
      %v764 = vld [vmem:[#allocation2 + $0xb2] sm:$0xff]
      %v765 = vpack.c.bf16 %v750, %v749
      %v766 = vpack.c.bf16 %v752, %v751
      %v767 = vpack.c.bf16 %v754, %v753
      %v768 = vpack.c.bf16 %v756, %v755
      %v769 = vpack.c.bf16 %v758, %v757
      %v770 = vpack.c.bf16 %v760, %v759
      %v771 = vpack.c.bf16 %v762, %v761
      %v772 = vpack.c.bf16 %v764, %v763
      %s773 = scalar_lea.vmem %s5, 4
      %v774 = vld [vmem:[%s773] sm:$0x3]
      %v776 = vsel %vm506, %v765, 0
      %v779 = vsel %vm506, %v766, 0
      %v782 = vsel %vm506, %v767, 0
      %v785 = vsel %vm506, %v768, 0
      %v788 = vsel %vm506, %v769, 0
      %v791 = vsel %vm506, %v770, 0
      %v794 = vsel %vm506, %v771, 0
      %v797 = vsel %vm506, %v772, 0
      %v800 = vsel %vm620, %v774, 0
      %802 = vmatpush.bf16.msra.mxu0 0
      %803 = vmatpush.bf16.msra.mxu0 0
      %804 = vmatpush.bf16.msra.mxu0 0
      %805 = vmatpush.bf16.msra.mxu0 0
      %806 = vmatpush.bf16.msra.mxu0 0
      %807 = vmatpush.bf16.msra.mxu0 0
      %808 = vmatpush.bf16.msra.mxu0 0
      %809 = vmatpush.bf16.msra.mxu0 %v800
      %810 = vmatmul.bf16.gmra.mxu0 %v776
      %v811 = vpop.f32.mrf.mxu0
      %v812 = vadd.f32 0.0, %v811
      %v813 = vpop.f32.mrf.mxu0
      %v814 = vadd.f32 0.0, %v813
      %815 = vmatmul.bf16.gmra.mxu0 %v779
      %v816 = vpop.f32.mrf.mxu0
      %v817 = vadd.f32 0.0, %v816
      %v818 = vpop.f32.mrf.mxu0
      %v819 = vadd.f32 0.0, %v818
      %820 = vmatmul.bf16.gmra.mxu0 %v782
      %v821 = vpop.f32.mrf.mxu0
      %v822 = vadd.f32 0.0, %v821
      %v823 = vpop.f32.mrf.mxu0
      %v824 = vadd.f32 0.0, %v823
      %825 = vmatmul.bf16.gmra.mxu0 %v785
      %v826 = vpop.f32.mrf.mxu0
      %v827 = vadd.f32 0.0, %v826
      %v828 = vpop.f32.mrf.mxu0
      %v829 = vadd.f32 0.0, %v828
      %830 = vmatmul.bf16.gmra.mxu0 %v788
      %v831 = vpop.f32.mrf.mxu0
      %v832 = vadd.f32 0.0, %v831
      %v833 = vpop.f32.mrf.mxu0
      %v834 = vadd.f32 0.0, %v833
      %835 = vmatmul.bf16.gmra.mxu0 %v791
      %v836 = vpop.f32.mrf.mxu0
      %v837 = vadd.f32 0.0, %v836
      %v838 = vpop.f32.mrf.mxu0
      %v839 = vadd.f32 0.0, %v838
      %840 = vmatmul.bf16.gmra.mxu0 %v794
      %v841 = vpop.f32.mrf.mxu0
      %v842 = vadd.f32 0.0, %v841
      %v843 = vpop.f32.mrf.mxu0
      %v844 = vadd.f32 0.0, %v843
      %845 = vmatmul.bf16.gmra.mxu0 %v797
      %v846 = vpop.f32.mrf.mxu0
      %v847 = vadd.f32 0.0, %v846
      %v848 = vpop.f32.mrf.mxu0
      %v849 = vadd.f32 0.0, %v848
      %850 = vdwg.mxu0
      %v851 = vadd.f32 %v710, %v812
      %v852 = vadd.f32 %v712, %v814
      %v853 = vadd.f32 %v715, %v817
      %v854 = vadd.f32 %v717, %v819
      %v855 = vadd.f32 %v720, %v822
      %v856 = vadd.f32 %v722, %v824
      %v857 = vadd.f32 %v725, %v827
      %v858 = vadd.f32 %v727, %v829
      %v859 = vadd.f32 %v730, %v832
      %v860 = vadd.f32 %v732, %v834
      %v861 = vadd.f32 %v735, %v837
      %v862 = vadd.f32 %v737, %v839
      %v863 = vadd.f32 %v740, %v842
      %v864 = vadd.f32 %v742, %v844
      %v865 = vadd.f32 %v745, %v847
      %v866 = vadd.f32 %v747, %v849
      %v867 = vld [vmem:[%s528] sm:$0xff]
      %v868 = vld [vmem:[%s528 + $0x8] sm:$0xff]
      %v869 = vld [vmem:[%s528 + $0x18] sm:$0xff]
      %v870 = vld [vmem:[%s528 + $0x20] sm:$0xff]
      %v871 = vld [vmem:[%s528 + $0x30] sm:$0xff]
      %v872 = vld [vmem:[%s528 + $0x38] sm:$0xff]
      %v873 = vld [vmem:[%s528 + $0x48] sm:$0xff]
      %v874 = vld [vmem:[%s528 + $0x50] sm:$0xff]
      %v875 = vld [vmem:[%s528 + $0x60] sm:$0xff]
      %v876 = vld [vmem:[%s528 + $0x68] sm:$0xff]
      %v877 = vld [vmem:[%s528 + $0x78] sm:$0xff]
      %v878 = vld [vmem:[%s528 + $0x80] sm:$0xff]
      %v879 = vld [vmem:[%s528 + $0x90] sm:$0xff]
      %v880 = vld [vmem:[%s528 + $0x98] sm:$0xff]
      %v881 = vld [vmem:[%s528 + $0xa8] sm:$0xff]
      %v882 = vld [vmem:[%s528 + $0xb0] sm:$0xff]
      %v883 = vpack.c.bf16 %v868, %v867
      %v884 = vpack.c.bf16 %v870, %v869
      %v885 = vpack.c.bf16 %v872, %v871
      %v886 = vpack.c.bf16 %v874, %v873
      %v887 = vpack.c.bf16 %v876, %v875
      %v888 = vpack.c.bf16 %v878, %v877
      %v889 = vpack.c.bf16 %v880, %v879
      %v890 = vpack.c.bf16 %v882, %v881
      %s891 = scalar_lea.vmem %s5, 6
      %v892 = vld [vmem:[%s891] sm:$0x3]
      %v894 = vsel %vm506, %v883, 0
      %v897 = vsel %vm506, %v884, 0
      %v900 = vsel %vm506, %v885, 0
      %v903 = vsel %vm506, %v886, 0
      %v906 = vsel %vm506, %v887, 0
      %v909 = vsel %vm506, %v888, 0
      %v912 = vsel %vm506, %v889, 0
      %v915 = vsel %vm506, %v890, 0
      %v918 = vsel %vm620, %v892, 0
      %920 = vmatpush.bf16.msra.mxu0 0
      %921 = vmatpush.bf16.msra.mxu0 0
      %922 = vmatpush.bf16.msra.mxu0 0
      %923 = vmatpush.bf16.msra.mxu0 0
      %924 = vmatpush.bf16.msra.mxu0 0
      %925 = vmatpush.bf16.msra.mxu0 0
      %926 = vmatpush.bf16.msra.mxu0 0
      %927 = vmatpush.bf16.msra.mxu0 %v918
      %928 = vmatmul.bf16.gmra.mxu0 %v894
      %v929 = vpop.f32.mrf.mxu0
      %v930 = vadd.f32 0.0, %v929
      %v931 = vpop.f32.mrf.mxu0
      %v932 = vadd.f32 0.0, %v931
      %933 = vmatmul.bf16.gmra.mxu0 %v897
      %v934 = vpop.f32.mrf.mxu0
      %v935 = vadd.f32 0.0, %v934
      %v936 = vpop.f32.mrf.mxu0
      %v937 = vadd.f32 0.0, %v936
      %938 = vmatmul.bf16.gmra.mxu0 %v900
      %v939 = vpop.f32.mrf.mxu0
      %v940 = vadd.f32 0.0, %v939
      %v941 = vpop.f32.mrf.mxu0
      %v942 = vadd.f32 0.0, %v941
      %943 = vmatmul.bf16.gmra.mxu0 %v903
      %v944 = vpop.f32.mrf.mxu0
      %v945 = vadd.f32 0.0, %v944
      %v946 = vpop.f32.mrf.mxu0
      %v947 = vadd.f32 0.0, %v946
      %948 = vmatmul.bf16.gmra.mxu0 %v906
      %v949 = vpop.f32.mrf.mxu0
      %v950 = vadd.f32 0.0, %v949
      %v951 = vpop.f32.mrf.mxu0
      %v952 = vadd.f32 0.0, %v951
      %953 = vmatmul.bf16.gmra.mxu0 %v909
      %v954 = vpop.f32.mrf.mxu0
      %v955 = vadd.f32 0.0, %v954
      %v956 = vpop.f32.mrf.mxu0
      %v957 = vadd.f32 0.0, %v956
      %958 = vmatmul.bf16.gmra.mxu0 %v912
      %v959 = vpop.f32.mrf.mxu0
      %v960 = vadd.f32 0.0, %v959
      %v961 = vpop.f32.mrf.mxu0
      %v962 = vadd.f32 0.0, %v961
      %963 = vmatmul.bf16.gmra.mxu0 %v915
      %v964 = vpop.f32.mrf.mxu0
      %v965 = vadd.f32 0.0, %v964
      %v966 = vpop.f32.mrf.mxu0
      %v967 = vadd.f32 0.0, %v966
      %968 = vdwg.mxu0
      %v969 = vadd.f32 %v851, %v930
      %v970 = vadd.f32 %v852, %v932
      %v971 = vadd.f32 %v853, %v935
      %v972 = vadd.f32 %v854, %v937
      %v973 = vadd.f32 %v855, %v940
      %v974 = vadd.f32 %v856, %v942
      %v975 = vadd.f32 %v857, %v945
      %v976 = vadd.f32 %v858, %v947
      %v977 = vadd.f32 %v859, %v950
      %v978 = vadd.f32 %v860, %v952
      %v979 = vadd.f32 %v861, %v955
      %v980 = vadd.f32 %v862, %v957
      %v981 = vadd.f32 %v863, %v960
      %v982 = vadd.f32 %v864, %v962
      %v983 = vadd.f32 %v865, %v965
      %v984 = vadd.f32 %v866, %v967
      %v985 = vld [vmem:[%s528 + $0x1] sm:$0xff]
      %v986 = vld [vmem:[%s528 + $0x9] sm:$0xff]
      %v987 = vld [vmem:[%s528 + $0x19] sm:$0xff]
      %v988 = vld [vmem:[%s528 + $0x21] sm:$0xff]
      %v989 = vld [vmem:[%s528 + $0x31] sm:$0xff]
      %v990 = vld [vmem:[%s528 + $0x39] sm:$0xff]
      %v991 = vld [vmem:[%s528 + $0x49] sm:$0xff]
      %v992 = vld [vmem:[%s528 + $0x51] sm:$0xff]
      %v993 = vld [vmem:[%s528 + $0x61] sm:$0xff]
      %v994 = vld [vmem:[%s528 + $0x69] sm:$0xff]
      %v995 = vld [vmem:[%s528 + $0x79] sm:$0xff]
      %v996 = vld [vmem:[%s528 + $0x81] sm:$0xff]
      %v997 = vld [vmem:[%s528 + $0x91] sm:$0xff]
      %v998 = vld [vmem:[%s528 + $0x99] sm:$0xff]
      %v999 = vld [vmem:[%s528 + $0xa9] sm:$0xff]
      %v1000 = vld [vmem:[%s528 + $0xb1] sm:$0xff]
      %v1001 = vpack.c.bf16 %v986, %v985
      %v1002 = vpack.c.bf16 %v988, %v987
      %v1003 = vpack.c.bf16 %v990, %v989
      %v1004 = vpack.c.bf16 %v992, %v991
      %v1005 = vpack.c.bf16 %v994, %v993
      %v1006 = vpack.c.bf16 %v996, %v995
      %v1007 = vpack.c.bf16 %v998, %v997
      %v1008 = vpack.c.bf16 %v1000, %v999
      %s1009 = scalar_lea.vmem %s5, 8
      %v1010 = vld [vmem:[%s1009] sm:$0x3]
      %v1012 = vsel %vm506, %v1001, 0
      %v1015 = vsel %vm506, %v1002, 0
      %v1018 = vsel %vm506, %v1003, 0
      %v1021 = vsel %vm506, %v1004, 0
      %v1024 = vsel %vm506, %v1005, 0
      %v1027 = vsel %vm506, %v1006, 0
      %v1030 = vsel %vm506, %v1007, 0
      %v1033 = vsel %vm506, %v1008, 0
      %v1036 = vsel %vm620, %v1010, 0
      %1038 = vmatpush.bf16.msra.mxu0 0
      %1039 = vmatpush.bf16.msra.mxu0 0
      %1040 = vmatpush.bf16.msra.mxu0 0
      %1041 = vmatpush.bf16.msra.mxu0 0
      %1042 = vmatpush.bf16.msra.mxu0 0
      %1043 = vmatpush.bf16.msra.mxu0 0
      %1044 = vmatpush.bf16.msra.mxu0 0
      %1045 = vmatpush.bf16.msra.mxu0 %v1036
      %1046 = vmatmul.bf16.gmra.mxu0 %v1012
      %v1047 = vpop.f32.mrf.mxu0
      %v1048 = vadd.f32 0.0, %v1047
      %v1049 = vpop.f32.mrf.mxu0
      %v1050 = vadd.f32 0.0, %v1049
      %1051 = vmatmul.bf16.gmra.mxu0 %v1015
      %v1052 = vpop.f32.mrf.mxu0
      %v1053 = vadd.f32 0.0, %v1052
      %v1054 = vpop.f32.mrf.mxu0
      %v1055 = vadd.f32 0.0, %v1054
      %1056 = vmatmul.bf16.gmra.mxu0 %v1018
      %v1057 = vpop.f32.mrf.mxu0
      %v1058 = vadd.f32 0.0, %v1057
      %v1059 = vpop.f32.mrf.mxu0
      %v1060 = vadd.f32 0.0, %v1059
      %1061 = vmatmul.bf16.gmra.mxu0 %v1021
      %v1062 = vpop.f32.mrf.mxu0
      %v1063 = vadd.f32 0.0, %v1062
      %v1064 = vpop.f32.mrf.mxu0
      %v1065 = vadd.f32 0.0, %v1064
      %1066 = vmatmul.bf16.gmra.mxu0 %v1024
      %v1067 = vpop.f32.mrf.mxu0
      %v1068 = vadd.f32 0.0, %v1067
      %v1069 = vpop.f32.mrf.mxu0
      %v1070 = vadd.f32 0.0, %v1069
      %1071 = vmatmul.bf16.gmra.mxu0 %v1027
      %v1072 = vpop.f32.mrf.mxu0
      %v1073 = vadd.f32 0.0, %v1072
      %v1074 = vpop.f32.mrf.mxu0
      %v1075 = vadd.f32 0.0, %v1074
      %1076 = vmatmul.bf16.gmra.mxu0 %v1030
      %v1077 = vpop.f32.mrf.mxu0
      %v1078 = vadd.f32 0.0, %v1077
      %v1079 = vpop.f32.mrf.mxu0
      %v1080 = vadd.f32 0.0, %v1079
      %1081 = vmatmul.bf16.gmra.mxu0 %v1033
      %v1082 = vpop.f32.mrf.mxu0
      %v1083 = vadd.f32 0.0, %v1082
      %v1084 = vpop.f32.mrf.mxu0
      %v1085 = vadd.f32 0.0, %v1084
      %1086 = vdwg.mxu0
      %v1087 = vadd.f32 %v969, %v1048
      %v1088 = vadd.f32 %v970, %v1050
      %v1089 = vadd.f32 %v971, %v1053
      %v1090 = vadd.f32 %v972, %v1055
      %v1091 = vadd.f32 %v973, %v1058
      %v1092 = vadd.f32 %v974, %v1060
      %v1093 = vadd.f32 %v975, %v1063
      %v1094 = vadd.f32 %v976, %v1065
      %v1095 = vadd.f32 %v977, %v1068
      %v1096 = vadd.f32 %v978, %v1070
      %v1097 = vadd.f32 %v979, %v1073
      %v1098 = vadd.f32 %v980, %v1075
      %v1099 = vadd.f32 %v981, %v1078
      %v1100 = vadd.f32 %v982, %v1080
      %v1101 = vadd.f32 %v983, %v1083
      %v1102 = vadd.f32 %v984, %v1085
      %v1103 = vld [vmem:[%s528 + $0x2] sm:$0xff]
      %v1104 = vld [vmem:[%s528 + $0xa] sm:$0xff]
      %v1105 = vld [vmem:[%s528 + $0x1a] sm:$0xff]
      %v1106 = vld [vmem:[%s528 + $0x22] sm:$0xff]
      %v1107 = vld [vmem:[%s528 + $0x32] sm:$0xff]
      %v1108 = vld [vmem:[%s528 + $0x3a] sm:$0xff]
      %v1109 = vld [vmem:[%s528 + $0x4a] sm:$0xff]
      %v1110 = vld [vmem:[%s528 + $0x52] sm:$0xff]
      %v1111 = vld [vmem:[%s528 + $0x62] sm:$0xff]
      %v1112 = vld [vmem:[%s528 + $0x6a] sm:$0xff]
      %v1113 = vld [vmem:[%s528 + $0x7a] sm:$0xff]
      %v1114 = vld [vmem:[%s528 + $0x82] sm:$0xff]
      %v1115 = vld [vmem:[%s528 + $0x92] sm:$0xff]
      %v1116 = vld [vmem:[%s528 + $0x9a] sm:$0xff]
      %v1117 = vld [vmem:[%s528 + $0xaa] sm:$0xff]
      %v1118 = vld [vmem:[%s528 + $0xb2] sm:$0xff]
      %v1119 = vpack.c.bf16 %v1104, %v1103
      %v1120 = vpack.c.bf16 %v1106, %v1105
      %v1121 = vpack.c.bf16 %v1108, %v1107
      %v1122 = vpack.c.bf16 %v1110, %v1109
      %v1123 = vpack.c.bf16 %v1112, %v1111
      %v1124 = vpack.c.bf16 %v1114, %v1113
      %v1125 = vpack.c.bf16 %v1116, %v1115
      %v1126 = vpack.c.bf16 %v1118, %v1117
      %s1127 = scalar_lea.vmem %s5, 10
      %v1128 = vld [vmem:[%s1127] sm:$0x3]
      %v1130 = vsel %vm506, %v1119, 0
      %v1133 = vsel %vm506, %v1120, 0
      %v1136 = vsel %vm506, %v1121, 0
      %v1139 = vsel %vm506, %v1122, 0
      %v1142 = vsel %vm506, %v1123, 0
      %v1145 = vsel %vm506, %v1124, 0
      %v1148 = vsel %vm506, %v1125, 0
      %v1151 = vsel %vm506, %v1126, 0
      %v1154 = vsel %vm620, %v1128, 0
      %1156 = vmatpush.bf16.msra.mxu0 0
      %1157 = vmatpush.bf16.msra.mxu0 0
      %1158 = vmatpush.bf16.msra.mxu0 0
      %1159 = vmatpush.bf16.msra.mxu0 0
      %1160 = vmatpush.bf16.msra.mxu0 0
      %1161 = vmatpush.bf16.msra.mxu0 0
      %1162 = vmatpush.bf16.msra.mxu0 0
      %1163 = vmatpush.bf16.msra.mxu0 %v1154
      %1164 = vmatmul.bf16.gmra.mxu0 %v1130
      %v1165 = vpop.f32.mrf.mxu0
      %v1166 = vadd.f32 0.0, %v1165
      %v1167 = vpop.f32.mrf.mxu0
      %v1168 = vadd.f32 0.0, %v1167
      %1169 = vmatmul.bf16.gmra.mxu0 %v1133
      %v1170 = vpop.f32.mrf.mxu0
      %v1171 = vadd.f32 0.0, %v1170
      %v1172 = vpop.f32.mrf.mxu0
      %v1173 = vadd.f32 0.0, %v1172
      %1174 = vmatmul.bf16.gmra.mxu0 %v1136
      %v1175 = vpop.f32.mrf.mxu0
      %v1176 = vadd.f32 0.0, %v1175
      %v1177 = vpop.f32.mrf.mxu0
      %v1178 = vadd.f32 0.0, %v1177
      %1179 = vmatmul.bf16.gmra.mxu0 %v1139
      %v1180 = vpop.f32.mrf.mxu0
      %v1181 = vadd.f32 0.0, %v1180
      %v1182 = vpop.f32.mrf.mxu0
      %v1183 = vadd.f32 0.0, %v1182
      %1184 = vmatmul.bf16.gmra.mxu0 %v1142
      %v1185 = vpop.f32.mrf.mxu0
      %v1186 = vadd.f32 0.0, %v1185
      %v1187 = vpop.f32.mrf.mxu0
      %v1188 = vadd.f32 0.0, %v1187
      %1189 = vmatmul.bf16.gmra.mxu0 %v1145
      %v1190 = vpop.f32.mrf.mxu0
      %v1191 = vadd.f32 0.0, %v1190
      %v1192 = vpop.f32.mrf.mxu0
      %v1193 = vadd.f32 0.0, %v1192
      %1194 = vmatmul.bf16.gmra.mxu0 %v1148
      %v1195 = vpop.f32.mrf.mxu0
      %v1196 = vadd.f32 0.0, %v1195
      %v1197 = vpop.f32.mrf.mxu0
      %v1198 = vadd.f32 0.0, %v1197
      %1199 = vmatmul.bf16.gmra.mxu0 %v1151
      %v1200 = vpop.f32.mrf.mxu0
      %v1201 = vadd.f32 0.0, %v1200
      %v1202 = vpop.f32.mrf.mxu0
      %v1203 = vadd.f32 0.0, %v1202
      %1204 = vdwg.mxu0
      %v1205 = vadd.f32 %v1087, %v1166
      %v1206 = vadd.f32 %v1088, %v1168
      %v1207 = vadd.f32 %v1089, %v1171
      %v1208 = vadd.f32 %v1090, %v1173
      %v1209 = vadd.f32 %v1091, %v1176
      %v1210 = vadd.f32 %v1092, %v1178
      %v1211 = vadd.f32 %v1093, %v1181
      %v1212 = vadd.f32 %v1094, %v1183
      %v1213 = vadd.f32 %v1095, %v1186
      %v1214 = vadd.f32 %v1096, %v1188
      %v1215 = vadd.f32 %v1097, %v1191
      %v1216 = vadd.f32 %v1098, %v1193
      %v1217 = vadd.f32 %v1099, %v1196
      %v1218 = vadd.f32 %v1100, %v1198
      %v1219 = vadd.f32 %v1101, %v1201
      %v1220 = vadd.f32 %v1102, %v1203
      %s1221 = scalar_lea.vmem [#allocation2], 48
      %v1222 = vld [vmem:[%s1221] sm:$0xff]
      %v1223 = vld [vmem:[%s1221 + $0x8] sm:$0xff]
      %v1224 = vld [vmem:[%s1221 + $0x18] sm:$0xff]
      %v1225 = vld [vmem:[%s1221 + $0x20] sm:$0xff]
      %v1226 = vld [vmem:[%s1221 + $0x30] sm:$0xff]
      %v1227 = vld [vmem:[%s1221 + $0x38] sm:$0xff]
      %v1228 = vld [vmem:[%s1221 + $0x48] sm:$0xff]
      %v1229 = vld [vmem:[%s1221 + $0x50] sm:$0xff]
      %v1230 = vld [vmem:[%s1221 + $0x60] sm:$0xff]
      %v1231 = vld [vmem:[%s1221 + $0x68] sm:$0xff]
      %v1232 = vld [vmem:[%s1221 + $0x78] sm:$0xff]
      %v1233 = vld [vmem:[%s1221 + $0x80] sm:$0xff]
      %v1234 = vld [vmem:[%s1221 + $0x90] sm:$0xff]
      %v1235 = vld [vmem:[%s1221 + $0x98] sm:$0xff]
      %v1236 = vld [vmem:[%s1221 + $0xa8] sm:$0xff]
      %v1237 = vld [vmem:[%s1221 + $0xb0] sm:$0xff]
      %v1238 = vpack.c.bf16 %v1223, %v1222
      %v1239 = vpack.c.bf16 %v1225, %v1224
      %v1240 = vpack.c.bf16 %v1227, %v1226
      %v1241 = vpack.c.bf16 %v1229, %v1228
      %v1242 = vpack.c.bf16 %v1231, %v1230
      %v1243 = vpack.c.bf16 %v1233, %v1232
      %v1244 = vpack.c.bf16 %v1235, %v1234
      %v1245 = vpack.c.bf16 %v1237, %v1236
      %s1246 = scalar_lea.vmem %s5, 12
      %v1247 = vld [vmem:[%s1246] sm:$0x3]
      %v1249 = vsel %vm506, %v1238, 0
      %v1252 = vsel %vm506, %v1239, 0
      %v1255 = vsel %vm506, %v1240, 0
      %v1258 = vsel %vm506, %v1241, 0
      %v1261 = vsel %vm506, %v1242, 0
      %v1264 = vsel %vm506, %v1243, 0
      %v1267 = vsel %vm506, %v1244, 0
      %v1270 = vsel %vm506, %v1245, 0
      %v1273 = vsel %vm620, %v1247, 0
      %1275 = vmatpush.bf16.msra.mxu0 0
      %1276 = vmatpush.bf16.msra.mxu0 0
      %1277 = vmatpush.bf16.msra.mxu0 0
      %1278 = vmatpush.bf16.msra.mxu0 0
      %1279 = vmatpush.bf16.msra.mxu0 0
      %1280 = vmatpush.bf16.msra.mxu0 0
      %1281 = vmatpush.bf16.msra.mxu0 0
      %1282 = vmatpush.bf16.msra.mxu0 %v1273
      %1283 = vmatmul.bf16.gmra.mxu0 %v1249
      %v1284 = vpop.f32.mrf.mxu0
      %v1285 = vadd.f32 0.0, %v1284
      %v1286 = vpop.f32.mrf.mxu0
      %v1287 = vadd.f32 0.0, %v1286
      %1288 = vmatmul.bf16.gmra.mxu0 %v1252
      %v1289 = vpop.f32.mrf.mxu0
      %v1290 = vadd.f32 0.0, %v1289
      %v1291 = vpop.f32.mrf.mxu0
      %v1292 = vadd.f32 0.0, %v1291
      %1293 = vmatmul.bf16.gmra.mxu0 %v1255
      %v1294 = vpop.f32.mrf.mxu0
      %v1295 = vadd.f32 0.0, %v1294
      %v1296 = vpop.f32.mrf.mxu0
      %v1297 = vadd.f32 0.0, %v1296
      %1298 = vmatmul.bf16.gmra.mxu0 %v1258
      %v1299 = vpop.f32.mrf.mxu0
      %v1300 = vadd.f32 0.0, %v1299
      %v1301 = vpop.f32.mrf.mxu0
      %v1302 = vadd.f32 0.0, %v1301
      %1303 = vmatmul.bf16.gmra.mxu0 %v1261
      %v1304 = vpop.f32.mrf.mxu0
      %v1305 = vadd.f32 0.0, %v1304
      %v1306 = vpop.f32.mrf.mxu0
      %v1307 = vadd.f32 0.0, %v1306
      %1308 = vmatmul.bf16.gmra.mxu0 %v1264
      %v1309 = vpop.f32.mrf.mxu0
      %v1310 = vadd.f32 0.0, %v1309
      %v1311 = vpop.f32.mrf.mxu0
      %v1312 = vadd.f32 0.0, %v1311
      %1313 = vmatmul.bf16.gmra.mxu0 %v1267
      %v1314 = vpop.f32.mrf.mxu0
      %v1315 = vadd.f32 0.0, %v1314
      %v1316 = vpop.f32.mrf.mxu0
      %v1317 = vadd.f32 0.0, %v1316
      %1318 = vmatmul.bf16.gmra.mxu0 %v1270
      %v1319 = vpop.f32.mrf.mxu0
      %v1320 = vadd.f32 0.0, %v1319
      %v1321 = vpop.f32.mrf.mxu0
      %v1322 = vadd.f32 0.0, %v1321
      %1323 = vdwg.mxu0
      %v1324 = vadd.f32 %v1205, %v1285
      %v1325 = vadd.f32 %v1206, %v1287
      %v1326 = vadd.f32 %v1207, %v1290
      %v1327 = vadd.f32 %v1208, %v1292
      %v1328 = vadd.f32 %v1209, %v1295
      %v1329 = vadd.f32 %v1210, %v1297
      %v1330 = vadd.f32 %v1211, %v1300
      %v1331 = vadd.f32 %v1212, %v1302
      %v1332 = vadd.f32 %v1213, %v1305
      %v1333 = vadd.f32 %v1214, %v1307
      %v1334 = vadd.f32 %v1215, %v1310
      %v1335 = vadd.f32 %v1216, %v1312
      %v1336 = vadd.f32 %v1217, %v1315
      %v1337 = vadd.f32 %v1218, %v1317
      %v1338 = vadd.f32 %v1219, %v1320
      %v1339 = vadd.f32 %v1220, %v1322
      %v1340 = vld [vmem:[%s1221 + $0x1] sm:$0xff]
      %v1341 = vld [vmem:[%s1221 + $0x9] sm:$0xff]
      %v1342 = vld [vmem:[%s1221 + $0x19] sm:$0xff]
      %v1343 = vld [vmem:[%s1221 + $0x21] sm:$0xff]
      %v1344 = vld [vmem:[%s1221 + $0x31] sm:$0xff]
      %v1345 = vld [vmem:[%s1221 + $0x39] sm:$0xff]
      %v1346 = vld [vmem:[%s1221 + $0x49] sm:$0xff]
      %v1347 = vld [vmem:[%s1221 + $0x51] sm:$0xff]
      %v1348 = vld [vmem:[%s1221 + $0x61] sm:$0xff]
      %v1349 = vld [vmem:[%s1221 + $0x69] sm:$0xff]
      %v1350 = vld [vmem:[%s1221 + $0x79] sm:$0xff]
      %v1351 = vld [vmem:[%s1221 + $0x81] sm:$0xff]
      %v1352 = vld [vmem:[%s1221 + $0x91] sm:$0xff]
      %v1353 = vld [vmem:[%s1221 + $0x99] sm:$0xff]
      %v1354 = vld [vmem:[%s1221 + $0xa9] sm:$0xff]
      %v1355 = vld [vmem:[%s1221 + $0xb1] sm:$0xff]
      %v1356 = vpack.c.bf16 %v1341, %v1340
      %v1357 = vpack.c.bf16 %v1343, %v1342
      %v1358 = vpack.c.bf16 %v1345, %v1344
      %v1359 = vpack.c.bf16 %v1347, %v1346
      %v1360 = vpack.c.bf16 %v1349, %v1348
      %v1361 = vpack.c.bf16 %v1351, %v1350
      %v1362 = vpack.c.bf16 %v1353, %v1352
      %v1363 = vpack.c.bf16 %v1355, %v1354
      %s1364 = scalar_lea.vmem %s5, 14
      %v1365 = vld [vmem:[%s1364] sm:$0x3]
      %v1367 = vsel %vm506, %v1356, 0
      %v1370 = vsel %vm506, %v1357, 0
      %v1373 = vsel %vm506, %v1358, 0
      %v1376 = vsel %vm506, %v1359, 0
      %v1379 = vsel %vm506, %v1360, 0
      %v1382 = vsel %vm506, %v1361, 0
      %v1385 = vsel %vm506, %v1362, 0
      %v1388 = vsel %vm506, %v1363, 0
      %v1391 = vsel %vm620, %v1365, 0
      %1393 = vmatpush.bf16.msra.mxu0 0
      %1394 = vmatpush.bf16.msra.mxu0 0
      %1395 = vmatpush.bf16.msra.mxu0 0
      %1396 = vmatpush.bf16.msra.mxu0 0
      %1397 = vmatpush.bf16.msra.mxu0 0
      %1398 = vmatpush.bf16.msra.mxu0 0
      %1399 = vmatpush.bf16.msra.mxu0 0
      %1400 = vmatpush.bf16.msra.mxu0 %v1391
      %1401 = vmatmul.bf16.gmra.mxu0 %v1367
      %v1402 = vpop.f32.mrf.mxu0
      %v1403 = vadd.f32 0.0, %v1402
      %v1404 = vpop.f32.mrf.mxu0
      %v1405 = vadd.f32 0.0, %v1404
      %1406 = vmatmul.bf16.gmra.mxu0 %v1370
      %v1407 = vpop.f32.mrf.mxu0
      %v1408 = vadd.f32 0.0, %v1407
      %v1409 = vpop.f32.mrf.mxu0
      %v1410 = vadd.f32 0.0, %v1409
      %1411 = vmatmul.bf16.gmra.mxu0 %v1373
      %v1412 = vpop.f32.mrf.mxu0
      %v1413 = vadd.f32 0.0, %v1412
      %v1414 = vpop.f32.mrf.mxu0
      %v1415 = vadd.f32 0.0, %v1414
      %1416 = vmatmul.bf16.gmra.mxu0 %v1376
      %v1417 = vpop.f32.mrf.mxu0
      %v1418 = vadd.f32 0.0, %v1417
      %v1419 = vpop.f32.mrf.mxu0
      %v1420 = vadd.f32 0.0, %v1419
      %1421 = vmatmul.bf16.gmra.mxu0 %v1379
      %v1422 = vpop.f32.mrf.mxu0
      %v1423 = vadd.f32 0.0, %v1422
      %v1424 = vpop.f32.mrf.mxu0
      %v1425 = vadd.f32 0.0, %v1424
      %1426 = vmatmul.bf16.gmra.mxu0 %v1382
      %v1427 = vpop.f32.mrf.mxu0
      %v1428 = vadd.f32 0.0, %v1427
      %v1429 = vpop.f32.mrf.mxu0
      %v1430 = vadd.f32 0.0, %v1429
      %1431 = vmatmul.bf16.gmra.mxu0 %v1385
      %v1432 = vpop.f32.mrf.mxu0
      %v1433 = vadd.f32 0.0, %v1432
      %v1434 = vpop.f32.mrf.mxu0
      %v1435 = vadd.f32 0.0, %v1434
      %1436 = vmatmul.bf16.gmra.mxu0 %v1388
      %v1437 = vpop.f32.mrf.mxu0
      %v1438 = vadd.f32 0.0, %v1437
      %v1439 = vpop.f32.mrf.mxu0
      %v1440 = vadd.f32 0.0, %v1439
      %1441 = vdwg.mxu0
      %v1442 = vadd.f32 %v1324, %v1403
      %v1443 = vadd.f32 %v1325, %v1405
      %v1444 = vadd.f32 %v1326, %v1408
      %v1445 = vadd.f32 %v1327, %v1410
      %v1446 = vadd.f32 %v1328, %v1413
      %v1447 = vadd.f32 %v1329, %v1415
      %v1448 = vadd.f32 %v1330, %v1418
      %v1449 = vadd.f32 %v1331, %v1420
      %v1450 = vadd.f32 %v1332, %v1423
      %v1451 = vadd.f32 %v1333, %v1425
      %v1452 = vadd.f32 %v1334, %v1428
      %v1453 = vadd.f32 %v1335, %v1430
      %v1454 = vadd.f32 %v1336, %v1433
      %v1455 = vadd.f32 %v1337, %v1435
      %v1456 = vadd.f32 %v1338, %v1438
      %v1457 = vadd.f32 %v1339, %v1440
      %v1458 = vld [vmem:[%s1221 + $0x2] sm:$0xff]
      %v1459 = vld [vmem:[%s1221 + $0xa] sm:$0xff]
      %v1460 = vld [vmem:[%s1221 + $0x1a] sm:$0xff]
      %v1461 = vld [vmem:[%s1221 + $0x22] sm:$0xff]
      %v1462 = vld [vmem:[%s1221 + $0x32] sm:$0xff]
      %v1463 = vld [vmem:[%s1221 + $0x3a] sm:$0xff]
      %v1464 = vld [vmem:[%s1221 + $0x4a] sm:$0xff]
      %v1465 = vld [vmem:[%s1221 + $0x52] sm:$0xff]
      %v1466 = vld [vmem:[%s1221 + $0x62] sm:$0xff]
      %v1467 = vld [vmem:[%s1221 + $0x6a] sm:$0xff]
      %v1468 = vld [vmem:[%s1221 + $0x7a] sm:$0xff]
      %v1469 = vld [vmem:[%s1221 + $0x82] sm:$0xff]
      %v1470 = vld [vmem:[%s1221 + $0x92] sm:$0xff]
      %v1471 = vld [vmem:[%s1221 + $0x9a] sm:$0xff]
      %v1472 = vld [vmem:[%s1221 + $0xaa] sm:$0xff]
      %v1473 = vld [vmem:[%s1221 + $0xb2] sm:$0xff]
      %v1474 = vpack.c.bf16 %v1459, %v1458
      %v1475 = vpack.c.bf16 %v1461, %v1460
      %v1476 = vpack.c.bf16 %v1463, %v1462
      %v1477 = vpack.c.bf16 %v1465, %v1464
      %v1478 = vpack.c.bf16 %v1467, %v1466
      %v1479 = vpack.c.bf16 %v1469, %v1468
      %v1480 = vpack.c.bf16 %v1471, %v1470
      %v1481 = vpack.c.bf16 %v1473, %v1472
      %s1482 = scalar_lea.vmem %s5, 16
      %v1483 = vld [vmem:[%s1482] sm:$0x3]
      %v1485 = vsel %vm506, %v1474, 0
      %v1488 = vsel %vm506, %v1475, 0
      %v1491 = vsel %vm506, %v1476, 0
      %v1494 = vsel %vm506, %v1477, 0
      %v1497 = vsel %vm506, %v1478, 0
      %v1500 = vsel %vm506, %v1479, 0
      %v1503 = vsel %vm506, %v1480, 0
      %v1506 = vsel %vm506, %v1481, 0
      %v1509 = vsel %vm620, %v1483, 0
      %1511 = vmatpush.bf16.msra.mxu0 0
      %1512 = vmatpush.bf16.msra.mxu0 0
      %1513 = vmatpush.bf16.msra.mxu0 0
      %1514 = vmatpush.bf16.msra.mxu0 0
      %1515 = vmatpush.bf16.msra.mxu0 0
      %1516 = vmatpush.bf16.msra.mxu0 0
      %1517 = vmatpush.bf16.msra.mxu0 0
      %1518 = vmatpush.bf16.msra.mxu0 %v1509
      %1519 = vmatmul.bf16.gmra.mxu0 %v1485
      %v1520 = vpop.f32.mrf.mxu0
      %v1521 = vadd.f32 0.0, %v1520
      %v1522 = vpop.f32.mrf.mxu0
      %v1523 = vadd.f32 0.0, %v1522
      %1524 = vmatmul.bf16.gmra.mxu0 %v1488
      %v1525 = vpop.f32.mrf.mxu0
      %v1526 = vadd.f32 0.0, %v1525
      %v1527 = vpop.f32.mrf.mxu0
      %v1528 = vadd.f32 0.0, %v1527
      %1529 = vmatmul.bf16.gmra.mxu0 %v1491
      %v1530 = vpop.f32.mrf.mxu0
      %v1531 = vadd.f32 0.0, %v1530
      %v1532 = vpop.f32.mrf.mxu0
      %v1533 = vadd.f32 0.0, %v1532
      %1534 = vmatmul.bf16.gmra.mxu0 %v1494
      %v1535 = vpop.f32.mrf.mxu0
      %v1536 = vadd.f32 0.0, %v1535
      %v1537 = vpop.f32.mrf.mxu0
      %v1538 = vadd.f32 0.0, %v1537
      %1539 = vmatmul.bf16.gmra.mxu0 %v1497
      %v1540 = vpop.f32.mrf.mxu0
      %v1541 = vadd.f32 0.0, %v1540
      %v1542 = vpop.f32.mrf.mxu0
      %v1543 = vadd.f32 0.0, %v1542
      %1544 = vmatmul.bf16.gmra.mxu0 %v1500
      %v1545 = vpop.f32.mrf.mxu0
      %v1546 = vadd.f32 0.0, %v1545
      %v1547 = vpop.f32.mrf.mxu0
      %v1548 = vadd.f32 0.0, %v1547
      %1549 = vmatmul.bf16.gmra.mxu0 %v1503
      %v1550 = vpop.f32.mrf.mxu0
      %v1551 = vadd.f32 0.0, %v1550
      %v1552 = vpop.f32.mrf.mxu0
      %v1553 = vadd.f32 0.0, %v1552
      %1554 = vmatmul.bf16.gmra.mxu0 %v1506
      %v1555 = vpop.f32.mrf.mxu0
      %v1556 = vadd.f32 0.0, %v1555
      %v1557 = vpop.f32.mrf.mxu0
      %v1558 = vadd.f32 0.0, %v1557
      %1559 = vdwg.mxu0
      %v1560 = vadd.f32 %v1442, %v1521
      %v1561 = vadd.f32 %v1443, %v1523
      %v1562 = vadd.f32 %v1444, %v1526
      %v1563 = vadd.f32 %v1445, %v1528
      %v1564 = vadd.f32 %v1446, %v1531
      %v1565 = vadd.f32 %v1447, %v1533
      %v1566 = vadd.f32 %v1448, %v1536
      %v1567 = vadd.f32 %v1449, %v1538
      %v1568 = vadd.f32 %v1450, %v1541
      %v1569 = vadd.f32 %v1451, %v1543
      %v1570 = vadd.f32 %v1452, %v1546
      %v1571 = vadd.f32 %v1453, %v1548
      %v1572 = vadd.f32 %v1454, %v1551
      %v1573 = vadd.f32 %v1455, %v1553
      %v1574 = vadd.f32 %v1456, %v1556
      %v1575 = vadd.f32 %v1457, %v1558
      %1576 = vst [vmem:[%s458] sm:$0xff] %v1560
      %1577 = vst [vmem:[%s458 + $0x8] sm:$0xff] %v1561
      %1578 = vst [vmem:[%s458 + $0x10] sm:$0xff] %v1562
      %1579 = vst [vmem:[%s458 + $0x18] sm:$0xff] %v1563
      %1580 = vst [vmem:[%s458 + $0x20] sm:$0xff] %v1564
      %1581 = vst [vmem:[%s458 + $0x28] sm:$0xff] %v1565
      %1582 = vst [vmem:[%s458 + $0x30] sm:$0xff] %v1566
      %1583 = vst [vmem:[%s458 + $0x38] sm:$0xff] %v1567
      %1584 = vst [vmem:[%s458 + $0x40] sm:$0xff] %v1568
      %1585 = vst [vmem:[%s458 + $0x48] sm:$0xff] %v1569
      %1586 = vst [vmem:[%s458 + $0x50] sm:$0xff] %v1570
      %1587 = vst [vmem:[%s458 + $0x58] sm:$0xff] %v1571
      %1588 = vst [vmem:[%s458 + $0x60] sm:$0xff] %v1572
      %1589 = vst [vmem:[%s458 + $0x68] sm:$0xff] %v1573
      %1590 = vst [vmem:[%s458 + $0x70] sm:$0xff] %v1574
      %1591 = vst [vmem:[%s458 + $0x78] sm:$0xff] %v1575
      %1592 = vmatpush.msra.mxu0 %v1575
      %1593 = vmatpush.msra.mxu0 %v1574
      %1594 = vmatpush.msra.mxu0 %v1573
      %1595 = vmatpush.msra.mxu0 %v1572
      %1596 = vmatpush.msra.mxu0 %v1571
      %1597 = vmatpush.msra.mxu0 %v1570
      %1598 = vmatpush.msra.mxu0 %v1569
      %1599 = vmatpush.msra.mxu0 %v1568
      %1600 = vmatpush.msra.mxu0 %v1567
      %1601 = vmatpush.msra.mxu0 %v1566
      %1602 = vmatpush.msra.mxu0 %v1565
      %1603 = vmatpush.msra.mxu0 %v1564
      %1604 = vmatpush.msra.mxu0 %v1563
      %1605 = vmatpush.msra.mxu0 %v1562
      %1606 = vmatpush.msra.mxu0 %v1561
      %1607 = vmatpush.msra.mxu0 %v1560
      %1608 = vmatmul.f32.gmra.mxu0 1.0
      %v1609 = vpop.f32.mrf.mxu0
      %v1610 = vadd.f32 0.0, %v1609
      %1611 = vdwg.mxu0
      %v1612 = vmul.f32 %v1560, %v1560
      %v1613 = vmul.f32 %v1561, %v1561
      %v1614 = vmul.f32 %v1562, %v1562
      %v1615 = vmul.f32 %v1563, %v1563
      %v1616 = vmul.f32 %v1564, %v1564
      %v1617 = vmul.f32 %v1565, %v1565
      %v1618 = vmul.f32 %v1566, %v1566
      %v1619 = vmul.f32 %v1567, %v1567
      %v1620 = vmul.f32 %v1568, %v1568
      %v1621 = vmul.f32 %v1569, %v1569
      %v1622 = vmul.f32 %v1570, %v1570
      %v1623 = vmul.f32 %v1571, %v1571
      %v1624 = vmul.f32 %v1572, %v1572
      %v1625 = vmul.f32 %v1573, %v1573
      %v1626 = vmul.f32 %v1574, %v1574
      %v1627 = vmul.f32 %v1575, %v1575
      %1628 = vmatpush.msra.mxu0 %v1627
      %1629 = vmatpush.msra.mxu0 %v1626
      %1630 = vmatpush.msra.mxu0 %v1625
      %1631 = vmatpush.msra.mxu0 %v1624
      %1632 = vmatpush.msra.mxu0 %v1623
      %1633 = vmatpush.msra.mxu0 %v1622
      %1634 = vmatpush.msra.mxu0 %v1621
      %1635 = vmatpush.msra.mxu0 %v1620
      %1636 = vmatpush.msra.mxu0 %v1619
      %1637 = vmatpush.msra.mxu0 %v1618
      %1638 = vmatpush.msra.mxu0 %v1617
      %1639 = vmatpush.msra.mxu0 %v1616
      %1640 = vmatpush.msra.mxu0 %v1615
      %1641 = vmatpush.msra.mxu0 %v1614
      %1642 = vmatpush.msra.mxu0 %v1613
      %1643 = vmatpush.msra.mxu0 %v1612
      %1644 = vmatmul.f32.gmra.mxu0 1.0
      %v1645 = vpop.f32.mrf.mxu0
      %v1646 = vadd.f32 0.0, %v1645
      %1647 = vdwg.mxu0
      %v1649 = vrot.slane %v1646, 7
      %vm1651 = vcmask 1040384
      %v1652 = vsel %vm1651, %v1610, %v1649
      %1653 = vst [vmem:[%s467] sm:$0x3] %v1652
      %s1654 = smul.u32 8, %s24
      %p1655 = scmp.lt.s32.totalorder %s23, 1
      %s1656 = scalar_select %p1655, %s23, 1
      %p1657 = scmp.lt.s32.totalorder %s1654, 15
      %s1658 = scalar_select %p1657, %s1654, 15
      %s1659 = smul.addr %s1658, 2
      %s1660 = smul.addr %s1656, 32
      %s1661 = sadd.s32 %s1659, %s1660
      %s1662 = smul.addr %s1661, 8
      %s1663 = scalar_lea.vmem %s6, %s1662
      %p1664 = scmp.lt.s32.totalorder %s23, 1
      %s1665 = scalar_select %p1664, %s23, 1
      %p1666 = scmp.lt.s32.totalorder %s24, 1
      %s1667 = scalar_select %p1666, %s24, 1
      %s1668 = smul.addr %s1665, 2
      %s1669 = sadd.s32 %s1667, %s1668
      %s1670 = smul.addr %s1669, 2
      %s1671 = scalar_lea.vmem %s7, %s1670
      // Predicated region
      $region45: #{double_conv.3} parent=43 // pred_check
        %p1672 = pneg %p214
      $region46: #{double_conv.3} parent=43 // pred_check_branch
        %1674 = sbr.rel (%p1672) target = $region48
      $region47: #{double_conv.3} parent=43 // pred_region
        %s1675 = smul.u32 8, %s24
      $region48: #{double_conv.3} parent=43 // pred_fallthru
        _
      // Predicated region
      $region49: #{double_conv.3} parent=43 // pred_check
        %p1676 = pneg %p242
      $region50: #{double_conv.3} parent=43 // pred_check_branch
        %1678 = sbr.rel (%p1676) target = $region52
      $region51: #{double_conv.3} parent=43 // pred_region
        _
      $region52: #{double_conv.3} parent=43 // pred_fallthru
        _
    $region44: #{double_conv.3} parent=5 // pred_fallthru
      _
    %p1679 = scmp.le.s32.totalorder 2, %s14
    // Predicated region
    $region53: #{double_conv.3} parent=5 // pred_check
      %p1680 = pneg %p1679
    $region54: #{double_conv.3} parent=5 // pred_check_branch
      %1682 = sbr.rel (%p1680) target = $region56
    $region55: #{double_conv.3} parent=5 // pred_region
      %s1683 = ssub.s32 %s14, 2
      // Predicated region
      $region57: #{double_conv.3} parent=55 // pred_check
        %p1684 = pneg %p220
      $region58: #{double_conv.3} parent=55 // pred_check_branch
        %1686 = sbr.rel (%p1684) target = $region60
      $region59: #{double_conv.3} parent=55 // pred_region
        %s1687 = smul.u32 8, %s26
        %p1688 = scmp.lt.s32.totalorder %s25, 1
        %s1689 = scalar_select %p1688, %s25, 1
        %p1690 = scmp.lt.s32.totalorder %s1687, 15
        %s1691 = scalar_select %p1690, %s1687, 15
        %s1692 = smul.addr %s1691, 2
        %s1693 = smul.addr %s1689, 32
        %s1694 = sadd.s32 %s1692, %s1693
        %s1695 = smul.addr %s1694, 8
        %s1696 = scalar_lea.vmem %s6, %s1695
      $region60: #{double_conv.3} parent=55 // pred_fallthru
        _
      // Predicated region
      $region61: #{double_conv.3} parent=55 // pred_check
        %p1697 = pneg %p248
      $region62: #{double_conv.3} parent=55 // pred_check_branch
        %1699 = sbr.rel (%p1697) target = $region64
      $region63: #{double_conv.3} parent=55 // pred_region
        %p1700 = scmp.lt.s32.totalorder %s25, 1
        %s1701 = scalar_select %p1700, %s25, 1
        %p1702 = scmp.lt.s32.totalorder %s26, 1
        %s1703 = scalar_select %p1702, %s26, 1
        %s1704 = smul.addr %s1701, 2
        %s1705 = sadd.s32 %s1703, %s1704
        %s1706 = smul.addr %s1705, 2
        %s1707 = scalar_lea.vmem %s7, %s1706
      $region64: #{double_conv.3} parent=55 // pred_fallthru
        _
    $region56: #{double_conv.3} parent=5 // pred_fallthru
      _
  $region6: #{double_conv.3} parent=0 // loop_footer
    %s18 = sadd.s32 1, %s14
  $region7: #{double_conv.3} parent=0 // loop_footer_branch
    %13 = sbr.rel target = $region3
  $region8: #{double_conv.3} parent=0 // loop_exit
    _

// kernel: double_conv.4
$region0: #{double_conv.4}
  #allocation0 [shape = 'u32[]', space=smem, size = 0x4, offset = 0x4, fixed_abs, tag = 'smem constant byte address 0x4 - core index']
  #allocation1 [shape = 'u32[72,128]{1,0:T(1,128)}', space=vmem, size = 0x9000, scoped, tag = 'internal scratch']
  #allocation2 [shape = 'f32[10,18,128]{2,1,0:T(8,128)}', space=vmem, size = 0x1e000, scoped, tag = 'scratch operand']
  %s0 = inlined_call_operand.vmem [shape: f32[1,128], index: 0, kind: input, shape index: {}]
  %s1 = inlined_call_operand.vmem [shape: f32[1,128], index: 1, kind: input, shape index: {}]
  %s2 = inlined_call_operand.vmem [shape: f32[2,16,16,128], index: 2, kind: input, shape index: {}, may-alias: {2,3,4}]
  %s3 = inlined_call_operand.vmem [shape: f32[2,16,16,128], index: 3, kind: input, shape index: {}, may-alias: {2,3,4}]
  %s4 = inlined_call_operand.vmem [shape: f32[2,16,16,128], index: 4, kind: input, shape index: {}, may-alias: {2,3,4}]
  %s5 = inlined_call_operand.vmem [shape: bf16[3,3,128,128], index: 5, kind: input, shape index: {}]
  %s6 = inlined_call_operand.vmem [shape: f32[2,16,16,128], index: 6, kind: output, shape index: {0}]
  %s7 = inlined_call_operand.vmem [shape: f32[2,2,2,128], index: 7, kind: output, shape index: {1}]
  %8 = xla_tuple %s6, %s7
  %s9 = sld [smem:[#allocation0]]
  $region65: #{double_conv.4} parent=0
    _
  %s11 = ssub.s32 1, %s9
  %s12 = scalar_select 0, %s11, %s9
  loop: start=0, step=1, limit=6
  $region2: #{double_conv.4} parent=0 // loop_pre_header
    _
  $region3: #{double_conv.4} parent=0 // loop_header
    %s14 = sphi 0, %s18
    %p15 = scmp.ge.s32.totalorder %s14, 6
    %s21 = sphi 0, %s33
    %s22 = sphi 0, %s29
    %s23 = sphi 0, %s21
    %s24 = sphi 0, %s22
    %s25 = sphi 0, %s23
    %s26 = sphi 0, %s24
    %s34 = sphi 0, %s34
    %s36 = sphi 0, %s34
    %s37 = sphi 0, %s36
    %s51 = sphi 0, %s37
    %s55 = sphi 0, %s55
    %s57 = sphi 0, %s55
    %s58 = sphi 0, %s57
    %s72 = sphi 0, %s58
    %s80 = sphi 0, %s82
    %s83 = sphi 0, %s80
    %s84 = sphi 0, %s83
    %s100 = sphi 0, %s84
    %s116 = sphi 0, %s118
    %s119 = sphi 0, %s116
    %s120 = sphi 0, %s119
    %s136 = sphi 0, %s120
    %s152 = sphi 0, %s154
    %s155 = sphi 0, %s152
    %s156 = sphi 0, %s155
    %s172 = sphi 0, %s156
    %s176 = sphi 0, %s176
    %s178 = sphi 0, %s176
    %s179 = sphi 0, %s178
    %s193 = sphi 0, %s179
    %s201 = sphi 0, %s203
    %s204 = sphi 0, %s201
    %s205 = sphi 0, %s204
    %s221 = sphi 0, %s205
    %s229 = sphi 0, %s231
    %s232 = sphi 0, %s229
    %s233 = sphi 0, %s232
    %s249 = sphi 0, %s233
  $region4: #{double_conv.4} parent=0 // loop_header_branch
    %17 = sbr.rel (%p15) target = $region8
  $region5: #{double_conv.4} parent=0 // loop_body
    %s19 = ssub.s32 %s14, 1
    %s20 = ssub.s32 %s14, 2
    %s27 = sadd.s32 1, %s22
    %p28 = scmp.ge.s32.totalorder %s27, 2
    %s29 = scalar_select %p28, 0, %s27
    %s30 = sadd.s32 1, %s21
    %s31 = scalar_select %p28, %s30, %s21
    %p32 = scmp.ge.s32.totalorder %s31, 2
    %s33 = scalar_select %p32, 0, %s31
    %s35 = sadd.s32 %s34, 1
    %p38 = scmp.eq.s32.totalorder %s14, 3
    %p39 = scmp.ne.s32.totalorder %s34, %s36
    %p40 = scmp.eq.s32.totalorder %s14, 0
    %p41 = por %p39, %p40
    %p42 = scmp.ne.s32.totalorder %s34, %s36
    %p43 = scmp.eq.s32.totalorder %s19, 3
    %p44 = por %p42, %p43
    %p45 = scmp.ne.s32.totalorder %s36, %s37
    %p46 = scmp.eq.s32.totalorder %s19, 0
    %p47 = por %p45, %p46
    %p48 = scmp.ne.s32.totalorder %s36, %s37
    %p49 = scmp.eq.s32.totalorder %s20, 3
    %p50 = por %p48, %p49
    %p52 = scmp.ne.s32.totalorder %s37, %s51
    %p53 = scmp.eq.s32.totalorder %s20, 0
    %p54 = por %p52, %p53
    %s56 = sadd.s32 %s55, 1
    %p59 = scmp.eq.s32.totalorder %s14, 3
    %p60 = scmp.ne.s32.totalorder %s55, %s57
    %p61 = scmp.eq.s32.totalorder %s14, 0
    %p62 = por %p60, %p61
    %p63 = scmp.ne.s32.totalorder %s55, %s57
    %p64 = scmp.eq.s32.totalorder %s19, 3
    %p65 = por %p63, %p64
    %p66 = scmp.ne.s32.totalorder %s57, %s58
    %p67 = scmp.eq.s32.totalorder %s19, 0
    %p68 = por %p66, %p67
    %p69 = scmp.ne.s32.totalorder %s57, %s58
    %p70 = scmp.eq.s32.totalorder %s20, 3
    %p71 = por %p69, %p70
    %p73 = scmp.ne.s32.totalorder %s58, %s72
    %p74 = scmp.eq.s32.totalorder %s20, 0
    %p75 = por %p73, %p74
    %s76 = ssub.s32 %s21, %s33
    %s77 = ssub.s32 %s22, %s29
    %s78 = sor.u32 %s76, %s77
    %p79 = scmp.eq.s32.totalorder %s78, 0
    %s81 = sadd.s32 %s80, 1
    %s82 = scalar_select %p79, %s80, %s81
    %p85 = pneg %p79
    %p86 = scmp.eq.s32.totalorder %s14, 3
    %p87 = por %p85, %p86
    %p88 = scmp.ne.s32.totalorder %s80, %s83
    %p89 = scmp.eq.s32.totalorder %s14, 0
    %p90 = por %p88, %p89
    %p91 = scmp.ne.s32.totalorder %s80, %s83
    %p92 = scmp.eq.s32.totalorder %s19, 3
    %p93 = por %p91, %p92
    %p94 = scmp.ne.s32.totalorder %s83, %s84
    %p95 = scmp.eq.s32.totalorder %s19, 0
    %p96 = por %p94, %p95
    %p97 = scmp.ne.s32.totalorder %s83, %s84
    %p98 = scmp.eq.s32.totalorder %s20, 3
    %p99 = por %p97, %p98
    %p101 = scmp.ne.s32.totalorder %s84, %s100
    %p102 = scmp.eq.s32.totalorder %s20, 0
    %p103 = por %p101, %p102
    %s104 = smul.u32 %s22, 8
    %s105 = ssub.s32 %s104, 1
    %p106 = scmp.gt.s32.totalorder %s105, 0
    %s107 = scalar_select %p106, %s105, 0
    %s108 = smul.u32 %s29, 8
    %s109 = ssub.s32 %s108, 1
    %p110 = scmp.gt.s32.totalorder %s109, 0
    %s111 = scalar_select %p110, %s109, 0
    %s112 = ssub.s32 %s21, %s33
    %s113 = ssub.s32 %s107, %s111
    %s114 = sor.u32 %s112, %s113
    %p115 = scmp.eq.s32.totalorder %s114, 0
    %s117 = sadd.s32 %s116, 1
    %s118 = scalar_select %p115, %s116, %s117
    %p121 = pneg %p115
    %p122 = scmp.eq.s32.totalorder %s14, 3
    %p123 = por %p121, %p122
    %p124 = scmp.ne.s32.totalorder %s116, %s119
    %p125 = scmp.eq.s32.totalorder %s14, 0
    %p126 = por %p124, %p125
    %p127 = scmp.ne.s32.totalorder %s116, %s119
    %p128 = scmp.eq.s32.totalorder %s19, 3
    %p129 = por %p127, %p128
    %p130 = scmp.ne.s32.totalorder %s119, %s120
    %p131 = scmp.eq.s32.totalorder %s19, 0
    %p132 = por %p130, %p131
    %p133 = scmp.ne.s32.totalorder %s119, %s120
    %p134 = scmp.eq.s32.totalorder %s20, 3
    %p135 = por %p133, %p134
    %p137 = scmp.ne.s32.totalorder %s120, %s136
    %p138 = scmp.eq.s32.totalorder %s20, 0
    %p139 = por %p137, %p138
    %s140 = sadd.s32 %s22, 1
    %s141 = smul.u32 %s140, 8
    %p142 = scmp.lt.s32.totalorder %s141, 15
    %s143 = scalar_select %p142, %s141, 15
    %s144 = sadd.s32 %s29, 1
    %s145 = smul.u32 %s144, 8
    %p146 = scmp.lt.s32.totalorder %s145, 15
    %s147 = scalar_select %p146, %s145, 15
    %s148 = ssub.s32 %s21, %s33
    %s149 = ssub.s32 %s143, %s147
    %s150 = sor.u32 %s148, %s149
    %p151 = scmp.eq.s32.totalorder %s150, 0
    %s153 = sadd.s32 %s152, 1
    %s154 = scalar_select %p151, %s152, %s153
    %p157 = pneg %p151
    %p158 = scmp.eq.s32.totalorder %s14, 3
    %p159 = por %p157, %p158
    %p160 = scmp.ne.s32.totalorder %s152, %s155
    %p161 = scmp.eq.s32.totalorder %s14, 0
    %p162 = por %p160, %p161
    %p163 = scmp.ne.s32.totalorder %s152, %s155
    %p164 = scmp.eq.s32.totalorder %s19, 3
    %p165 = por %p163, %p164
    %p166 = scmp.ne.s32.totalorder %s155, %s156
    %p167 = scmp.eq.s32.totalorder %s19, 0
    %p168 = por %p166, %p167
    %p169 = scmp.ne.s32.totalorder %s155, %s156
    %p170 = scmp.eq.s32.totalorder %s20, 3
    %p171 = por %p169, %p170
    %p173 = scmp.ne.s32.totalorder %s156, %s172
    %p174 = scmp.eq.s32.totalorder %s20, 0
    %p175 = por %p173, %p174
    %s177 = sadd.s32 %s176, 1
    %p180 = scmp.eq.s32.totalorder %s14, 3
    %p181 = scmp.ne.s32.totalorder %s176, %s178
    %p182 = scmp.eq.s32.totalorder %s14, 0
    %p183 = por %p181, %p182
    %p184 = scmp.ne.s32.totalorder %s176, %s178
    %p185 = scmp.eq.s32.totalorder %s19, 3
    %p186 = por %p184, %p185
    %p187 = scmp.ne.s32.totalorder %s178, %s179
    %p188 = scmp.eq.s32.totalorder %s19, 0
    %p189 = por %p187, %p188
    %p190 = scmp.ne.s32.totalorder %s178, %s179
    %p191 = scmp.eq.s32.totalorder %s20, 3
    %p192 = por %p190, %p191
    %p194 = scmp.ne.s32.totalorder %s179, %s193
    %p195 = scmp.eq.s32.totalorder %s20, 0
    %p196 = por %p194, %p195
    %s197 = ssub.s32 %s21, %s33
    %s198 = ssub.s32 %s22, %s29
    %s199 = sor.u32 %s197, %s198
    %p200 = scmp.eq.s32.totalorder %s199, 0
    %s202 = sadd.s32 %s201, 1
    %s203 = scalar_select %p200, %s201, %s202
    %p206 = pneg %p200
    %p207 = scmp.eq.s32.totalorder %s14, 3
    %p208 = por %p206, %p207
    %p209 = scmp.ne.s32.totalorder %s201, %s204
    %p210 = scmp.eq.s32.totalorder %s14, 0
    %p211 = por %p209, %p210
    %p212 = scmp.ne.s32.totalorder %s201, %s204
    %p213 = scmp.eq.s32.totalorder %s19, 3
    %p214 = por %p212, %p213
    %p215 = scmp.ne.s32.totalorder %s204, %s205
    %p216 = scmp.eq.s32.totalorder %s19, 0
    %p217 = por %p215, %p216
    %p218 = scmp.ne.s32.totalorder %s204, %s205
    %p219 = scmp.eq.s32.totalorder %s20, 3
    %p220 = por %p218, %p219
    %p222 = scmp.ne.s32.totalorder %s205, %s221
    %p223 = scmp.eq.s32.totalorder %s20, 0
    %p224 = por %p222, %p223
    %s225 = ssub.s32 %s21, %s33
    %s226 = ssub.s32 %s22, %s29
    %s227 = sor.u32 %s225, %s226
    %p228 = scmp.eq.s32.totalorder %s227, 0
    %s230 = sadd.s32 %s229, 1
    %s231 = scalar_select %p228, %s229, %s230
    %p234 = pneg %p228
    %p235 = scmp.eq.s32.totalorder %s14, 3
    %p236 = por %p234, %p235
    %p237 = scmp.ne.s32.totalorder %s229, %s232
    %p238 = scmp.eq.s32.totalorder %s14, 0
    %p239 = por %p237, %p238
    %p240 = scmp.ne.s32.totalorder %s229, %s232
    %p241 = scmp.eq.s32.totalorder %s19, 3
    %p242 = por %p240, %p241
    %p243 = scmp.ne.s32.totalorder %s232, %s233
    %p244 = scmp.eq.s32.totalorder %s19, 0
    %p245 = por %p243, %p244
    %p246 = scmp.ne.s32.totalorder %s232, %s233
    %p247 = scmp.eq.s32.totalorder %s20, 3
    %p248 = por %p246, %p247
    %p250 = scmp.ne.s32.totalorder %s233, %s249
    %p251 = scmp.eq.s32.totalorder %s20, 0
    %p252 = por %p250, %p251
    %p253 = scmp.le.s32.totalorder 1, %s14
    %p254 = scmp.lt.s32.totalorder %s14, 5
    %p255 = pnand %p253, %p254
    %p256 = pneg %p255
    // Predicated region
    $region9: #{double_conv.4} parent=5 // pred_check
      _
    $region10: #{double_conv.4} parent=5 // pred_check_branch
      %258 = sbr.rel (%p255) target = $region12
    $region11: #{double_conv.4} parent=5 // pred_region
      %s259 = ssub.s32 %s14, 1
      // Predicated region
      $region13: #{double_conv.4} parent=11 // pred_check
        %p260 = pneg %p47
      $region14: #{double_conv.4} parent=11 // pred_check_branch
        %262 = sbr.rel (%p260) target = $region16
      $region15: #{double_conv.4} parent=11 // pred_region
        _
      $region16: #{double_conv.4} parent=11 // pred_fallthru
        _
      // Predicated region
      $region17: #{double_conv.4} parent=11 // pred_check
        %p263 = pneg %p68
      $region18: #{double_conv.4} parent=11 // pred_check_branch
        %265 = sbr.rel (%p263) target = $region20
      $region19: #{double_conv.4} parent=11 // pred_region
        _
      $region20: #{double_conv.4} parent=11 // pred_fallthru
        _
      // Predicated region
      $region21: #{double_conv.4} parent=11 // pred_check
        %p266 = pneg %p189
      $region22: #{double_conv.4} parent=11 // pred_check_branch
        %268 = sbr.rel (%p266) target = $region24
      $region23: #{double_conv.4} parent=11 // pred_region
        _
      $region24: #{double_conv.4} parent=11 // pred_fallthru
        _
    $region12: #{double_conv.4} parent=5 // pred_fallthru
      _
    %p269 = scmp.lt.s32.totalorder %s14, 4
    // Predicated region
    $region25: #{double_conv.4} parent=5 // pred_check
      %p270 = pneg %p269
    $region26: #{double_conv.4} parent=5 // pred_check_branch
      %272 = sbr.rel (%p270) target = $region28
    $region27: #{double_conv.4} parent=5 // pred_region
      // Predicated region
      $region29: #{double_conv.4} parent=27 // pred_check
        %p273 = pneg %p90
      $region30: #{double_conv.4} parent=27 // pred_check_branch
        %275 = sbr.rel (%p273) target = $region32
      $region31: #{double_conv.4} parent=27 // pred_region
        %s276 = smul.u32 8, %s22
        %p277 = scmp.lt.s32.totalorder %s21, 1
        %s278 = scalar_select %p277, %s21, 1
        %p279 = scmp.lt.s32.totalorder %s276, 15
        %s280 = scalar_select %p279, %s276, 15
        %s281 = smul.addr %s280, 2
        %s282 = smul.addr %s278, 32
        %s283 = sadd.s32 %s281, %s282
        %s284 = smul.addr %s283, 8
        %s285 = scalar_lea.vmem %s2, %s284
        %s286 = smul.u32 8, %s22
      $region32: #{double_conv.4} parent=27 // pred_fallthru
        _
      // Predicated region
      $region33: #{double_conv.4} parent=27 // pred_check
        %p287 = pneg %p126
      $region34: #{double_conv.4} parent=27 // pred_check_branch
        %289 = sbr.rel (%p287) target = $region36
      $region35: #{double_conv.4} parent=27 // pred_region
        %s290 = smul.u32 %s22, 8
        %s291 = ssub.s32 %s290, 1
        %p292 = scmp.gt.s32.totalorder %s291, 0
        %s293 = scalar_select %p292, %s291, 0
        %p294 = scmp.lt.s32.totalorder %s21, 1
        %s295 = scalar_select %p294, %s21, 1
        %p296 = scmp.lt.s32.totalorder %s293, 15
        %s297 = scalar_select %p296, %s293, 15
        %s298 = smul.addr %s297, 2
        %s299 = smul.addr %s295, 32
        %s300 = sadd.s32 %s298, %s299
        %s301 = smul.addr %s300, 8
        %s302 = scalar_lea.vmem %s3, %s301
        %s303 = smul.u32 %s22, 8
        %s304 = ssub.s32 %s303, 1
        %p305 = scmp.gt.s32.totalorder %s304, 0
        %s306 = scalar_select %p305, %s304, 0
      $region36: #{double_conv.4} parent=27 // pred_fallthru
        _
      // Predicated region
      $region37: #{double_conv.4} parent=27 // pred_check
        %p307 = pneg %p162
      $region38: #{double_conv.4} parent=27 // pred_check_branch
        %309 = sbr.rel (%p307) target = $region40
      $region39: #{double_conv.4} parent=27 // pred_region
        %s310 = sadd.s32 %s22, 1
        %s311 = smul.u32 %s310, 8
        %p312 = scmp.lt.s32.totalorder %s311, 15
        %s313 = scalar_select %p312, %s311, 15
        %p314 = scmp.lt.s32.totalorder %s21, 1
        %s315 = scalar_select %p314, %s21, 1
        %p316 = scmp.lt.s32.totalorder %s313, 15
        %s317 = scalar_select %p316, %s313, 15
        %s318 = smul.addr %s317, 2
        %s319 = smul.addr %s315, 32
        %s320 = sadd.s32 %s318, %s319
        %s321 = smul.addr %s320, 8
        %s322 = scalar_lea.vmem %s4, %s321
        %s323 = sadd.s32 %s22, 1
        %s324 = smul.u32 %s323, 8
        %p325 = scmp.lt.s32.totalorder %s324, 15
        %s326 = scalar_select %p325, %s324, 15
      $region40: #{double_conv.4} parent=27 // pred_fallthru
        _
    $region28: #{double_conv.4} parent=5 // pred_fallthru
      _
    %p327 = scmp.le.s32.totalorder 1, %s14
    %p328 = scmp.lt.s32.totalorder %s14, 5
    %p329 = pnand %p327, %p328
    %p330 = pneg %p329
    // Predicated region
    $region41: #{double_conv.4} parent=5 // pred_check
      _
    $region42: #{double_conv.4} parent=5 // pred_check_branch
      %332 = sbr.rel (%p329) target = $region44
    $region43: #{double_conv.4} parent=5 // pred_region
      %s333 = ssub.s32 %s14, 1
      %p334 = pneg %p47
      %p335 = pneg %p44
      %p336 = pneg %p68
      %p337 = pneg %p65
      %s338 = smul.u32 8, %s24
      %p339 = scmp.lt.s32.totalorder %s23, 1
      %s340 = scalar_select %p339, %s23, 1
      %p341 = scmp.lt.s32.totalorder %s338, 15
      %s342 = scalar_select %p341, %s338, 15
      %s343 = smul.addr %s342, 2
      %s344 = smul.addr %s340, 32
      %s345 = sadd.s32 %s343, %s344
      %s346 = smul.addr %s345, 8
      %s347 = scalar_lea.vmem %s2, %s346
      %p348 = pneg %p96
      %p349 = pneg %p93
      %s350 = smul.u32 %s24, 8
      %s351 = ssub.s32 %s350, 1
      %p352 = scmp.gt.s32.totalorder %s351, 0
      %s353 = scalar_select %p352, %s351, 0
      %p354 = scmp.lt.s32.totalorder %s23, 1
      %s355 = scalar_select %p354, %s23, 1
      %p356 = scmp.lt.s32.totalorder %s353, 15
      %s357 = scalar_select %p356, %s353, 15
      %s358 = smul.addr %s357, 2
      %s359 = smul.addr %s355, 32
      %s360 = sadd.s32 %s358, %s359
      %s361 = smul.addr %s360, 8
      %s362 = scalar_lea.vmem %s3, %s361
      %p363 = pneg %p132
      %p364 = pneg %p129
      %s365 = sadd.s32 %s24, 1
      %s366 = smul.u32 %s365, 8
      %p367 = scmp.lt.s32.totalorder %s366, 15
      %s368 = scalar_select %p367, %s366, 15
      %p369 = scmp.lt.s32.totalorder %s23, 1
      %s370 = scalar_select %p369, %s23, 1
      %p371 = scmp.lt.s32.totalorder %s368, 15
      %s372 = scalar_select %p371, %s368, 15
      %s373 = smul.addr %s372, 2
      %s374 = smul.addr %s370, 32
      %s375 = sadd.s32 %s373, %s374
      %s376 = smul.addr %s375, 8
      %s377 = scalar_lea.vmem %s4, %s376
      %p378 = pneg %p168
      %p379 = pneg %p165
      %p380 = pneg %p189
      %p381 = pneg %p186
      %p382 = pneg %p217
      %p383 = pneg %p214
      %s384 = smul.u32 8, %s24
      %p385 = scmp.lt.s32.totalorder %s23, 1
      %s386 = scalar_select %p385, %s23, 1
      %p387 = scmp.lt.s32.totalorder %s384, 15
      %s388 = scalar_select %p387, %s384, 15
      %s389 = smul.addr %s388, 2
      %s390 = smul.addr %s386, 32
      %s391 = sadd.s32 %s389, %s390
      %s392 = smul.addr %s391, 8
      %s393 = scalar_lea.vmem %s6, %s392
      %p394 = pneg %p245
      %p395 = pneg %p242
      %p396 = scmp.lt.s32.totalorder %s23, 1
      %s397 = scalar_select %p396, %s23, 1
      %p398 = scmp.lt.s32.totalorder %s24, 1
      %s399 = scalar_select %p398, %s24, 1
      %s400 = smul.addr %s397, 2
      %s401 = sadd.s32 %s399, %s400
      %s402 = smul.addr %s401, 2
      %s403 = scalar_lea.vmem %s7, %s402
      %s404 = smul.u32 8, %s24
      %p405 = scmp.lt.s32.totalorder %s23, 1
      %s406 = scalar_select %p405, %s23, 1
      %p407 = scmp.lt.s32.totalorder %s404, 15
      %s408 = scalar_select %p407, %s404, 15
      %s409 = smul.addr %s408, 2
      %s410 = smul.addr %s406, 32
      %s411 = sadd.s32 %s409, %s410
      %s412 = smul.addr %s411, 8
      %s413 = scalar_lea.vmem %s2, %s412
      %s414 = smul.u32 8, %s24
      %s415 = smul.u32 %s24, 8
      %s416 = ssub.s32 %s415, 1
      %p417 = scmp.gt.s32.totalorder %s416, 0
      %s418 = scalar_select %p417, %s416, 0
      %p419 = scmp.lt.s32.totalorder %s23, 1
      %s420 = scalar_select %p419, %s23, 1
      %p421 = scmp.lt.s32.totalorder %s418, 15
      %s422 = scalar_select %p421, %s418, 15
      %s423 = smul.addr %s422, 2
      %s424 = smul.addr %s420, 32
      %s425 = sadd.s32 %s423, %s424
      %s426 = smul.addr %s425, 8
      %s427 = scalar_lea.vmem %s3, %s426
      %s428 = smul.u32 %s24, 8
      %s429 = ssub.s32 %s428, 1
      %p430 = scmp.gt.s32.totalorder %s429, 0
      %s431 = scalar_select %p430, %s429, 0
      %s432 = sadd.s32 %s24, 1
      %s433 = smul.u32 %s432, 8
      %p434 = scmp.lt.s32.totalorder %s433, 15
      %s435 = scalar_select %p434, %s433, 15
      %p436 = scmp.lt.s32.totalorder %s23, 1
      %s437 = scalar_select %p436, %s23, 1
      %p438 = scmp.lt.s32.totalorder %s435, 15
      %s439 = scalar_select %p438, %s435, 15
      %s440 = smul.addr %s439, 2
      %s441 = smul.addr %s437, 32
      %s442 = sadd.s32 %s440, %s441
      %s443 = smul.addr %s442, 8
      %s444 = scalar_lea.vmem %s4, %s443
      %s445 = sadd.s32 %s24, 1
      %s446 = smul.u32 %s445, 8
      %p447 = scmp.lt.s32.totalorder %s446, 15
      %s448 = scalar_select %p447, %s446, 15
      %s449 = smul.u32 8, %s24
      %p450 = scmp.lt.s32.totalorder %s23, 1
      %s451 = scalar_select %p450, %s23, 1
      %p452 = scmp.lt.s32.totalorder %s449, 15
      %s453 = scalar_select %p452, %s449, 15
      %s454 = smul.addr %s453, 2
      %s455 = smul.addr %s451, 32
      %s456 = sadd.s32 %s454, %s455
      %s457 = smul.addr %s456, 8
      %s458 = scalar_lea.vmem %s6, %s457
      %s459 = smul.u32 8, %s24
      %p460 = scmp.lt.s32.totalorder %s23, 1
      %s461 = scalar_select %p460, %s23, 1
      %p462 = scmp.lt.s32.totalorder %s24, 1
      %s463 = scalar_select %p462, %s24, 1
      %s464 = smul.addr %s461, 2
      %s465 = sadd.s32 %s463, %s464
      %s466 = smul.addr %s465, 2
      %s467 = scalar_lea.vmem %s7, %s466
      %v468 = vld [vmem:[%s0] sm:$0x1]
      %v469 = vld [vmem:[%s1] sm:$0x1]
      %v470 = vld [vmem:[%s427] sm:$0xff]
      %v471 = vld [vmem:[%s427 + $0x8] sm:$0xff]
      %v473 = vperm.slane %v468, 0
      %v475 = vmul.f32 %v470, %v473
      %v476 = vmul.f32 %v471, %v473
      %v478 = vperm.slane %v469, 0
      %v480 = vadd.f32 %v475, %v478
      %v481 = vadd.f32 %v476, %v478
      %v482 = vmax.f32 %v480, 0.0
      %v483 = vmax.f32 %v481, 0.0
      %v484 = vld [vmem:[%s444] sm:$0xff]
      %v485 = vld [vmem:[%s444 + $0x8] sm:$0xff]
      %v486 = vmul.f32 %v484, %v473
      %v487 = vmul.f32 %v485, %v473
      %v488 = vadd.f32 %v486, %v478
      %v489 = vadd.f32 %v487, %v478
      %v490 = vmax.f32 %v488, 0.0
      %v491 = vmax.f32 %v489, 0.0
      %p492 = scmp.gt.s32.totalorder %s24, 0
      %s493 = scalar_select %p492, 1, 0
      %v494 = vstv %s493
      %vm495 = vcmp.eq.s32.totalorder %v494, 1
      %v496 = vsel %vm495, %v482, 0.0
      %v497 = vsel %vm495, %v483, 0.0
      %p498 = scmp.lt.s32.totalorder %s24, 1
      %s499 = scalar_select %p498, 1, 0
      %v500 = vstv %s499
      %vm501 = vcmp.eq.s32.totalorder %v500, 1
      %v502 = vsel %vm501, %v490, 0.0
      %v503 = vsel %vm501, %v491, 0.0
      %504 = vst [vmem:[#allocation2] sm:$0x1] 0.0
      %505 = vst [vmem:[#allocation2 + $0x18] sm:$0x1] 0.0
      %506 = vst [vmem:[#allocation2 + $0x30] sm:$0x1] 0.0
      %507 = vst [vmem:[#allocation2 + $0x48] sm:$0x1] 0.0
      %508 = vst [vmem:[#allocation2 + $0x60] sm:$0x1] 0.0
      %509 = vst [vmem:[#allocation2 + $0x78] sm:$0x1] 0.0
      %510 = vst [vmem:[#allocation2 + $0x90] sm:$0x1] 0.0
      %511 = vst [vmem:[#allocation2 + $0xa8] sm:$0x1] 0.0
      %512 = vst [vmem:[#allocation2 + $0xc0] sm:$0x1] 0.0
      %513 = vst [vmem:[#allocation2 + $0xd8] sm:$0x1] 0.0
      %514 = vst [vmem:[#allocation2 + $0x11] sm:$0x1] 0.0
      %515 = vst [vmem:[#allocation2 + $0x29] sm:$0x1] 0.0
      %516 = vst [vmem:[#allocation2 + $0x41] sm:$0x1] 0.0
      %517 = vst [vmem:[#allocation2 + $0x59] sm:$0x1] 0.0
      %518 = vst [vmem:[#allocation2 + $0x71] sm:$0x1] 0.0
      %519 = vst [vmem:[#allocation2 + $0x89] sm:$0x1] 0.0
      %520 = vst [vmem:[#allocation2 + $0xa1] sm:$0x1] 0.0
      %521 = vst [vmem:[#allocation2 + $0xb9] sm:$0x1] 0.0
      %522 = vst [vmem:[#allocation2 + $0xd1] sm:$0x1] 0.0
      %523 = vst [vmem:[#allocation2 + $0xe9] sm:$0x1] 0.0
      %524 = vst [vmem:[#allocation2 + $0x1] sm:$0xff] %v496
      %525 = vst [vmem:[#allocation2 + $0x9] sm:$0xff] %v497
      %s526 = scalar_lea.vmem [#allocation2], 216
      %527 = vst [vmem:[%s526 + $0x1] sm:$0xff] %v502
      %528 = vst [vmem:[%s526 + $0x9] sm:$0xff] %v503
      %v529 = vld [vmem:[%s413] sm:$0xff]
      %v530 = vld [vmem:[%s413 + $0x8] sm:$0xff]
      %v531 = vld [vmem:[%s413 + $0x10] sm:$0xff]
      %v532 = vld [vmem:[%s413 + $0x18] sm:$0xff]
      %v533 = vld [vmem:[%s413 + $0x20] sm:$0xff]
      %v534 = vld [vmem:[%s413 + $0x28] sm:$0xff]
      %v535 = vld [vmem:[%s413 + $0x30] sm:$0xff]
      %v536 = vld [vmem:[%s413 + $0x38] sm:$0xff]
      %v537 = vld [vmem:[%s413 + $0x40] sm:$0xff]
      %v538 = vld [vmem:[%s413 + $0x48] sm:$0xff]
      %v539 = vld [vmem:[%s413 + $0x50] sm:$0xff]
      %v540 = vld [vmem:[%s413 + $0x58] sm:$0xff]
      %v541 = vld [vmem:[%s413 + $0x60] sm:$0xff]
      %v542 = vld [vmem:[%s413 + $0x68] sm:$0xff]
      %v543 = vld [vmem:[%s413 + $0x70] sm:$0xff]
      %v544 = vld [vmem:[%s413 + $0x78] sm:$0xff]
      %v545 = vmul.f32 %v529, %v473
      %v546 = vmul.f32 %v530, %v473
      %v547 = vmul.f32 %v531, %v473
      %v548 = vmul.f32 %v532, %v473
      %v549 = vmul.f32 %v533, %v473
      %v550 = vmul.f32 %v534, %v473
      %v551 = vmul.f32 %v535, %v473
      %v552 = vmul.f32 %v536, %v473
      %v553 = vmul.f32 %v537, %v473
      %v554 = vmul.f32 %v538, %v473
      %v555 = vmul.f32 %v539, %v473
      %v556 = vmul.f32 %v540, %v473
      %v557 = vmul.f32 %v541, %v473
      %v558 = vmul.f32 %v542, %v473
      %v559 = vmul.f32 %v543, %v473
      %v560 = vmul.f32 %v544, %v473
      %v561 = vadd.f32 %v545, %v478
      %v562 = vadd.f32 %v546, %v478
      %v563 = vadd.f32 %v547, %v478
      %v564 = vadd.f32 %v548, %v478
      %v565 = vadd.f32 %v549, %v478
      %v566 = vadd.f32 %v550, %v478
      %v567 = vadd.f32 %v551, %v478
      %v568 = vadd.f32 %v552, %v478
      %v569 = vadd.f32 %v553, %v478
      %v570 = vadd.f32 %v554, %v478
      %v571 = vadd.f32 %v555, %v478
      %v572 = vadd.f32 %v556, %v478
      %v573 = vadd.f32 %v557, %v478
      %v574 = vadd.f32 %v558, %v478
      %v575 = vadd.f32 %v559, %v478
      %v576 = vadd.f32 %v560, %v478
      %v577 = vmax.f32 %v561, 0.0
      %v578 = vmax.f32 %v562, 0.0
      %v579 = vmax.f32 %v563, 0.0
      %v580 = vmax.f32 %v564, 0.0
      %v581 = vmax.f32 %v565, 0.0
      %v582 = vmax.f32 %v566, 0.0
      %v583 = vmax.f32 %v567, 0.0
      %v584 = vmax.f32 %v568, 0.0
      %v585 = vmax.f32 %v569, 0.0
      %v586 = vmax.f32 %v570, 0.0
      %v587 = vmax.f32 %v571, 0.0
      %v588 = vmax.f32 %v572, 0.0
      %v589 = vmax.f32 %v573, 0.0
      %v590 = vmax.f32 %v574, 0.0
      %v591 = vmax.f32 %v575, 0.0
      %v592 = vmax.f32 %v576, 0.0
      %s593 = scalar_lea.vmem [#allocation2], 24
      %594 = vst [vmem:[%s593 + $0x1] sm:$0xff] %v577
      %595 = vst [vmem:[%s593 + $0x9] sm:$0xff] %v578
      %596 = vst [vmem:[%s593 + $0x19] sm:$0xff] %v579
      %597 = vst [vmem:[%s593 + $0x21] sm:$0xff] %v580
      %598 = vst [vmem:[%s593 + $0x31] sm:$0xff] %v581
      %599 = vst [vmem:[%s593 + $0x39] sm:$0xff] %v582
      %600 = vst [vmem:[%s593 + $0x49] sm:$0xff] %v583
      %601 = vst [vmem:[%s593 + $0x51] sm:$0xff] %v584
      %602 = vst [vmem:[%s593 + $0x61] sm:$0xff] %v585
      %603 = vst [vmem:[%s593 + $0x69] sm:$0xff] %v586
      %604 = vst [vmem:[%s593 + $0x79] sm:$0xff] %v587
      %605 = vst [vmem:[%s593 + $0x81] sm:$0xff] %v588
      %606 = vst [vmem:[%s593 + $0x91] sm:$0xff] %v589
      %607 = vst [vmem:[%s593 + $0x99] sm:$0xff] %v590
      %608 = vst [vmem:[%s593 + $0xa9] sm:$0xff] %v591
      %609 = vst [vmem:[%s593 + $0xb1] sm:$0xff] %v592
      %v610 = vld [vmem:[#allocation2] sm:$0xff]
      %v611 = vld [vmem:[#allocation2 + $0x8] sm:$0xff]
      %v612 = vld [vmem:[#allocation2 + $0x18] sm:$0xff]
      %v613 = vld [vmem:[#allocation2 + $0x20] sm:$0xff]
      %v614 = vld [vmem:[#allocation2 + $0x30] sm:$0xff]
      %v615 = vld [vmem:[#allocation2 + $0x38] sm:$0xff]
      %v616 = vld [vmem:[#allocation2 + $0x48] sm:$0xff]
      %v617 = vld [vmem:[#allocation2 + $0x50] sm:$0xff]
      %v618 = vld [vmem:[#allocation2 + $0x60] sm:$0xff]
      %v619 = vld [vmem:[#allocation2 + $0x68] sm:$0xff]
      %v620 = vld [vmem:[#allocation2 + $0x78] sm:$0xff]
      %v621 = vld [vmem:[#allocation2 + $0x80] sm:$0xff]
      %v622 = vld [vmem:[#allocation2 + $0x90] sm:$0xff]
      %v623 = vld [vmem:[#allocation2 + $0x98] sm:$0xff]
      %v624 = vld [vmem:[#allocation2 + $0xa8] sm:$0xff]
      %v625 = vld [vmem:[#allocation2 + $0xb0] sm:$0xff]
      %v626 = vpack.c.bf16 %v611, %v610
      %v627 = vpack.c.bf16 %v613, %v612
      %v628 = vpack.c.bf16 %v615, %v614
      %v629 = vpack.c.bf16 %v617, %v616
      %v630 = vpack.c.bf16 %v619, %v618
      %v631 = vpack.c.bf16 %v621, %v620
      %v632 = vpack.c.bf16 %v623, %v622
      %v633 = vpack.c.bf16 %v625, %v624
      %v634 = vld [vmem:[%s5] sm:$0xf]
      %v635 = vld [vmem:[%s5 + $0x4] sm:$0xf]
      %v636 = vld [vmem:[%s5 + $0x8] sm:$0xf]
      %v637 = vld [vmem:[%s5 + $0xc] sm:$0xf]
      %v638 = vld [vmem:[%s5 + $0x10] sm:$0xf]
      %v639 = vld [vmem:[%s5 + $0x14] sm:$0xf]
      %v640 = vld [vmem:[%s5 + $0x18] sm:$0xf]
      %v641 = vld [vmem:[%s5 + $0x1c] sm:$0xf]
      %v642 = vld [vmem:[%s5 + $0x20] sm:$0xf]
      %v643 = vld [vmem:[%s5 + $0x24] sm:$0xf]
      %v644 = vld [vmem:[%s5 + $0x28] sm:$0xf]
      %v645 = vld [vmem:[%s5 + $0x2c] sm:$0xf]
      %v646 = vld [vmem:[%s5 + $0x30] sm:$0xf]
      %v647 = vld [vmem:[%s5 + $0x34] sm:$0xf]
      %v648 = vld [vmem:[%s5 + $0x38] sm:$0xf]
      %v649 = vld [vmem:[%s5 + $0x3c] sm:$0xf]
      %v650 = vld [vmem:[#allocation2 + $0x1] sm:$0xff]
      %v651 = vld [vmem:[#allocation2 + $0x9] sm:$0xff]
      %v652 = vld [vmem:[#allocation2 + $0x19] sm:$0xff]
      %v653 = vld [vmem:[#allocation2 + $0x21] sm:$0xff]
      %v654 = vld [vmem:[#allocation2 + $0x31] sm:$0xff]
      %v655 = vld [vmem:[#allocation2 + $0x39] sm:$0xff]
      %v656 = vld [vmem:[#allocation2 + $0x49] sm:$0xff]
      %v657 = vld [vmem:[#allocation2 + $0x51] sm:$0xff]
      %v658 = vld [vmem:[#allocation2 + $0x61] sm:$0xff]
      %v659 = vld [vmem:[#allocation2 + $0x69] sm:$0xff]
      %v660 = vld [vmem:[#allocation2 + $0x79] sm:$0xff]
      %v661 = vld [vmem:[#allocation2 + $0x81] sm:$0xff]
      %v662 = vld [vmem:[#allocation2 + $0x91] sm:$0xff]
      %v663 = vld [vmem:[#allocation2 + $0x99] sm:$0xff]
      %v664 = vld [vmem:[#allocation2 + $0xa9] sm:$0xff]
      %v665 = vld [vmem:[#allocation2 + $0xb1] sm:$0xff]
      %v666 = vpack.c.bf16 %v651, %v650
      %v667 = vpack.c.bf16 %v653, %v652
      %v668 = vpack.c.bf16 %v655, %v654
      %v669 = vpack.c.bf16 %v657, %v656
      %v670 = vpack.c.bf16 %v659, %v658
      %v671 = vpack.c.bf16 %v661, %v660
      %v672 = vpack.c.bf16 %v663, %v662
      %v673 = vpack.c.bf16 %v665, %v664
      %s674 = scalar_lea.vmem %s5, 64
      %v675 = vld [vmem:[%s674] sm:$0xf]
      %v676 = vld [vmem:[%s674 + $0x4] sm:$0xf]
      %v677 = vld [vmem:[%s674 + $0x8] sm:$0xf]
      %v678 = vld [vmem:[%s674 + $0xc] sm:$0xf]
      %v679 = vld [vmem:[%s674 + $0x10] sm:$0xf]
      %v680 = vld [vmem:[%s674 + $0x14] sm:$0xf]
      %v681 = vld [vmem:[%s674 + $0x18] sm:$0xf]
      %v682 = vld [vmem:[%s674 + $0x1c] sm:$0xf]
      %v683 = vld [vmem:[%s674 + $0x20] sm:$0xf]
      %v684 = vld [vmem:[%s674 + $0x24] sm:$0xf]
      %v685 = vld [vmem:[%s674 + $0x28] sm:$0xf]
      %v686 = vld [vmem:[%s674 + $0x2c] sm:$0xf]
      %v687 = vld [vmem:[%s674 + $0x30] sm:$0xf]
      %v688 = vld [vmem:[%s674 + $0x34] sm:$0xf]
      %v689 = vld [vmem:[%s674 + $0x38] sm:$0xf]
      %v690 = vld [vmem:[%s674 + $0x3c] sm:$0xf]
      %v707 = vunpack.c.l.b16 %v675
      %v708 = vunpack.c.l.b16 %v676
      %v709 = vunpack.c.l.b16 %v677
      %v710 = vunpack.c.l.b16 %v678
      %v711 = vunpack.c.l.b16 %v679
      %v712 = vunpack.c.l.b16 %v680
      %v713 = vunpack.c.l.b16 %v681
      %v714 = vunpack.c.l.b16 %v682
      %v715 = vunpack.c.l.b16 %v683
      %v716 = vunpack.c.l.b16 %v684
      %v717 = vunpack.c.l.b16 %v685
      %v718 = vunpack.c.l.b16 %v686
      %v719 = vunpack.c.l.b16 %v687
      %v720 = vunpack.c.l.b16 %v688
      %v721 = vunpack.c.l.b16 %v689
      %v722 = vunpack.c.l.b16 %v690
      %v723 = vpack.c.b16 %v708, %v707
      %v724 = vpack.c.b16 %v710, %v709
      %v725 = vpack.c.b16 %v712, %v711
      %v726 = vpack.c.b16 %v714, %v713
      %v727 = vpack.c.b16 %v716, %v715
      %v728 = vpack.c.b16 %v718, %v717
      %v729 = vpack.c.b16 %v720, %v719
      %v730 = vpack.c.b16 %v722, %v721
      %739 = vmatpush.bf16.msra.mxu0 %v730
      %740 = vmatpush.bf16.msra.mxu0 %v729
      %741 = vmatpush.bf16.msra.mxu0 %v728
      %742 = vmatpush.bf16.msra.mxu0 %v727
      %743 = vmatpush.bf16.msra.mxu0 %v726
      %744 = vmatpush.bf16.msra.mxu0 %v725
      %745 = vmatpush.bf16.msra.mxu0 %v724
      %746 = vmatpush.bf16.msra.mxu0 %v723
      %747 = vmatmul.bf16.gmra.mxu0 %v666
      %v748 = vpop.f32.mrf.mxu0
      %v749 = vadd.f32 0.0, %v748
      %v750 = vpop.f32.mrf.mxu0
      %v751 = vadd.f32 0.0, %v750
      %752 = vmatmul.bf16.gmra.mxu0 %v667
      %v753 = vpop.f32.mrf.mxu0
      %v754 = vadd.f32 0.0, %v753
      %v755 = vpop.f32.mrf.mxu0
      %v756 = vadd.f32 0.0, %v755
      %757 = vmatmul.bf16.gmra.mxu0 %v668
      %v758 = vpop.f32.mrf.mxu0
      %v759 = vadd.f32 0.0, %v758
      %v760 = vpop.f32.mrf.mxu0
      %v761 = vadd.f32 0.0, %v760
      %762 = vmatmul.bf16.gmra.mxu0 %v669
      %v763 = vpop.f32.mrf.mxu0
      %v764 = vadd.f32 0.0, %v763
      %v765 = vpop.f32.mrf.mxu0
      %v766 = vadd.f32 0.0, %v765
      %767 = vmatmul.bf16.gmra.mxu0 %v670
      %v768 = vpop.f32.mrf.mxu0
      %v769 = vadd.f32 0.0, %v768
      %v770 = vpop.f32.mrf.mxu0
      %v771 = vadd.f32 0.0, %v770
      %772 = vmatmul.bf16.gmra.mxu0 %v671
      %v773 = vpop.f32.mrf.mxu0
      %v774 = vadd.f32 0.0, %v773
      %v775 = vpop.f32.mrf.mxu0
      %v776 = vadd.f32 0.0, %v775
      %777 = vmatmul.bf16.gmra.mxu0 %v672
      %v778 = vpop.f32.mrf.mxu0
      %v779 = vadd.f32 0.0, %v778
      %v780 = vpop.f32.mrf.mxu0
      %v781 = vadd.f32 0.0, %v780
      %782 = vmatmul.bf16.gmra.mxu0 %v673
      %v783 = vpop.f32.mrf.mxu0
      %v784 = vadd.f32 0.0, %v783
      %v785 = vpop.f32.mrf.mxu0
      %v786 = vadd.f32 0.0, %v785
      %787 = vdwg.mxu0
      %v804 = vunpack.c.l.b16 %v634
      %v805 = vunpack.c.l.b16 %v635
      %v806 = vunpack.c.l.b16 %v636
      %v807 = vunpack.c.l.b16 %v637
      %v808 = vunpack.c.l.b16 %v638
      %v809 = vunpack.c.l.b16 %v639
      %v810 = vunpack.c.l.b16 %v640
      %v811 = vunpack.c.l.b16 %v641
      %v812 = vunpack.c.l.b16 %v642
      %v813 = vunpack.c.l.b16 %v643
      %v814 = vunpack.c.l.b16 %v644
      %v815 = vunpack.c.l.b16 %v645
      %v816 = vunpack.c.l.b16 %v646
      %v817 = vunpack.c.l.b16 %v647
      %v818 = vunpack.c.l.b16 %v648
      %v819 = vunpack.c.l.b16 %v649
      %v820 = vpack.c.b16 %v805, %v804
      %v821 = vpack.c.b16 %v807, %v806
      %v822 = vpack.c.b16 %v809, %v808
      %v823 = vpack.c.b16 %v811, %v810
      %v824 = vpack.c.b16 %v813, %v812
      %v825 = vpack.c.b16 %v815, %v814
      %v826 = vpack.c.b16 %v817, %v816
      %v827 = vpack.c.b16 %v819, %v818
      %836 = vmatpush.bf16.msra.mxu0 %v827
      %837 = vmatpush.bf16.msra.mxu0 %v826
      %838 = vmatpush.bf16.msra.mxu0 %v825
      %839 = vmatpush.bf16.msra.mxu0 %v824
      %840 = vmatpush.bf16.msra.mxu0 %v823
      %841 = vmatpush.bf16.msra.mxu0 %v822
      %842 = vmatpush.bf16.msra.mxu0 %v821
      %843 = vmatpush.bf16.msra.mxu0 %v820
      %844 = vmatmul.bf16.gmra.mxu0 %v626
      %v845 = vpop.f32.mrf.mxu0
      %v846 = vadd.f32 %v749, %v845
      %v847 = vpop.f32.mrf.mxu0
      %v848 = vadd.f32 %v751, %v847
      %849 = vmatmul.bf16.gmra.mxu0 %v627
      %v850 = vpop.f32.mrf.mxu0
      %v851 = vadd.f32 %v754, %v850
      %v852 = vpop.f32.mrf.mxu0
      %v853 = vadd.f32 %v756, %v852
      %854 = vmatmul.bf16.gmra.mxu0 %v628
      %v855 = vpop.f32.mrf.mxu0
      %v856 = vadd.f32 %v759, %v855
      %v857 = vpop.f32.mrf.mxu0
      %v858 = vadd.f32 %v761, %v857
      %859 = vmatmul.bf16.gmra.mxu0 %v629
      %v860 = vpop.f32.mrf.mxu0
      %v861 = vadd.f32 %v764, %v860
      %v862 = vpop.f32.mrf.mxu0
      %v863 = vadd.f32 %v766, %v862
      %864 = vmatmul.bf16.gmra.mxu0 %v630
      %v865 = vpop.f32.mrf.mxu0
      %v866 = vadd.f32 %v769, %v865
      %v867 = vpop.f32.mrf.mxu0
      %v868 = vadd.f32 %v771, %v867
      %869 = vmatmul.bf16.gmra.mxu0 %v631
      %v870 = vpop.f32.mrf.mxu0
      %v871 = vadd.f32 %v774, %v870
      %v872 = vpop.f32.mrf.mxu0
      %v873 = vadd.f32 %v776, %v872
      %874 = vmatmul.bf16.gmra.mxu0 %v632
      %v875 = vpop.f32.mrf.mxu0
      %v876 = vadd.f32 %v779, %v875
      %v877 = vpop.f32.mrf.mxu0
      %v878 = vadd.f32 %v781, %v877
      %879 = vmatmul.bf16.gmra.mxu0 %v633
      %v880 = vpop.f32.mrf.mxu0
      %v881 = vadd.f32 %v784, %v880
      %v882 = vpop.f32.mrf.mxu0
      %v883 = vadd.f32 %v786, %v882
      %884 = vdwg.mxu0
      %v885 = vld [vmem:[#allocation2 + $0x2] sm:$0xff]
      %v886 = vld [vmem:[#allocation2 + $0xa] sm:$0xff]
      %v887 = vld [vmem:[#allocation2 + $0x1a] sm:$0xff]
      %v888 = vld [vmem:[#allocation2 + $0x22] sm:$0xff]
      %v889 = vld [vmem:[#allocation2 + $0x32] sm:$0xff]
      %v890 = vld [vmem:[#allocation2 + $0x3a] sm:$0xff]
      %v891 = vld [vmem:[#allocation2 + $0x4a] sm:$0xff]
      %v892 = vld [vmem:[#allocation2 + $0x52] sm:$0xff]
      %v893 = vld [vmem:[#allocation2 + $0x62] sm:$0xff]
      %v894 = vld [vmem:[#allocation2 + $0x6a] sm:$0xff]
      %v895 = vld [vmem:[#allocation2 + $0x7a] sm:$0xff]
      %v896 = vld [vmem:[#allocation2 + $0x82] sm:$0xff]
      %v897 = vld [vmem:[#allocation2 + $0x92] sm:$0xff]
      %v898 = vld [vmem:[#allocation2 + $0x9a] sm:$0xff]
      %v899 = vld [vmem:[#allocation2 + $0xaa] sm:$0xff]
      %v900 = vld [vmem:[#allocation2 + $0xb2] sm:$0xff]
      %v901 = vpack.c.bf16 %v886, %v885
      %v902 = vpack.c.bf16 %v888, %v887
      %v903 = vpack.c.bf16 %v890, %v889
      %v904 = vpack.c.bf16 %v892, %v891
      %v905 = vpack.c.bf16 %v894, %v893
      %v906 = vpack.c.bf16 %v896, %v895
      %v907 = vpack.c.bf16 %v898, %v897
      %v908 = vpack.c.bf16 %v900, %v899
      %s909 = scalar_lea.vmem %s5, 128
      %v910 = vld [vmem:[%s909] sm:$0xf]
      %v911 = vld [vmem:[%s909 + $0x4] sm:$0xf]
      %v912 = vld [vmem:[%s909 + $0x8] sm:$0xf]
      %v913 = vld [vmem:[%s909 + $0xc] sm:$0xf]
      %v914 = vld [vmem:[%s909 + $0x10] sm:$0xf]
      %v915 = vld [vmem:[%s909 + $0x14] sm:$0xf]
      %v916 = vld [vmem:[%s909 + $0x18] sm:$0xf]
      %v917 = vld [vmem:[%s909 + $0x1c] sm:$0xf]
      %v918 = vld [vmem:[%s909 + $0x20] sm:$0xf]
      %v919 = vld [vmem:[%s909 + $0x24] sm:$0xf]
      %v920 = vld [vmem:[%s909 + $0x28] sm:$0xf]
      %v921 = vld [vmem:[%s909 + $0x2c] sm:$0xf]
      %v922 = vld [vmem:[%s909 + $0x30] sm:$0xf]
      %v923 = vld [vmem:[%s909 + $0x34] sm:$0xf]
      %v924 = vld [vmem:[%s909 + $0x38] sm:$0xf]
      %v925 = vld [vmem:[%s909 + $0x3c] sm:$0xf]
      %v942 = vunpack.c.l.b16 %v910
      %v943 = vunpack.c.l.b16 %v911
      %v944 = vunpack.c.l.b16 %v912
      %v945 = vunpack.c.l.b16 %v913
      %v946 = vunpack.c.l.b16 %v914
      %v947 = vunpack.c.l.b16 %v915
      %v948 = vunpack.c.l.b16 %v916
      %v949 = vunpack.c.l.b16 %v917
      %v950 = vunpack.c.l.b16 %v918
      %v951 = vunpack.c.l.b16 %v919
      %v952 = vunpack.c.l.b16 %v920
      %v953 = vunpack.c.l.b16 %v921
      %v954 = vunpack.c.l.b16 %v922
      %v955 = vunpack.c.l.b16 %v923
      %v956 = vunpack.c.l.b16 %v924
      %v957 = vunpack.c.l.b16 %v925
      %v958 = vpack.c.b16 %v943, %v942
      %v959 = vpack.c.b16 %v945, %v944
      %v960 = vpack.c.b16 %v947, %v946
      %v961 = vpack.c.b16 %v949, %v948
      %v962 = vpack.c.b16 %v951, %v950
      %v963 = vpack.c.b16 %v953, %v952
      %v964 = vpack.c.b16 %v955, %v954
      %v965 = vpack.c.b16 %v957, %v956
      %974 = vmatpush.bf16.msra.mxu0 %v965
      %975 = vmatpush.bf16.msra.mxu0 %v964
      %976 = vmatpush.bf16.msra.mxu0 %v963
      %977 = vmatpush.bf16.msra.mxu0 %v962
      %978 = vmatpush.bf16.msra.mxu0 %v961
      %979 = vmatpush.bf16.msra.mxu0 %v960
      %980 = vmatpush.bf16.msra.mxu0 %v959
      %981 = vmatpush.bf16.msra.mxu0 %v958
      %982 = vmatmul.bf16.gmra.mxu0 %v901
      %v983 = vpop.f32.mrf.mxu0
      %v984 = vadd.f32 0.0, %v983
      %v985 = vpop.f32.mrf.mxu0
      %v986 = vadd.f32 0.0, %v985
      %987 = vmatmul.bf16.gmra.mxu0 %v902
      %v988 = vpop.f32.mrf.mxu0
      %v989 = vadd.f32 0.0, %v988
      %v990 = vpop.f32.mrf.mxu0
      %v991 = vadd.f32 0.0, %v990
      %992 = vmatmul.bf16.gmra.mxu0 %v903
      %v993 = vpop.f32.mrf.mxu0
      %v994 = vadd.f32 0.0, %v993
      %v995 = vpop.f32.mrf.mxu0
      %v996 = vadd.f32 0.0, %v995
      %997 = vmatmul.bf16.gmra.mxu0 %v904
      %v998 = vpop.f32.mrf.mxu0
      %v999 = vadd.f32 0.0, %v998
      %v1000 = vpop.f32.mrf.mxu0
      %v1001 = vadd.f32 0.0, %v1000
      %1002 = vmatmul.bf16.gmra.mxu0 %v905
      %v1003 = vpop.f32.mrf.mxu0
      %v1004 = vadd.f32 0.0, %v1003
      %v1005 = vpop.f32.mrf.mxu0
      %v1006 = vadd.f32 0.0, %v1005
      %1007 = vmatmul.bf16.gmra.mxu0 %v906
      %v1008 = vpop.f32.mrf.mxu0
      %v1009 = vadd.f32 0.0, %v1008
      %v1010 = vpop.f32.mrf.mxu0
      %v1011 = vadd.f32 0.0, %v1010
      %1012 = vmatmul.bf16.gmra.mxu0 %v907
      %v1013 = vpop.f32.mrf.mxu0
      %v1014 = vadd.f32 0.0, %v1013
      %v1015 = vpop.f32.mrf.mxu0
      %v1016 = vadd.f32 0.0, %v1015
      %1017 = vmatmul.bf16.gmra.mxu0 %v908
      %v1018 = vpop.f32.mrf.mxu0
      %v1019 = vadd.f32 0.0, %v1018
      %v1020 = vpop.f32.mrf.mxu0
      %v1021 = vadd.f32 0.0, %v1020
      %1022 = vdwg.mxu0
      %v1023 = vadd.f32 %v846, %v984
      %v1024 = vadd.f32 %v848, %v986
      %v1025 = vadd.f32 %v851, %v989
      %v1026 = vadd.f32 %v853, %v991
      %v1027 = vadd.f32 %v856, %v994
      %v1028 = vadd.f32 %v858, %v996
      %v1029 = vadd.f32 %v861, %v999
      %v1030 = vadd.f32 %v863, %v1001
      %v1031 = vadd.f32 %v866, %v1004
      %v1032 = vadd.f32 %v868, %v1006
      %v1033 = vadd.f32 %v871, %v1009
      %v1034 = vadd.f32 %v873, %v1011
      %v1035 = vadd.f32 %v876, %v1014
      %v1036 = vadd.f32 %v878, %v1016
      %v1037 = vadd.f32 %v881, %v1019
      %v1038 = vadd.f32 %v883, %v1021
      %v1039 = vld [vmem:[%s593] sm:$0xff]
      %v1040 = vld [vmem:[%s593 + $0x8] sm:$0xff]
      %v1041 = vld [vmem:[%s593 + $0x18] sm:$0xff]
      %v1042 = vld [vmem:[%s593 + $0x20] sm:$0xff]
      %v1043 = vld [vmem:[%s593 + $0x30] sm:$0xff]
      %v1044 = vld [vmem:[%s593 + $0x38] sm:$0xff]
      %v1045 = vld [vmem:[%s593 + $0x48] sm:$0xff]
      %v1046 = vld [vmem:[%s593 + $0x50] sm:$0xff]
      %v1047 = vld [vmem:[%s593 + $0x60] sm:$0xff]
      %v1048 = vld [vmem:[%s593 + $0x68] sm:$0xff]
      %v1049 = vld [vmem:[%s593 + $0x78] sm:$0xff]
      %v1050 = vld [vmem:[%s593 + $0x80] sm:$0xff]
      %v1051 = vld [vmem:[%s593 + $0x90] sm:$0xff]
      %v1052 = vld [vmem:[%s593 + $0x98] sm:$0xff]
      %v1053 = vld [vmem:[%s593 + $0xa8] sm:$0xff]
      %v1054 = vld [vmem:[%s593 + $0xb0] sm:$0xff]
      %v1055 = vpack.c.bf16 %v1040, %v1039
      %v1056 = vpack.c.bf16 %v1042, %v1041
      %v1057 = vpack.c.bf16 %v1044, %v1043
      %v1058 = vpack.c.bf16 %v1046, %v1045
      %v1059 = vpack.c.bf16 %v1048, %v1047
      %v1060 = vpack.c.bf16 %v1050, %v1049
      %v1061 = vpack.c.bf16 %v1052, %v1051
      %v1062 = vpack.c.bf16 %v1054, %v1053
      %s1063 = scalar_lea.vmem %s5, 192
      %v1064 = vld [vmem:[%s1063] sm:$0xf]
      %v1065 = vld [vmem:[%s1063 + $0x4] sm:$0xf]
      %v1066 = vld [vmem:[%s1063 + $0x8] sm:$0xf]
      %v1067 = vld [vmem:[%s1063 + $0xc] sm:$0xf]
      %v1068 = vld [vmem:[%s1063 + $0x10] sm:$0xf]
      %v1069 = vld [vmem:[%s1063 + $0x14] sm:$0xf]
      %v1070 = vld [vmem:[%s1063 + $0x18] sm:$0xf]
      %v1071 = vld [vmem:[%s1063 + $0x1c] sm:$0xf]
      %v1072 = vld [vmem:[%s1063 + $0x20] sm:$0xf]
      %v1073 = vld [vmem:[%s1063 + $0x24] sm:$0xf]
      %v1074 = vld [vmem:[%s1063 + $0x28] sm:$0xf]
      %v1075 = vld [vmem:[%s1063 + $0x2c] sm:$0xf]
      %v1076 = vld [vmem:[%s1063 + $0x30] sm:$0xf]
      %v1077 = vld [vmem:[%s1063 + $0x34] sm:$0xf]
      %v1078 = vld [vmem:[%s1063 + $0x38] sm:$0xf]
      %v1079 = vld [vmem:[%s1063 + $0x3c] sm:$0xf]
      %v1096 = vunpack.c.l.b16 %v1064
      %v1097 = vunpack.c.l.b16 %v1065
      %v1098 = vunpack.c.l.b16 %v1066
      %v1099 = vunpack.c.l.b16 %v1067
      %v1100 = vunpack.c.l.b16 %v1068
      %v1101 = vunpack.c.l.b16 %v1069
      %v1102 = vunpack.c.l.b16 %v1070
      %v1103 = vunpack.c.l.b16 %v1071
      %v1104 = vunpack.c.l.b16 %v1072
      %v1105 = vunpack.c.l.b16 %v1073
      %v1106 = vunpack.c.l.b16 %v1074
      %v1107 = vunpack.c.l.b16 %v1075
      %v1108 = vunpack.c.l.b16 %v1076
      %v1109 = vunpack.c.l.b16 %v1077
      %v1110 = vunpack.c.l.b16 %v1078
      %v1111 = vunpack.c.l.b16 %v1079
      %v1112 = vpack.c.b16 %v1097, %v1096
      %v1113 = vpack.c.b16 %v1099, %v1098
      %v1114 = vpack.c.b16 %v1101, %v1100
      %v1115 = vpack.c.b16 %v1103, %v1102
      %v1116 = vpack.c.b16 %v1105, %v1104
      %v1117 = vpack.c.b16 %v1107, %v1106
      %v1118 = vpack.c.b16 %v1109, %v1108
      %v1119 = vpack.c.b16 %v1111, %v1110
      %1128 = vmatpush.bf16.msra.mxu0 %v1119
      %1129 = vmatpush.bf16.msra.mxu0 %v1118
      %1130 = vmatpush.bf16.msra.mxu0 %v1117
      %1131 = vmatpush.bf16.msra.mxu0 %v1116
      %1132 = vmatpush.bf16.msra.mxu0 %v1115
      %1133 = vmatpush.bf16.msra.mxu0 %v1114
      %1134 = vmatpush.bf16.msra.mxu0 %v1113
      %1135 = vmatpush.bf16.msra.mxu0 %v1112
      %1136 = vmatmul.bf16.gmra.mxu0 %v1055
      %v1137 = vpop.f32.mrf.mxu0
      %v1138 = vadd.f32 0.0, %v1137
      %v1139 = vpop.f32.mrf.mxu0
      %v1140 = vadd.f32 0.0, %v1139
      %1141 = vmatmul.bf16.gmra.mxu0 %v1056
      %v1142 = vpop.f32.mrf.mxu0
      %v1143 = vadd.f32 0.0, %v1142
      %v1144 = vpop.f32.mrf.mxu0
      %v1145 = vadd.f32 0.0, %v1144
      %1146 = vmatmul.bf16.gmra.mxu0 %v1057
      %v1147 = vpop.f32.mrf.mxu0
      %v1148 = vadd.f32 0.0, %v1147
      %v1149 = vpop.f32.mrf.mxu0
      %v1150 = vadd.f32 0.0, %v1149
      %1151 = vmatmul.bf16.gmra.mxu0 %v1058
      %v1152 = vpop.f32.mrf.mxu0
      %v1153 = vadd.f32 0.0, %v1152
      %v1154 = vpop.f32.mrf.mxu0
      %v1155 = vadd.f32 0.0, %v1154
      %1156 = vmatmul.bf16.gmra.mxu0 %v1059
      %v1157 = vpop.f32.mrf.mxu0
      %v1158 = vadd.f32 0.0, %v1157
      %v1159 = vpop.f32.mrf.mxu0
      %v1160 = vadd.f32 0.0, %v1159
      %1161 = vmatmul.bf16.gmra.mxu0 %v1060
      %v1162 = vpop.f32.mrf.mxu0
      %v1163 = vadd.f32 0.0, %v1162
      %v1164 = vpop.f32.mrf.mxu0
      %v1165 = vadd.f32 0.0, %v1164
      %1166 = vmatmul.bf16.gmra.mxu0 %v1061
      %v1167 = vpop.f32.mrf.mxu0
      %v1168 = vadd.f32 0.0, %v1167
      %v1169 = vpop.f32.mrf.mxu0
      %v1170 = vadd.f32 0.0, %v1169
      %1171 = vmatmul.bf16.gmra.mxu0 %v1062
      %v1172 = vpop.f32.mrf.mxu0
      %v1173 = vadd.f32 0.0, %v1172
      %v1174 = vpop.f32.mrf.mxu0
      %v1175 = vadd.f32 0.0, %v1174
      %1176 = vdwg.mxu0
      %v1177 = vadd.f32 %v1023, %v1138
      %v1178 = vadd.f32 %v1024, %v1140
      %v1179 = vadd.f32 %v1025, %v1143
      %v1180 = vadd.f32 %v1026, %v1145
      %v1181 = vadd.f32 %v1027, %v1148
      %v1182 = vadd.f32 %v1028, %v1150
      %v1183 = vadd.f32 %v1029, %v1153
      %v1184 = vadd.f32 %v1030, %v1155
      %v1185 = vadd.f32 %v1031, %v1158
      %v1186 = vadd.f32 %v1032, %v1160
      %v1187 = vadd.f32 %v1033, %v1163
      %v1188 = vadd.f32 %v1034, %v1165
      %v1189 = vadd.f32 %v1035, %v1168
      %v1190 = vadd.f32 %v1036, %v1170
      %v1191 = vadd.f32 %v1037, %v1173
      %v1192 = vadd.f32 %v1038, %v1175
      %v1193 = vld [vmem:[%s593 + $0x1] sm:$0xff]
      %v1194 = vld [vmem:[%s593 + $0x9] sm:$0xff]
      %v1195 = vld [vmem:[%s593 + $0x19] sm:$0xff]
      %v1196 = vld [vmem:[%s593 + $0x21] sm:$0xff]
      %v1197 = vld [vmem:[%s593 + $0x31] sm:$0xff]
      %v1198 = vld [vmem:[%s593 + $0x39] sm:$0xff]
      %v1199 = vld [vmem:[%s593 + $0x49] sm:$0xff]
      %v1200 = vld [vmem:[%s593 + $0x51] sm:$0xff]
      %v1201 = vld [vmem:[%s593 + $0x61] sm:$0xff]
      %v1202 = vld [vmem:[%s593 + $0x69] sm:$0xff]
      %v1203 = vld [vmem:[%s593 + $0x79] sm:$0xff]
      %v1204 = vld [vmem:[%s593 + $0x81] sm:$0xff]
      %v1205 = vld [vmem:[%s593 + $0x91] sm:$0xff]
      %v1206 = vld [vmem:[%s593 + $0x99] sm:$0xff]
      %v1207 = vld [vmem:[%s593 + $0xa9] sm:$0xff]
      %v1208 = vld [vmem:[%s593 + $0xb1] sm:$0xff]
      %v1209 = vpack.c.bf16 %v1194, %v1193
      %v1210 = vpack.c.bf16 %v1196, %v1195
      %v1211 = vpack.c.bf16 %v1198, %v1197
      %v1212 = vpack.c.bf16 %v1200, %v1199
      %v1213 = vpack.c.bf16 %v1202, %v1201
      %v1214 = vpack.c.bf16 %v1204, %v1203
      %v1215 = vpack.c.bf16 %v1206, %v1205
      %v1216 = vpack.c.bf16 %v1208, %v1207
      %s1217 = scalar_lea.vmem %s5, 256
      %v1218 = vld [vmem:[%s1217] sm:$0xf]
      %v1219 = vld [vmem:[%s1217 + $0x4] sm:$0xf]
      %v1220 = vld [vmem:[%s1217 + $0x8] sm:$0xf]
      %v1221 = vld [vmem:[%s1217 + $0xc] sm:$0xf]
      %v1222 = vld [vmem:[%s1217 + $0x10] sm:$0xf]
      %v1223 = vld [vmem:[%s1217 + $0x14] sm:$0xf]
      %v1224 = vld [vmem:[%s1217 + $0x18] sm:$0xf]
      %v1225 = vld [vmem:[%s1217 + $0x1c] sm:$0xf]
      %v1226 = vld [vmem:[%s1217 + $0x20] sm:$0xf]
      %v1227 = vld [vmem:[%s1217 + $0x24] sm:$0xf]
      %v1228 = vld [vmem:[%s1217 + $0x28] sm:$0xf]
      %v1229 = vld [vmem:[%s1217 + $0x2c] sm:$0xf]
      %v1230 = vld [vmem:[%s1217 + $0x30] sm:$0xf]
      %v1231 = vld [vmem:[%s1217 + $0x34] sm:$0xf]
      %v1232 = vld [vmem:[%s1217 + $0x38] sm:$0xf]
      %v1233 = vld [vmem:[%s1217 + $0x3c] sm:$0xf]
      %v1250 = vunpack.c.l.b16 %v1218
      %v1251 = vunpack.c.l.b16 %v1219
      %v1252 = vunpack.c.l.b16 %v1220
      %v1253 = vunpack.c.l.b16 %v1221
      %v1254 = vunpack.c.l.b16 %v1222
      %v1255 = vunpack.c.l.b16 %v1223
      %v1256 = vunpack.c.l.b16 %v1224
      %v1257 = vunpack.c.l.b16 %v1225
      %v1258 = vunpack.c.l.b16 %v1226
      %v1259 = vunpack.c.l.b16 %v1227
      %v1260 = vunpack.c.l.b16 %v1228
      %v1261 = vunpack.c.l.b16 %v1229
      %v1262 = vunpack.c.l.b16 %v1230
      %v1263 = vunpack.c.l.b16 %v1231
      %v1264 = vunpack.c.l.b16 %v1232
      %v1265 = vunpack.c.l.b16 %v1233
      %v1266 = vpack.c.b16 %v1251, %v1250
      %v1267 = vpack.c.b16 %v1253, %v1252
      %v1268 = vpack.c.b16 %v1255, %v1254
      %v1269 = vpack.c.b16 %v1257, %v1256
      %v1270 = vpack.c.b16 %v1259, %v1258
      %v1271 = vpack.c.b16 %v1261, %v1260
      %v1272 = vpack.c.b16 %v1263, %v1262
      %v1273 = vpack.c.b16 %v1265, %v1264
      %1282 = vmatpush.bf16.msra.mxu0 %v1273
      %1283 = vmatpush.bf16.msra.mxu0 %v1272
      %1284 = vmatpush.bf16.msra.mxu0 %v1271
      %1285 = vmatpush.bf16.msra.mxu0 %v1270
      %1286 = vmatpush.bf16.msra.mxu0 %v1269
      %1287 = vmatpush.bf16.msra.mxu0 %v1268
      %1288 = vmatpush.bf16.msra.mxu0 %v1267
      %1289 = vmatpush.bf16.msra.mxu0 %v1266
      %1290 = vmatmul.bf16.gmra.mxu0 %v1209
      %v1291 = vpop.f32.mrf.mxu0
      %v1292 = vadd.f32 0.0, %v1291
      %v1293 = vpop.f32.mrf.mxu0
      %v1294 = vadd.f32 0.0, %v1293
      %1295 = vmatmul.bf16.gmra.mxu0 %v1210
      %v1296 = vpop.f32.mrf.mxu0
      %v1297 = vadd.f32 0.0, %v1296
      %v1298 = vpop.f32.mrf.mxu0
      %v1299 = vadd.f32 0.0, %v1298
      %1300 = vmatmul.bf16.gmra.mxu0 %v1211
      %v1301 = vpop.f32.mrf.mxu0
      %v1302 = vadd.f32 0.0, %v1301
      %v1303 = vpop.f32.mrf.mxu0
      %v1304 = vadd.f32 0.0, %v1303
      %1305 = vmatmul.bf16.gmra.mxu0 %v1212
      %v1306 = vpop.f32.mrf.mxu0
      %v1307 = vadd.f32 0.0, %v1306
      %v1308 = vpop.f32.mrf.mxu0
      %v1309 = vadd.f32 0.0, %v1308
      %1310 = vmatmul.bf16.gmra.mxu0 %v1213
      %v1311 = vpop.f32.mrf.mxu0
      %v1312 = vadd.f32 0.0, %v1311
      %v1313 = vpop.f32.mrf.mxu0
      %v1314 = vadd.f32 0.0, %v1313
      %1315 = vmatmul.bf16.gmra.mxu0 %v1214
      %v1316 = vpop.f32.mrf.mxu0
      %v1317 = vadd.f32 0.0, %v1316
      %v1318 = vpop.f32.mrf.mxu0
      %v1319 = vadd.f32 0.0, %v1318
      %1320 = vmatmul.bf16.gmra.mxu0 %v1215
      %v1321 = vpop.f32.mrf.mxu0
      %v1322 = vadd.f32 0.0, %v1321
      %v1323 = vpop.f32.mrf.mxu0
      %v1324 = vadd.f32 0.0, %v1323
      %1325 = vmatmul.bf16.gmra.mxu0 %v1216
      %v1326 = vpop.f32.mrf.mxu0
      %v1327 = vadd.f32 0.0, %v1326
      %v1328 = vpop.f32.mrf.mxu0
      %v1329 = vadd.f32 0.0, %v1328
      %1330 = vdwg.mxu0
      %v1331 = vadd.f32 %v1177, %v1292
      %v1332 = vadd.f32 %v1178, %v1294
      %v1333 = vadd.f32 %v1179, %v1297
      %v1334 = vadd.f32 %v1180, %v1299
      %v1335 = vadd.f32 %v1181, %v1302
      %v1336 = vadd.f32 %v1182, %v1304
      %v1337 = vadd.f32 %v1183, %v1307
      %v1338 = vadd.f32 %v1184, %v1309
      %v1339 = vadd.f32 %v1185, %v1312
      %v1340 = vadd.f32 %v1186, %v1314
      %v1341 = vadd.f32 %v1187, %v1317
      %v1342 = vadd.f32 %v1188, %v1319
      %v1343 = vadd.f32 %v1189, %v1322
      %v1344 = vadd.f32 %v1190, %v1324
      %v1345 = vadd.f32 %v1191, %v1327
      %v1346 = vadd.f32 %v1192, %v1329
      %v1347 = vld [vmem:[%s593 + $0x2] sm:$0xff]
      %v1348 = vld [vmem:[%s593 + $0xa] sm:$0xff]
      %v1349 = vld [vmem:[%s593 + $0x1a] sm:$0xff]
      %v1350 = vld [vmem:[%s593 + $0x22] sm:$0xff]
      %v1351 = vld [vmem:[%s593 + $0x32] sm:$0xff]
      %v1352 = vld [vmem:[%s593 + $0x3a] sm:$0xff]
      %v1353 = vld [vmem:[%s593 + $0x4a] sm:$0xff]
      %v1354 = vld [vmem:[%s593 + $0x52] sm:$0xff]
      %v1355 = vld [vmem:[%s593 + $0x62] sm:$0xff]
      %v1356 = vld [vmem:[%s593 + $0x6a] sm:$0xff]
      %v1357 = vld [vmem:[%s593 + $0x7a] sm:$0xff]
      %v1358 = vld [vmem:[%s593 + $0x82] sm:$0xff]
      %v1359 = vld [vmem:[%s593 + $0x92] sm:$0xff]
      %v1360 = vld [vmem:[%s593 + $0x9a] sm:$0xff]
      %v1361 = vld [vmem:[%s593 + $0xaa] sm:$0xff]
      %v1362 = vld [vmem:[%s593 + $0xb2] sm:$0xff]
      %v1363 = vpack.c.bf16 %v1348, %v1347
      %v1364 = vpack.c.bf16 %v1350, %v1349
      %v1365 = vpack.c.bf16 %v1352, %v1351
      %v1366 = vpack.c.bf16 %v1354, %v1353
      %v1367 = vpack.c.bf16 %v1356, %v1355
      %v1368 = vpack.c.bf16 %v1358, %v1357
      %v1369 = vpack.c.bf16 %v1360, %v1359
      %v1370 = vpack.c.bf16 %v1362, %v1361
      %s1371 = scalar_lea.vmem %s5, 320
      %v1372 = vld [vmem:[%s1371] sm:$0xf]
      %v1373 = vld [vmem:[%s1371 + $0x4] sm:$0xf]
      %v1374 = vld [vmem:[%s1371 + $0x8] sm:$0xf]
      %v1375 = vld [vmem:[%s1371 + $0xc] sm:$0xf]
      %v1376 = vld [vmem:[%s1371 + $0x10] sm:$0xf]
      %v1377 = vld [vmem:[%s1371 + $0x14] sm:$0xf]
      %v1378 = vld [vmem:[%s1371 + $0x18] sm:$0xf]
      %v1379 = vld [vmem:[%s1371 + $0x1c] sm:$0xf]
      %v1380 = vld [vmem:[%s1371 + $0x20] sm:$0xf]
      %v1381 = vld [vmem:[%s1371 + $0x24] sm:$0xf]
      %v1382 = vld [vmem:[%s1371 + $0x28] sm:$0xf]
      %v1383 = vld [vmem:[%s1371 + $0x2c] sm:$0xf]
      %v1384 = vld [vmem:[%s1371 + $0x30] sm:$0xf]
      %v1385 = vld [vmem:[%s1371 + $0x34] sm:$0xf]
      %v1386 = vld [vmem:[%s1371 + $0x38] sm:$0xf]
      %v1387 = vld [vmem:[%s1371 + $0x3c] sm:$0xf]
      %v1404 = vunpack.c.l.b16 %v1372
      %v1405 = vunpack.c.l.b16 %v1373
      %v1406 = vunpack.c.l.b16 %v1374
      %v1407 = vunpack.c.l.b16 %v1375
      %v1408 = vunpack.c.l.b16 %v1376
      %v1409 = vunpack.c.l.b16 %v1377
      %v1410 = vunpack.c.l.b16 %v1378
      %v1411 = vunpack.c.l.b16 %v1379
      %v1412 = vunpack.c.l.b16 %v1380
      %v1413 = vunpack.c.l.b16 %v1381
      %v1414 = vunpack.c.l.b16 %v1382
      %v1415 = vunpack.c.l.b16 %v1383
      %v1416 = vunpack.c.l.b16 %v1384
      %v1417 = vunpack.c.l.b16 %v1385
      %v1418 = vunpack.c.l.b16 %v1386
      %v1419 = vunpack.c.l.b16 %v1387
      %v1420 = vpack.c.b16 %v1405, %v1404
      %v1421 = vpack.c.b16 %v1407, %v1406
      %v1422 = vpack.c.b16 %v1409, %v1408
      %v1423 = vpack.c.b16 %v1411, %v1410
      %v1424 = vpack.c.b16 %v1413, %v1412
      %v1425 = vpack.c.b16 %v1415, %v1414
      %v1426 = vpack.c.b16 %v1417, %v1416
      %v1427 = vpack.c.b16 %v1419, %v1418
      %1436 = vmatpush.bf16.msra.mxu0 %v1427
      %1437 = vmatpush.bf16.msra.mxu0 %v1426
      %1438 = vmatpush.bf16.msra.mxu0 %v1425
      %1439 = vmatpush.bf16.msra.mxu0 %v1424
      %1440 = vmatpush.bf16.msra.mxu0 %v1423
      %1441 = vmatpush.bf16.msra.mxu0 %v1422
      %1442 = vmatpush.bf16.msra.mxu0 %v1421
      %1443 = vmatpush.bf16.msra.mxu0 %v1420
      %1444 = vmatmul.bf16.gmra.mxu0 %v1363
      %v1445 = vpop.f32.mrf.mxu0
      %v1446 = vadd.f32 0.0, %v1445
      %v1447 = vpop.f32.mrf.mxu0
      %v1448 = vadd.f32 0.0, %v1447
      %1449 = vmatmul.bf16.gmra.mxu0 %v1364
      %v1450 = vpop.f32.mrf.mxu0
      %v1451 = vadd.f32 0.0, %v1450
      %v1452 = vpop.f32.mrf.mxu0
      %v1453 = vadd.f32 0.0, %v1452
      %1454 = vmatmul.bf16.gmra.mxu0 %v1365
      %v1455 = vpop.f32.mrf.mxu0
      %v1456 = vadd.f32 0.0, %v1455
      %v1457 = vpop.f32.mrf.mxu0
      %v1458 = vadd.f32 0.0, %v1457
      %1459 = vmatmul.bf16.gmra.mxu0 %v1366
      %v1460 = vpop.f32.mrf.mxu0
      %v1461 = vadd.f32 0.0, %v1460
      %v1462 = vpop.f32.mrf.mxu0
      %v1463 = vadd.f32 0.0, %v1462
      %1464 = vmatmul.bf16.gmra.mxu0 %v1367
      %v1465 = vpop.f32.mrf.mxu0
      %v1466 = vadd.f32 0.0, %v1465
      %v1467 = vpop.f32.mrf.mxu0
      %v1468 = vadd.f32 0.0, %v1467
      %1469 = vmatmul.bf16.gmra.mxu0 %v1368
      %v1470 = vpop.f32.mrf.mxu0
      %v1471 = vadd.f32 0.0, %v1470
      %v1472 = vpop.f32.mrf.mxu0
      %v1473 = vadd.f32 0.0, %v1472
      %1474 = vmatmul.bf16.gmra.mxu0 %v1369
      %v1475 = vpop.f32.mrf.mxu0
      %v1476 = vadd.f32 0.0, %v1475
      %v1477 = vpop.f32.mrf.mxu0
      %v1478 = vadd.f32 0.0, %v1477
      %1479 = vmatmul.bf16.gmra.mxu0 %v1370
      %v1480 = vpop.f32.mrf.mxu0
      %v1481 = vadd.f32 0.0, %v1480
      %v1482 = vpop.f32.mrf.mxu0
      %v1483 = vadd.f32 0.0, %v1482
      %1484 = vdwg.mxu0
      %v1485 = vadd.f32 %v1331, %v1446
      %v1486 = vadd.f32 %v1332, %v1448
      %v1487 = vadd.f32 %v1333, %v1451
      %v1488 = vadd.f32 %v1334, %v1453
      %v1489 = vadd.f32 %v1335, %v1456
      %v1490 = vadd.f32 %v1336, %v1458
      %v1491 = vadd.f32 %v1337, %v1461
      %v1492 = vadd.f32 %v1338, %v1463
      %v1493 = vadd.f32 %v1339, %v1466
      %v1494 = vadd.f32 %v1340, %v1468
      %v1495 = vadd.f32 %v1341, %v1471
      %v1496 = vadd.f32 %v1342, %v1473
      %v1497 = vadd.f32 %v1343, %v1476
      %v1498 = vadd.f32 %v1344, %v1478
      %v1499 = vadd.f32 %v1345, %v1481
      %v1500 = vadd.f32 %v1346, %v1483
      %s1501 = scalar_lea.vmem [#allocation2], 48
      %v1502 = vld [vmem:[%s1501] sm:$0xff]
      %v1503 = vld [vmem:[%s1501 + $0x8] sm:$0xff]
      %v1504 = vld [vmem:[%s1501 + $0x18] sm:$0xff]
      %v1505 = vld [vmem:[%s1501 + $0x20] sm:$0xff]
      %v1506 = vld [vmem:[%s1501 + $0x30] sm:$0xff]
      %v1507 = vld [vmem:[%s1501 + $0x38] sm:$0xff]
      %v1508 = vld [vmem:[%s1501 + $0x48] sm:$0xff]
      %v1509 = vld [vmem:[%s1501 + $0x50] sm:$0xff]
      %v1510 = vld [vmem:[%s1501 + $0x60] sm:$0xff]
      %v1511 = vld [vmem:[%s1501 + $0x68] sm:$0xff]
      %v1512 = vld [vmem:[%s1501 + $0x78] sm:$0xff]
      %v1513 = vld [vmem:[%s1501 + $0x80] sm:$0xff]
      %v1514 = vld [vmem:[%s1501 + $0x90] sm:$0xff]
      %v1515 = vld [vmem:[%s1501 + $0x98] sm:$0xff]
      %v1516 = vld [vmem:[%s1501 + $0xa8] sm:$0xff]
      %v1517 = vld [vmem:[%s1501 + $0xb0] sm:$0xff]
      %v1518 = vpack.c.bf16 %v1503, %v1502
      %v1519 = vpack.c.bf16 %v1505, %v1504
      %v1520 = vpack.c.bf16 %v1507, %v1506
      %v1521 = vpack.c.bf16 %v1509, %v1508
      %v1522 = vpack.c.bf16 %v1511, %v1510
      %v1523 = vpack.c.bf16 %v1513, %v1512
      %v1524 = vpack.c.bf16 %v1515, %v1514
      %v1525 = vpack.c.bf16 %v1517, %v1516
      %s1526 = scalar_lea.vmem %s5, 384
      %v1527 = vld [vmem:[%s1526] sm:$0xf]
      %v1528 = vld [vmem:[%s1526 + $0x4] sm:$0xf]
      %v1529 = vld [vmem:[%s1526 + $0x8] sm:$0xf]
      %v1530 = vld [vmem:[%s1526 + $0xc] sm:$0xf]
      %v1531 = vld [vmem:[%s1526 + $0x10] sm:$0xf]
      %v1532 = vld [vmem:[%s1526 + $0x14] sm:$0xf]
      %v1533 = vld [vmem:[%s1526 + $0x18] sm:$0xf]
      %v1534 = vld [vmem:[%s1526 + $0x1c] sm:$0xf]
      %v1535 = vld [vmem:[%s1526 + $0x20] sm:$0xf]
      %v1536 = vld [vmem:[%s1526 + $0x24] sm:$0xf]
      %v1537 = vld [vmem:[%s1526 + $0x28] sm:$0xf]
      %v1538 = vld [vmem:[%s1526 + $0x2c] sm:$0xf]
      %v1539 = vld [vmem:[%s1526 + $0x30] sm:$0xf]
      %v1540 = vld [vmem:[%s1526 + $0x34] sm:$0xf]
      %v1541 = vld [vmem:[%s1526 + $0x38] sm:$0xf]
      %v1542 = vld [vmem:[%s1526 + $0x3c] sm:$0xf]
      %v1559 = vunpack.c.l.b16 %v1527
      %v1560 = vunpack.c.l.b16 %v1528
      %v1561 = vunpack.c.l.b16 %v1529
      %v1562 = vunpack.c.l.b16 %v1530
      %v1563 = vunpack.c.l.b16 %v1531
      %v1564 = vunpack.c.l.b16 %v1532
      %v1565 = vunpack.c.l.b16 %v1533
      %v1566 = vunpack.c.l.b16 %v1534
      %v1567 = vunpack.c.l.b16 %v1535
      %v1568 = vunpack.c.l.b16 %v1536
      %v1569 = vunpack.c.l.b16 %v1537
      %v1570 = vunpack.c.l.b16 %v1538
      %v1571 = vunpack.c.l.b16 %v1539
      %v1572 = vunpack.c.l.b16 %v1540
      %v1573 = vunpack.c.l.b16 %v1541
      %v1574 = vunpack.c.l.b16 %v1542
      %v1575 = vpack.c.b16 %v1560, %v1559
      %v1576 = vpack.c.b16 %v1562, %v1561
      %v1577 = vpack.c.b16 %v1564, %v1563
      %v1578 = vpack.c.b16 %v1566, %v1565
      %v1579 = vpack.c.b16 %v1568, %v1567
      %v1580 = vpack.c.b16 %v1570, %v1569
      %v1581 = vpack.c.b16 %v1572, %v1571
      %v1582 = vpack.c.b16 %v1574, %v1573
      %1591 = vmatpush.bf16.msra.mxu0 %v1582
      %1592 = vmatpush.bf16.msra.mxu0 %v1581
      %1593 = vmatpush.bf16.msra.mxu0 %v1580
      %1594 = vmatpush.bf16.msra.mxu0 %v1579
      %1595 = vmatpush.bf16.msra.mxu0 %v1578
      %1596 = vmatpush.bf16.msra.mxu0 %v1577
      %1597 = vmatpush.bf16.msra.mxu0 %v1576
      %1598 = vmatpush.bf16.msra.mxu0 %v1575
      %1599 = vmatmul.bf16.gmra.mxu0 %v1518
      %v1600 = vpop.f32.mrf.mxu0
      %v1601 = vadd.f32 0.0, %v1600
      %v1602 = vpop.f32.mrf.mxu0
      %v1603 = vadd.f32 0.0, %v1602
      %1604 = vmatmul.bf16.gmra.mxu0 %v1519
      %v1605 = vpop.f32.mrf.mxu0
      %v1606 = vadd.f32 0.0, %v1605
      %v1607 = vpop.f32.mrf.mxu0
      %v1608 = vadd.f32 0.0, %v1607
      %1609 = vmatmul.bf16.gmra.mxu0 %v1520
      %v1610 = vpop.f32.mrf.mxu0
      %v1611 = vadd.f32 0.0, %v1610
      %v1612 = vpop.f32.mrf.mxu0
      %v1613 = vadd.f32 0.0, %v1612
      %1614 = vmatmul.bf16.gmra.mxu0 %v1521
      %v1615 = vpop.f32.mrf.mxu0
      %v1616 = vadd.f32 0.0, %v1615
      %v1617 = vpop.f32.mrf.mxu0
      %v1618 = vadd.f32 0.0, %v1617
      %1619 = vmatmul.bf16.gmra.mxu0 %v1522
      %v1620 = vpop.f32.mrf.mxu0
      %v1621 = vadd.f32 0.0, %v1620
      %v1622 = vpop.f32.mrf.mxu0
      %v1623 = vadd.f32 0.0, %v1622
      %1624 = vmatmul.bf16.gmra.mxu0 %v1523
      %v1625 = vpop.f32.mrf.mxu0
      %v1626 = vadd.f32 0.0, %v1625
      %v1627 = vpop.f32.mrf.mxu0
      %v1628 = vadd.f32 0.0, %v1627
      %1629 = vmatmul.bf16.gmra.mxu0 %v1524
      %v1630 = vpop.f32.mrf.mxu0
      %v1631 = vadd.f32 0.0, %v1630
      %v1632 = vpop.f32.mrf.mxu0
      %v1633 = vadd.f32 0.0, %v1632
      %1634 = vmatmul.bf16.gmra.mxu0 %v1525
      %v1635 = vpop.f32.mrf.mxu0
      %v1636 = vadd.f32 0.0, %v1635
      %v1637 = vpop.f32.mrf.mxu0
      %v1638 = vadd.f32 0.0, %v1637
      %1639 = vdwg.mxu0
      %v1640 = vadd.f32 %v1485, %v1601
      %v1641 = vadd.f32 %v1486, %v1603
      %v1642 = vadd.f32 %v1487, %v1606
      %v1643 = vadd.f32 %v1488, %v1608
      %v1644 = vadd.f32 %v1489, %v1611
      %v1645 = vadd.f32 %v1490, %v1613
      %v1646 = vadd.f32 %v1491, %v1616
      %v1647 = vadd.f32 %v1492, %v1618
      %v1648 = vadd.f32 %v1493, %v1621
      %v1649 = vadd.f32 %v1494, %v1623
      %v1650 = vadd.f32 %v1495, %v1626
      %v1651 = vadd.f32 %v1496, %v1628
      %v1652 = vadd.f32 %v1497, %v1631
      %v1653 = vadd.f32 %v1498, %v1633
      %v1654 = vadd.f32 %v1499, %v1636
      %v1655 = vadd.f32 %v1500, %v1638
      %v1656 = vld [vmem:[%s1501 + $0x1] sm:$0xff]
      %v1657 = vld [vmem:[%s1501 + $0x9] sm:$0xff]
      %v1658 = vld [vmem:[%s1501 + $0x19] sm:$0xff]
      %v1659 = vld [vmem:[%s1501 + $0x21] sm:$0xff]
      %v1660 = vld [vmem:[%s1501 + $0x31] sm:$0xff]
      %v1661 = vld [vmem:[%s1501 + $0x39] sm:$0xff]
      %v1662 = vld [vmem:[%s1501 + $0x49] sm:$0xff]
      %v1663 = vld [vmem:[%s1501 + $0x51] sm:$0xff]
      %v1664 = vld [vmem:[%s1501 + $0x61] sm:$0xff]
      %v1665 = vld [vmem:[%s1501 + $0x69] sm:$0xff]
      %v1666 = vld [vmem:[%s1501 + $0x79] sm:$0xff]
      %v1667 = vld [vmem:[%s1501 + $0x81] sm:$0xff]
      %v1668 = vld [vmem:[%s1501 + $0x91] sm:$0xff]
      %v1669 = vld [vmem:[%s1501 + $0x99] sm:$0xff]
      %v1670 = vld [vmem:[%s1501 + $0xa9] sm:$0xff]
      %v1671 = vld [vmem:[%s1501 + $0xb1] sm:$0xff]
      %v1672 = vpack.c.bf16 %v1657, %v1656
      %v1673 = vpack.c.bf16 %v1659, %v1658
      %v1674 = vpack.c.bf16 %v1661, %v1660
      %v1675 = vpack.c.bf16 %v1663, %v1662
      %v1676 = vpack.c.bf16 %v1665, %v1664
      %v1677 = vpack.c.bf16 %v1667, %v1666
      %v1678 = vpack.c.bf16 %v1669, %v1668
      %v1679 = vpack.c.bf16 %v1671, %v1670
      %s1680 = scalar_lea.vmem %s5, 448
      %v1681 = vld [vmem:[%s1680] sm:$0xf]
      %v1682 = vld [vmem:[%s1680 + $0x4] sm:$0xf]
      %v1683 = vld [vmem:[%s1680 + $0x8] sm:$0xf]
      %v1684 = vld [vmem:[%s1680 + $0xc] sm:$0xf]
      %v1685 = vld [vmem:[%s1680 + $0x10] sm:$0xf]
      %v1686 = vld [vmem:[%s1680 + $0x14] sm:$0xf]
      %v1687 = vld [vmem:[%s1680 + $0x18] sm:$0xf]
      %v1688 = vld [vmem:[%s1680 + $0x1c] sm:$0xf]
      %v1689 = vld [vmem:[%s1680 + $0x20] sm:$0xf]
      %v1690 = vld [vmem:[%s1680 + $0x24] sm:$0xf]
      %v1691 = vld [vmem:[%s1680 + $0x28] sm:$0xf]
      %v1692 = vld [vmem:[%s1680 + $0x2c] sm:$0xf]
      %v1693 = vld [vmem:[%s1680 + $0x30] sm:$0xf]
      %v1694 = vld [vmem:[%s1680 + $0x34] sm:$0xf]
      %v1695 = vld [vmem:[%s1680 + $0x38] sm:$0xf]
      %v1696 = vld [vmem:[%s1680 + $0x3c] sm:$0xf]
      %v1713 = vunpack.c.l.b16 %v1681
      %v1714 = vunpack.c.l.b16 %v1682
      %v1715 = vunpack.c.l.b16 %v1683
      %v1716 = vunpack.c.l.b16 %v1684
      %v1717 = vunpack.c.l.b16 %v1685
      %v1718 = vunpack.c.l.b16 %v1686
      %v1719 = vunpack.c.l.b16 %v1687
      %v1720 = vunpack.c.l.b16 %v1688
      %v1721 = vunpack.c.l.b16 %v1689
      %v1722 = vunpack.c.l.b16 %v1690
      %v1723 = vunpack.c.l.b16 %v1691
      %v1724 = vunpack.c.l.b16 %v1692
      %v1725 = vunpack.c.l.b16 %v1693
      %v1726 = vunpack.c.l.b16 %v1694
      %v1727 = vunpack.c.l.b16 %v1695
      %v1728 = vunpack.c.l.b16 %v1696
      %v1729 = vpack.c.b16 %v1714, %v1713
      %v1730 = vpack.c.b16 %v1716, %v1715
      %v1731 = vpack.c.b16 %v1718, %v1717
      %v1732 = vpack.c.b16 %v1720, %v1719
      %v1733 = vpack.c.b16 %v1722, %v1721
      %v1734 = vpack.c.b16 %v1724, %v1723
      %v1735 = vpack.c.b16 %v1726, %v1725
      %v1736 = vpack.c.b16 %v1728, %v1727
      %1745 = vmatpush.bf16.msra.mxu0 %v1736
      %1746 = vmatpush.bf16.msra.mxu0 %v1735
      %1747 = vmatpush.bf16.msra.mxu0 %v1734
      %1748 = vmatpush.bf16.msra.mxu0 %v1733
      %1749 = vmatpush.bf16.msra.mxu0 %v1732
      %1750 = vmatpush.bf16.msra.mxu0 %v1731
      %1751 = vmatpush.bf16.msra.mxu0 %v1730
      %1752 = vmatpush.bf16.msra.mxu0 %v1729
      %1753 = vmatmul.bf16.gmra.mxu0 %v1672
      %v1754 = vpop.f32.mrf.mxu0
      %v1755 = vadd.f32 0.0, %v1754
      %v1756 = vpop.f32.mrf.mxu0
      %v1757 = vadd.f32 0.0, %v1756
      %1758 = vmatmul.bf16.gmra.mxu0 %v1673
      %v1759 = vpop.f32.mrf.mxu0
      %v1760 = vadd.f32 0.0, %v1759
      %v1761 = vpop.f32.mrf.mxu0
      %v1762 = vadd.f32 0.0, %v1761
      %1763 = vmatmul.bf16.gmra.mxu0 %v1674
      %v1764 = vpop.f32.mrf.mxu0
      %v1765 = vadd.f32 0.0, %v1764
      %v1766 = vpop.f32.mrf.mxu0
      %v1767 = vadd.f32 0.0, %v1766
      %1768 = vmatmul.bf16.gmra.mxu0 %v1675
      %v1769 = vpop.f32.mrf.mxu0
      %v1770 = vadd.f32 0.0, %v1769
      %v1771 = vpop.f32.mrf.mxu0
      %v1772 = vadd.f32 0.0, %v1771
      %1773 = vmatmul.bf16.gmra.mxu0 %v1676
      %v1774 = vpop.f32.mrf.mxu0
      %v1775 = vadd.f32 0.0, %v1774
      %v1776 = vpop.f32.mrf.mxu0
      %v1777 = vadd.f32 0.0, %v1776
      %1778 = vmatmul.bf16.gmra.mxu0 %v1677
      %v1779 = vpop.f32.mrf.mxu0
      %v1780 = vadd.f32 0.0, %v1779
      %v1781 = vpop.f32.mrf.mxu0
      %v1782 = vadd.f32 0.0, %v1781
      %1783 = vmatmul.bf16.gmra.mxu0 %v1678
      %v1784 = vpop.f32.mrf.mxu0
      %v1785 = vadd.f32 0.0, %v1784
      %v1786 = vpop.f32.mrf.mxu0
      %v1787 = vadd.f32 0.0, %v1786
      %1788 = vmatmul.bf16.gmra.mxu0 %v1679
      %v1789 = vpop.f32.mrf.mxu0
      %v1790 = vadd.f32 0.0, %v1789
      %v1791 = vpop.f32.mrf.mxu0
      %v1792 = vadd.f32 0.0, %v1791
      %1793 = vdwg.mxu0
      %v1794 = vadd.f32 %v1640, %v1755
      %v1795 = vadd.f32 %v1641, %v1757
      %v1796 = vadd.f32 %v1642, %v1760
      %v1797 = vadd.f32 %v1643, %v1762
      %v1798 = vadd.f32 %v1644, %v1765
      %v1799 = vadd.f32 %v1645, %v1767
      %v1800 = vadd.f32 %v1646, %v1770
      %v1801 = vadd.f32 %v1647, %v1772
      %v1802 = vadd.f32 %v1648, %v1775
      %v1803 = vadd.f32 %v1649, %v1777
      %v1804 = vadd.f32 %v1650, %v1780
      %v1805 = vadd.f32 %v1651, %v1782
      %v1806 = vadd.f32 %v1652, %v1785
      %v1807 = vadd.f32 %v1653, %v1787
      %v1808 = vadd.f32 %v1654, %v1790
      %v1809 = vadd.f32 %v1655, %v1792
      %v1810 = vld [vmem:[%s1501 + $0x2] sm:$0xff]
      %v1811 = vld [vmem:[%s1501 + $0xa] sm:$0xff]
      %v1812 = vld [vmem:[%s1501 + $0x1a] sm:$0xff]
      %v1813 = vld [vmem:[%s1501 + $0x22] sm:$0xff]
      %v1814 = vld [vmem:[%s1501 + $0x32] sm:$0xff]
      %v1815 = vld [vmem:[%s1501 + $0x3a] sm:$0xff]
      %v1816 = vld [vmem:[%s1501 + $0x4a] sm:$0xff]
      %v1817 = vld [vmem:[%s1501 + $0x52] sm:$0xff]
      %v1818 = vld [vmem:[%s1501 + $0x62] sm:$0xff]
      %v1819 = vld [vmem:[%s1501 + $0x6a] sm:$0xff]
      %v1820 = vld [vmem:[%s1501 + $0x7a] sm:$0xff]
      %v1821 = vld [vmem:[%s1501 + $0x82] sm:$0xff]
      %v1822 = vld [vmem:[%s1501 + $0x92] sm:$0xff]
      %v1823 = vld [vmem:[%s1501 + $0x9a] sm:$0xff]
      %v1824 = vld [vmem:[%s1501 + $0xaa] sm:$0xff]
      %v1825 = vld [vmem:[%s1501 + $0xb2] sm:$0xff]
      %v1826 = vpack.c.bf16 %v1811, %v1810
      %v1827 = vpack.c.bf16 %v1813, %v1812
      %v1828 = vpack.c.bf16 %v1815, %v1814
      %v1829 = vpack.c.bf16 %v1817, %v1816
      %v1830 = vpack.c.bf16 %v1819, %v1818
      %v1831 = vpack.c.bf16 %v1821, %v1820
      %v1832 = vpack.c.bf16 %v1823, %v1822
      %v1833 = vpack.c.bf16 %v1825, %v1824
      %s1834 = scalar_lea.vmem %s5, 512
      %v1835 = vld [vmem:[%s1834] sm:$0xf]
      %v1836 = vld [vmem:[%s1834 + $0x4] sm:$0xf]
      %v1837 = vld [vmem:[%s1834 + $0x8] sm:$0xf]
      %v1838 = vld [vmem:[%s1834 + $0xc] sm:$0xf]
      %v1839 = vld [vmem:[%s1834 + $0x10] sm:$0xf]
      %v1840 = vld [vmem:[%s1834 + $0x14] sm:$0xf]
      %v1841 = vld [vmem:[%s1834 + $0x18] sm:$0xf]
      %v1842 = vld [vmem:[%s1834 + $0x1c] sm:$0xf]
      %v1843 = vld [vmem:[%s1834 + $0x20] sm:$0xf]
      %v1844 = vld [vmem:[%s1834 + $0x24] sm:$0xf]
      %v1845 = vld [vmem:[%s1834 + $0x28] sm:$0xf]
      %v1846 = vld [vmem:[%s1834 + $0x2c] sm:$0xf]
      %v1847 = vld [vmem:[%s1834 + $0x30] sm:$0xf]
      %v1848 = vld [vmem:[%s1834 + $0x34] sm:$0xf]
      %v1849 = vld [vmem:[%s1834 + $0x38] sm:$0xf]
      %v1850 = vld [vmem:[%s1834 + $0x3c] sm:$0xf]
      %v1867 = vunpack.c.l.b16 %v1835
      %v1868 = vunpack.c.l.b16 %v1836
      %v1869 = vunpack.c.l.b16 %v1837
      %v1870 = vunpack.c.l.b16 %v1838
      %v1871 = vunpack.c.l.b16 %v1839
      %v1872 = vunpack.c.l.b16 %v1840
      %v1873 = vunpack.c.l.b16 %v1841
      %v1874 = vunpack.c.l.b16 %v1842
      %v1875 = vunpack.c.l.b16 %v1843
      %v1876 = vunpack.c.l.b16 %v1844
      %v1877 = vunpack.c.l.b16 %v1845
      %v1878 = vunpack.c.l.b16 %v1846
      %v1879 = vunpack.c.l.b16 %v1847
      %v1880 = vunpack.c.l.b16 %v1848
      %v1881 = vunpack.c.l.b16 %v1849
      %v1882 = vunpack.c.l.b16 %v1850
      %v1883 = vpack.c.b16 %v1868, %v1867
      %v1884 = vpack.c.b16 %v1870, %v1869
      %v1885 = vpack.c.b16 %v1872, %v1871
      %v1886 = vpack.c.b16 %v1874, %v1873
      %v1887 = vpack.c.b16 %v1876, %v1875
      %v1888 = vpack.c.b16 %v1878, %v1877
      %v1889 = vpack.c.b16 %v1880, %v1879
      %v1890 = vpack.c.b16 %v1882, %v1881
      %1899 = vmatpush.bf16.msra.mxu0 %v1890
      %1900 = vmatpush.bf16.msra.mxu0 %v1889
      %1901 = vmatpush.bf16.msra.mxu0 %v1888
      %1902 = vmatpush.bf16.msra.mxu0 %v1887
      %1903 = vmatpush.bf16.msra.mxu0 %v1886
      %1904 = vmatpush.bf16.msra.mxu0 %v1885
      %1905 = vmatpush.bf16.msra.mxu0 %v1884
      %1906 = vmatpush.bf16.msra.mxu0 %v1883
      %1907 = vmatmul.bf16.gmra.mxu0 %v1826
      %v1908 = vpop.f32.mrf.mxu0
      %v1909 = vadd.f32 0.0, %v1908
      %v1910 = vpop.f32.mrf.mxu0
      %v1911 = vadd.f32 0.0, %v1910
      %1912 = vmatmul.bf16.gmra.mxu0 %v1827
      %v1913 = vpop.f32.mrf.mxu0
      %v1914 = vadd.f32 0.0, %v1913
      %v1915 = vpop.f32.mrf.mxu0
      %v1916 = vadd.f32 0.0, %v1915
      %1917 = vmatmul.bf16.gmra.mxu0 %v1828
      %v1918 = vpop.f32.mrf.mxu0
      %v1919 = vadd.f32 0.0, %v1918
      %v1920 = vpop.f32.mrf.mxu0
      %v1921 = vadd.f32 0.0, %v1920
      %1922 = vmatmul.bf16.gmra.mxu0 %v1829
      %v1923 = vpop.f32.mrf.mxu0
      %v1924 = vadd.f32 0.0, %v1923
      %v1925 = vpop.f32.mrf.mxu0
      %v1926 = vadd.f32 0.0, %v1925
      %1927 = vmatmul.bf16.gmra.mxu0 %v1830
      %v1928 = vpop.f32.mrf.mxu0
      %v1929 = vadd.f32 0.0, %v1928
      %v1930 = vpop.f32.mrf.mxu0
      %v1931 = vadd.f32 0.0, %v1930
      %1932 = vmatmul.bf16.gmra.mxu0 %v1831
      %v1933 = vpop.f32.mrf.mxu0
      %v1934 = vadd.f32 0.0, %v1933
      %v1935 = vpop.f32.mrf.mxu0
      %v1936 = vadd.f32 0.0, %v1935
      %1937 = vmatmul.bf16.gmra.mxu0 %v1832
      %v1938 = vpop.f32.mrf.mxu0
      %v1939 = vadd.f32 0.0, %v1938
      %v1940 = vpop.f32.mrf.mxu0
      %v1941 = vadd.f32 0.0, %v1940
      %1942 = vmatmul.bf16.gmra.mxu0 %v1833
      %v1943 = vpop.f32.mrf.mxu0
      %v1944 = vadd.f32 0.0, %v1943
      %v1945 = vpop.f32.mrf.mxu0
      %v1946 = vadd.f32 0.0, %v1945
      %1947 = vdwg.mxu0
      %v1948 = vadd.f32 %v1794, %v1909
      %v1949 = vadd.f32 %v1795, %v1911
      %v1950 = vadd.f32 %v1796, %v1914
      %v1951 = vadd.f32 %v1797, %v1916
      %v1952 = vadd.f32 %v1798, %v1919
      %v1953 = vadd.f32 %v1799, %v1921
      %v1954 = vadd.f32 %v1800, %v1924
      %v1955 = vadd.f32 %v1801, %v1926
      %v1956 = vadd.f32 %v1802, %v1929
      %v1957 = vadd.f32 %v1803, %v1931
      %v1958 = vadd.f32 %v1804, %v1934
      %v1959 = vadd.f32 %v1805, %v1936
      %v1960 = vadd.f32 %v1806, %v1939
      %v1961 = vadd.f32 %v1807, %v1941
      %v1962 = vadd.f32 %v1808, %v1944
      %v1963 = vadd.f32 %v1809, %v1946
      %1964 = vst [vmem:[%s458] sm:$0xff] %v1948
      %1965 = vst [vmem:[%s458 + $0x8] sm:$0xff] %v1949
      %1966 = vst [vmem:[%s458 + $0x10] sm:$0xff] %v1950
      %1967 = vst [vmem:[%s458 + $0x18] sm:$0xff] %v1951
      %1968 = vst [vmem:[%s458 + $0x20] sm:$0xff] %v1952
      %1969 = vst [vmem:[%s458 + $0x28] sm:$0xff] %v1953
      %1970 = vst [vmem:[%s458 + $0x30] sm:$0xff] %v1954
      %1971 = vst [vmem:[%s458 + $0x38] sm:$0xff] %v1955
      %1972 = vst [vmem:[%s458 + $0x40] sm:$0xff] %v1956
      %1973 = vst [vmem:[%s458 + $0x48] sm:$0xff] %v1957
      %1974 = vst [vmem:[%s458 + $0x50] sm:$0xff] %v1958
      %1975 = vst [vmem:[%s458 + $0x58] sm:$0xff] %v1959
      %1976 = vst [vmem:[%s458 + $0x60] sm:$0xff] %v1960
      %1977 = vst [vmem:[%s458 + $0x68] sm:$0xff] %v1961
      %1978 = vst [vmem:[%s458 + $0x70] sm:$0xff] %v1962
      %1979 = vst [vmem:[%s458 + $0x78] sm:$0xff] %v1963
      %1980 = vmatpush.msra.mxu0 %v1963
      %1981 = vmatpush.msra.mxu0 %v1962
      %1982 = vmatpush.msra.mxu0 %v1961
      %1983 = vmatpush.msra.mxu0 %v1960
      %1984 = vmatpush.msra.mxu0 %v1959
      %1985 = vmatpush.msra.mxu0 %v1958
      %1986 = vmatpush.msra.mxu0 %v1957
      %1987 = vmatpush.msra.mxu0 %v1956
      %1988 = vmatpush.msra.mxu0 %v1955
      %1989 = vmatpush.msra.mxu0 %v1954
      %1990 = vmatpush.msra.mxu0 %v1953
      %1991 = vmatpush.msra.mxu0 %v1952
      %1992 = vmatpush.msra.mxu0 %v1951
      %1993 = vmatpush.msra.mxu0 %v1950
      %1994 = vmatpush.msra.mxu0 %v1949
      %1995 = vmatpush.msra.mxu0 %v1948
      %1996 = vmatmul.f32.gmra.mxu0 1.0
      %v1997 = vpop.f32.mrf.mxu0
      %v1998 = vadd.f32 0.0, %v1997
      %1999 = vdwg.mxu0
      %v2000 = vmul.f32 %v1948, %v1948
      %v2001 = vmul.f32 %v1949, %v1949
      %v2002 = vmul.f32 %v1950, %v1950
      %v2003 = vmul.f32 %v1951, %v1951
      %v2004 = vmul.f32 %v1952, %v1952
      %v2005 = vmul.f32 %v1953, %v1953
      %v2006 = vmul.f32 %v1954, %v1954
      %v2007 = vmul.f32 %v1955, %v1955
      %v2008 = vmul.f32 %v1956, %v1956
      %v2009 = vmul.f32 %v1957, %v1957
      %v2010 = vmul.f32 %v1958, %v1958
      %v2011 = vmul.f32 %v1959, %v1959
      %v2012 = vmul.f32 %v1960, %v1960
      %v2013 = vmul.f32 %v1961, %v1961
      %v2014 = vmul.f32 %v1962, %v1962
      %v2015 = vmul.f32 %v1963, %v1963
      %2016 = vmatpush.msra.mxu0 %v2015
      %2017 = vmatpush.msra.mxu0 %v2014
      %2018 = vmatpush.msra.mxu0 %v2013
      %2019 = vmatpush.msra.mxu0 %v2012
      %2020 = vmatpush.msra.mxu0 %v2011
      %2021 = vmatpush.msra.mxu0 %v2010
      %2022 = vmatpush.msra.mxu0 %v2009
      %2023 = vmatpush.msra.mxu0 %v2008
      %2024 = vmatpush.msra.mxu0 %v2007
      %2025 = vmatpush.msra.mxu0 %v2006
      %2026 = vmatpush.msra.mxu0 %v2005
      %2027 = vmatpush.msra.mxu0 %v2004
      %2028 = vmatpush.msra.mxu0 %v2003
      %2029 = vmatpush.msra.mxu0 %v2002
      %2030 = vmatpush.msra.mxu0 %v2001
      %2031 = vmatpush.msra.mxu0 %v2000
      %2032 = vmatmul.f32.gmra.mxu0 1.0
      %v2033 = vpop.f32.mrf.mxu0
      %v2034 = vadd.f32 0.0, %v2033
      %2035 = vdwg.mxu0
      %v2037 = vrot.slane %v2034, 7
      %vm2039 = vcmask 1040384
      %v2040 = vsel %vm2039, %v1998, %v2037
      %2041 = vst [vmem:[%s467] sm:$0x3] %v2040
      %s2042 = smul.u32 8, %s24
      %p2043 = scmp.lt.s32.totalorder %s23, 1
      %s2044 = scalar_select %p2043, %s23, 1
      %p2045 = scmp.lt.s32.totalorder %s2042, 15
      %s2046 = scalar_select %p2045, %s2042, 15
      %s2047 = smul.addr %s2046, 2
      %s2048 = smul.addr %s2044, 32
      %s2049 = sadd.s32 %s2047, %s2048
      %s2050 = smul.addr %s2049, 8
      %s2051 = scalar_lea.vmem %s6, %s2050
      %p2052 = scmp.lt.s32.totalorder %s23, 1
      %s2053 = scalar_select %p2052, %s23, 1
      %p2054 = scmp.lt.s32.totalorder %s24, 1
      %s2055 = scalar_select %p2054, %s24, 1
      %s2056 = smul.addr %s2053, 2
      %s2057 = sadd.s32 %s2055, %s2056
      %s2058 = smul.addr %s2057, 2
      %s2059 = scalar_lea.vmem %s7, %s2058
      // Predicated region
      $region45: #{double_conv.4} parent=43 // pred_check
        %p2060 = pneg %p214
      $region46: #{double_conv.4} parent=43 // pred_check_branch
        %2062 = sbr.rel (%p2060) target = $region48
      $region47: #{double_conv.4} parent=43 // pred_region
        %s2063 = smul.u32 8, %s24
      $region48: #{double_conv.4} parent=43 // pred_fallthru
        _
      // Predicated region
      $region49: #{double_conv.4} parent=43 // pred_check
        %p2064 = pneg %p242
      $region50: #{double_conv.4} parent=43 // pred_check_branch
        %2066 = sbr.rel (%p2064) target = $region52
      $region51: #{double_conv.4} parent=43 // pred_region
        _
      $region52: #{double_conv.4} parent=43 // pred_fallthru
        _
    $region44: #{double_conv.4} parent=5 // pred_fallthru
      _
    %p2067 = scmp.le.s32.totalorder 2, %s14
    // Predicated region
    $region53: #{double_conv.4} parent=5 // pred_check
      %p2068 = pneg %p2067
    $region54: #{double_conv.4} parent=5 // pred_check_branch
      %2070 = sbr.rel (%p2068) target = $region56
    $region55: #{double_conv.4} parent=5 // pred_region
      %s2071 = ssub.s32 %s14, 2
      // Predicated region
      $region57: #{double_conv.4} parent=55 // pred_check
        %p2072 = pneg %p220
      $region58: #{double_conv.4} parent=55 // pred_check_branch
        %2074 = sbr.rel (%p2072) target = $region60
      $region59: #{double_conv.4} parent=55 // pred_region
        %s2075 = smul.u32 8, %s26
        %p2076 = scmp.lt.s32.totalorder %s25, 1
        %s2077 = scalar_select %p2076, %s25, 1
        %p2078 = scmp.lt.s32.totalorder %s2075, 15
        %s2079 = scalar_select %p2078, %s2075, 15
        %s2080 = smul.addr %s2079, 2
        %s2081 = smul.addr %s2077, 32
        %s2082 = sadd.s32 %s2080, %s2081
        %s2083 = smul.addr %s2082, 8
        %s2084 = scalar_lea.vmem %s6, %s2083
      $region60: #{double_conv.4} parent=55 // pred_fallthru
        _
      // Predicated region
      $region61: #{double_conv.4} parent=55 // pred_check
        %p2085 = pneg %p248
      $region62: #{double_conv.4} parent=55 // pred_check_branch
        %2087 = sbr.rel (%p2085) target = $region64
      $region63: #{double_conv.4} parent=55 // pred_region
        %p2088 = scmp.lt.s32.totalorder %s25, 1
        %s2089 = scalar_select %p2088, %s25, 1
        %p2090 = scmp.lt.s32.totalorder %s26, 1
        %s2091 = scalar_select %p2090, %s26, 1
        %s2092 = smul.addr %s2089, 2
        %s2093 = sadd.s32 %s2091, %s2092
        %s2094 = smul.addr %s2093, 2
        %s2095 = scalar_lea.vmem %s7, %s2094
      $region64: #{double_conv.4} parent=55 // pred_fallthru
        _
    $region56: #{double_conv.4} parent=5 // pred_fallthru
      _
  $region6: #{double_conv.4} parent=0 // loop_footer
    %s18 = sadd.s32 1, %s14
  $region7: #{double_conv.4} parent=0 // loop_footer_branch
    %13 = sbr.rel target = $region3
  $region8: #{double_conv.4} parent=0 // loop_exit
    _

</llo_original>
